<compile_context>
chip_gen: v5e
topology: v5e:2x2
jax: 0.10.0
libtpu: 0.0.40
codegen_flags: <defaults>
</compile_context>

<pallas_src>
import jax
import jax.numpy as jnp
from jax.experimental import pallas as pl
from jax.experimental.pallas import tpu as pltpu

INPUT_DIM = 13          # L
LP = 16                 # L padded up to a multiple of 8
C1 = 64
C2 = 128
NUM_CLASSES = 6
NPAD = 8                # sublane-padded logits rows
BN_EPS = 1e-5


def _round_up(n, m):
    return ((n + m - 1) // m) * m


def emotion_cnn_kernel(xrow_ref, w1_ref, b1_ref, s1_ref, t1_ref,
                       w2t_ref, b2_ref, wfc_ref, bfc_ref, out_ref):
    n = xrow_ref.shape[1]            # LP * tb lanes, ordered l-major / batch-minor
    tb = out_ref.shape[1]            # batch tile (multiple of 128)
    lv = INPUT_DIM * tb              # lanes belonging to valid positions l < 13

    # -------- conv1 on the VPU (kernel size 3, Cin = 1) ----------------------
    x = xrow_ref[...]                                    # (1, N) f32
    zx = jnp.zeros((1, tb), jnp.float32)
    x_l = jnp.concatenate([zx, x[:, :n - tb]], axis=1)   # x[b, l-1]  (0 at l==0)
    x_r = jnp.concatenate([x[:, tb:], zx], axis=1)       # x[b, l+1]  (0 at l==L-1, padded)

    w1 = w1_ref[...]                                     # (64, 3) tap weights
    y1 = (x_l * w1[:, 0:1] + x * w1[:, 1:2] + x_r * w1[:, 2:3] + b1_ref[...])
    y1 = jnp.maximum(y1, 0.0)                            # ReLU
    y1 = y1 * s1_ref[...] + t1_ref[...]                  # BN1 (eval) as affine

    # Zero the padded positions l >= 13 (vreg-aligned slice) so the shifted tap
    # at l == 12 is exactly zero and junk never reaches a pooled position.
    c1 = y1.shape[0]
    y1 = jnp.concatenate([y1[:, :lv], jnp.zeros((c1, n - lv), jnp.float32)], axis=1)
    y1b = y1.astype(jnp.bfloat16)

    # -------- conv2: single K=192 MXU matmul in bf16 (f32 accumulation) ------
    zc = jnp.zeros((c1, tb), jnp.bfloat16)
    y_left = jnp.concatenate([zc, y1b[:, :n - tb]], axis=1)   # y1bn[b, l-1, :]
    y_right = jnp.concatenate([y1b[:, tb:], zc], axis=1)      # y1bn[b, l+1, :]
    lhs = jnp.concatenate([y_left, y1b, y_right], axis=0)     # (192, N) bf16

    y2 = jnp.dot(w2t_ref[...], lhs, preferred_element_type=jnp.float32)  # (128, N)
    y2 = jnp.maximum(y2 + b2_ref[...], 0.0)                   # bias + ReLU

    # -------- AdaptiveAvgPool1d(1): sum of the 13 valid lane blocks ----------
    # (1/L and BN2 are folded into the FC weight/bias in the wrapper.)
    pieces = [y2[:, l * tb:(l + 1) * tb] for l in range(INPUT_DIM)]
    while len(pieces) > 1:
        nxt = [pieces[k] + pieces[k + 1] for k in range(0, len(pieces) - 1, 2)]
        if len(pieces) % 2:
            nxt.append(pieces[-1])
        pieces = nxt
    pooled = pieces[0]                                         # (128, tb) f32

    # -------- Dropout(0.3): identity at inference.  Linear(128 -> 6) --------
    out_ref[...] = (jnp.dot(wfc_ref[...], pooled,
                            preferred_element_type=jnp.float32) + bfc_ref[...])


def emotion_cnn_forward(x, params, tb=None):
    B, L = x.shape
    assert L == INPUT_DIM
    x = x.astype(jnp.float32)

    # Tile size: multiple of 128 so every in-kernel lane slice is vreg aligned.
    # Prefer >= 2 tiles (v7x two-TensorCore split), cap at 512 so the f32/bf16
    # temporaries stay well inside v7x's 64 MiB VMEM.
    bp0 = _round_up(max(B, 1), 128)
    if tb is None:
        tb = min(512, max(128, _round_up((bp0 + 1) // 2, 128)))
    tb = _round_up(max(tb, 128), 128)
    Bp = _round_up(B, tb)
    G = Bp // tb

    if Bp > B:
        x = jnp.pad(x, ((0, Bp - B), (0, 0)))

    # ---- input row, per-tile transposed: xrow[0, (i*LP + l)*tb + bb] = x[i*tb+bb, l]
    xpad = jnp.pad(x, ((0, 0), (0, LP - L)))                       # (Bp, 16)
    xrow = xpad.reshape(G, tb, LP).transpose(0, 2, 1).reshape(1, G * LP * tb)

    # ---- conv1 params as per-channel columns --------------------------------
    w1cols = params["w1"][:, 0, :].T                               # (C1, 3): [c, k]
    b1col = params["b1"].T                                         # (C1, 1)
    s1 = params["g1"] * jax.lax.rsqrt(params["v1"] + BN_EPS)       # (1, C1)
    t1 = params["be1"] - params["m1"] * s1
    s1col = s1.T                                                   # (C1, 1)
    t1col = t1.T

    # ---- conv2 merged weight, transposed, bf16 (K = 3*C1 = 192) -------------
    # lhs row order in-kernel is [left(k=0); center(k=1); right(k=2)].
    w2t = params["w2"].transpose(2, 0, 1).reshape(C2, 3 * C1).astype(jnp.bfloat16)
    b2col = params["b2"].T                                         # (C2, 1)

    # ---- fold BN2 and 1/L into the FC; pad logits rows to 8 -----------------
    s2 = params["g2"] * jax.lax.rsqrt(params["v2"] + BN_EPS)       # (1, C2)
    t2 = params["be2"] - params["m2"] * s2
    wfct_eff = jnp.zeros((NPAD, C2), jnp.float32).at[:NUM_CLASSES].set(
        (params["wfc"] * s2.T / L).T)                              # [j, o]
    bfc_eff = jnp.zeros((NPAD, 1), jnp.float32).at[:NUM_CLASSES, 0].set(
        (params["bfc"] + t2 @ params["wfc"])[0])

    grid = (G,)
    in_specs = [
        pl.BlockSpec((1, LP * tb), lambda i: (0, i)),       # input row (tiled, contiguous DMA)
        pl.BlockSpec((C1, 3), lambda i: (0, 0)),            # conv1 tap weights
        pl.BlockSpec((C1, 1), lambda i: (0, 0)),            # conv1 bias
        pl.BlockSpec((C1, 1), lambda i: (0, 0)),            # BN1 scale
        pl.BlockSpec((C1, 1), lambda i: (0, 0)),            # BN1 shift
        pl.BlockSpec((C2, 3 * C1), lambda i: (0, 0)),       # merged conv2 weight (bf16)
        pl.BlockSpec((C2, 1), lambda i: (0, 0)),            # conv2 bias
        pl.BlockSpec((NPAD, C2), lambda i: (0, 0)),         # FC weight (BN2, 1/L folded)
        pl.BlockSpec((NPAD, 1), lambda i: (0, 0)),          # FC bias (BN2 folded)
    ]
    out = pl.pallas_call(
        emotion_cnn_kernel,
        out_shape=jax.ShapeDtypeStruct((NPAD, Bp), jnp.float32),
        grid=grid,
        in_specs=in_specs,
        out_specs=pl.BlockSpec((NPAD, tb), lambda i: (0, i)),
        compiler_params=pltpu.CompilerParams(
            dimension_semantics=("parallel",),
            vmem_limit_bytes=48 * 1024 * 1024),
    )(xrow, w1cols, b1col, s1col, t1col, w2t, b2col, wfct_eff, bfc_eff)

    return out.T[:B, :NUM_CLASSES]


def init_params(key):
    """Deterministic synthetic parameters matching the PyTorch module's shapes.

    PyTorch layouts are repacked for the channels-last math:
      Conv1d weight (Cout, Cin, K) -> (K, Cin, Cout); Linear weight (O, I) -> (I, O).
    """
    keys = jax.random.split(key, 14)
    bound1 = 1.0 / (1 * 3) ** 0.5
    w1 = jax.random.uniform(keys[0], (3, 1, C1), jnp.float32, -bound1, bound1)
    b1 = jax.random.uniform(keys[1], (1, C1), jnp.float32, -bound1, bound1)
    bound2 = 1.0 / (C1 * 3) ** 0.5
    w2 = jax.random.uniform(keys[2], (3, C1, C2), jnp.float32, -bound2, bound2)
    b2 = jax.random.uniform(keys[3], (1, C2), jnp.float32, -bound2, bound2)
    boundf = 1.0 / C2 ** 0.5
    wfc = jax.random.uniform(keys[4], (C2, NUM_CLASSES), jnp.float32, -boundf, boundf)
    bfc = jax.random.uniform(keys[5], (1, NUM_CLASSES), jnp.float32, -boundf, boundf)
    # Non-trivial (but deterministic) BatchNorm affine params + running stats.
    g1 = 1.0 + 0.1 * jax.random.normal(keys[6], (1, C1), jnp.float32)
    be1 = 0.1 * jax.random.normal(keys[7], (1, C1), jnp.float32)
    m1 = 0.1 * jax.random.normal(keys[8], (1, C1), jnp.float32)
    v1 = 1.0 + 0.5 * jax.random.uniform(keys[9], (1, C1), jnp.float32)
    g2 = 1.0 + 0.1 * jax.random.normal(keys[10], (1, C2), jnp.float32)
    be2 = 0.1 * jax.random.normal(keys[11], (1, C2), jnp.float32)
    m2 = 0.1 * jax.random.normal(keys[12], (1, C2), jnp.float32)
    v2 = 1.0 + 0.5 * jax.random.uniform(keys[13], (1, C2), jnp.float32)
    return dict(w1=w1, b1=b1, g1=g1, be1=be1, m1=m1, v1=v1,
                w2=w2, b2=b2, g2=g2, be2=be2, m2=m2, v2=v2,
                wfc=wfc, bfc=bfc)


def reference_forward(x, p):
    """Pure-JAX (f32) reference of the same inference-mode forward pass."""
    B, L = x.shape
    xpad = jnp.pad(x, ((0, 0), (1, 1)))[:, :, None]                      # (B, L+2, 1)
    y1 = sum(xpad[:, k:k + L, :] * p["w1"][k][None] for k in range(3)) + p["b1"][None]
    y1 = jnp.maximum(y1, 0.0)
    y1 = ((y1 - p["m1"][None]) / jnp.sqrt(p["v1"][None] + BN_EPS)
          * p["g1"][None] + p["be1"][None])
    y1p = jnp.pad(y1, ((0, 0), (1, 1), (0, 0)))
    y2 = sum(jnp.einsum("bli,io->blo", y1p[:, k:k + L, :], p["w2"][k],
                        precision=jax.lax.Precision.HIGHEST)
             for k in range(3)) + p["b2"][None]
    y2 = jnp.maximum(y2, 0.0)
    y2 = ((y2 - p["m2"][None]) / jnp.sqrt(p["v2"][None] + BN_EPS)
          * p["g2"][None] + p["be2"][None])
    pooled = jnp.mean(y2, axis=1)                                        # (B, C2)
    return jnp.dot(pooled, p["wfc"], precision=jax.lax.Precision.HIGHEST) + p["bfc"]


# TODO(synk): training-mode BatchNorm (batch statistics) and Dropout(0.3) are not
# implemented; the kernel is inference-mode only (matching module.eval()).
# TODO(synk): on v5e the K=192 conv2 contraction uses two 128-wide MXU passes; a
# 128+64 K split could be added if profiling shows the second pass exposed.

if __name__ == "__main__":
    key = jax.random.PRNGKey(0)
    pkey, xkey, xkey2 = jax.random.split(key, 3)
    params = init_params(pkey)

    # Small single-tile case (batch not a multiple of the tile -> exercises padding).
    batch = 12
    x = jax.random.normal(xkey, (batch, INPUT_DIM), jnp.float32)          # (12, 13)
    out = jax.block_until_ready(emotion_cnn_forward(x, params))           # grid = (1,)
    ref = reference_forward(x, params)
    assert out.shape == (batch, NUM_CLASSES), out.shape
    assert jnp.allclose(out, ref, atol=2e-2, rtol=2e-2), (out, ref)

    # Multi-tile case (grid = (2,)) to exercise the batch tiling / index maps.
    batch2 = 160
    x2 = jax.random.normal(xkey2, (batch2, INPUT_DIM), jnp.float32)
    out2 = jax.block_until_ready(emotion_cnn_forward(x2, params))         # tb = 128, grid = (2,)
    ref2 = reference_forward(x2, params)
    assert out2.shape == (batch2, NUM_CLASSES), out2.shape
    assert jnp.allclose(out2, ref2, atol=2e-2, rtol=2e-2), (out2, ref2)

    print("KERNEL_OK")
</pallas_src>

<mosaic_0001>
module attributes {stable_mosaic.version = 11 : i64} {
  func.func @emotion_cnn_kernel(%arg0: i32, %arg1: memref<1x2048xf32, #tpu.memory_space<vmem>>, %arg2: memref<64x3xf32, #tpu.memory_space<vmem>>, %arg3: memref<64x1xf32, #tpu.memory_space<vmem>>, %arg4: memref<64x1xf32, #tpu.memory_space<vmem>>, %arg5: memref<64x1xf32, #tpu.memory_space<vmem>>, %arg6: memref<128x192xbf16, #tpu.memory_space<vmem>>, %arg7: memref<128x1xf32, #tpu.memory_space<vmem>>, %arg8: memref<8x128xf32, #tpu.memory_space<vmem>>, %arg9: memref<8x1xf32, #tpu.memory_space<vmem>>, %arg10: memref<8x128xf32, #tpu.memory_space<vmem>>) attributes {dimension_semantics = [#tpu.dimension_semantics<parallel>], iteration_bounds = array<i64: 1>, scalar_prefetch = 0 : i64, scratch_operands = 0 : i64, tpu.core_type = #tpu.core_type<tc>, window_params = [{transform_indices = @transform_0, window_bounds = array<i64: 1, 2048>}, {pipeline_mode = #tpu.pipeline_mode<synchronous>, transform_indices = @transform_1, window_bounds = array<i64: 64, 3>}, {pipeline_mode = #tpu.pipeline_mode<synchronous>, transform_indices = @transform_2, window_bounds = array<i64: 64, 1>}, {pipeline_mode = #tpu.pipeline_mode<synchronous>, transform_indices = @transform_3, window_bounds = array<i64: 64, 1>}, {pipeline_mode = #tpu.pipeline_mode<synchronous>, transform_indices = @transform_4, window_bounds = array<i64: 64, 1>}, {pipeline_mode = #tpu.pipeline_mode<synchronous>, transform_indices = @transform_5, window_bounds = array<i64: 128, 192>}, {pipeline_mode = #tpu.pipeline_mode<synchronous>, transform_indices = @transform_6, window_bounds = array<i64: 128, 1>}, {pipeline_mode = #tpu.pipeline_mode<synchronous>, transform_indices = @transform_7, window_bounds = array<i64: 8, 128>}, {pipeline_mode = #tpu.pipeline_mode<synchronous>, transform_indices = @transform_8, window_bounds = array<i64: 8, 1>}, {transform_indices = @transform_9, window_bounds = array<i64: 8, 128>}]} {
    %c0 = arith.constant 0 : index
    %c0_0 = arith.constant 0 : index
    %0 = vector.load %arg1[%c0, %c0_0] : memref<1x2048xf32, #tpu.memory_space<vmem>>, vector<1x2048xf32>
    %cst = arith.constant 0.000000e+00 : f32
    %1 = vector.broadcast %cst : f32 to vector<1x128xf32>
    %2 = vector.extract_strided_slice %0 {offsets = [0, 0], sizes = [1, 1920], strides = [1, 1]} : vector<1x2048xf32> to vector<1x1920xf32>
    %3 = tpu.concatenate %1, %2 in 1 : vector<1x128xf32>, vector<1x1920xf32> -> vector<1x2048xf32>
    %4 = vector.extract_strided_slice %0 {offsets = [0, 128], sizes = [1, 1920], strides = [1, 1]} : vector<1x2048xf32> to vector<1x1920xf32>
    %5 = tpu.concatenate %4, %1 in 1 : vector<1x1920xf32>, vector<1x128xf32> -> vector<1x2048xf32>
    %c0_1 = arith.constant 0 : index
    %c0_2 = arith.constant 0 : index
    %6 = vector.load %arg2[%c0_1, %c0_2] : memref<64x3xf32, #tpu.memory_space<vmem>>, vector<64x3xf32>
    %7 = vector.extract_strided_slice %6 {offsets = [0, 0], sizes = [64, 1], strides = [1, 1]} : vector<64x3xf32> to vector<64x1xf32>
    %8 = vector.broadcast %3 : vector<1x2048xf32> to vector<64x2048xf32>
    %9 = vector.broadcast %7 : vector<64x1xf32> to vector<64x2048xf32>
    %10 = arith.mulf %8, %9 : vector<64x2048xf32>
    %11 = vector.extract_strided_slice %6 {offsets = [0, 1], sizes = [64, 1], strides = [1, 1]} : vector<64x3xf32> to vector<64x1xf32>
    %12 = vector.broadcast %0 : vector<1x2048xf32> to vector<64x2048xf32>
    %13 = vector.broadcast %11 : vector<64x1xf32> to vector<64x2048xf32>
    %14 = arith.mulf %12, %13 : vector<64x2048xf32>
    %15 = arith.addf %10, %14 : vector<64x2048xf32>
    %16 = vector.extract_strided_slice %6 {offsets = [0, 2], sizes = [64, 1], strides = [1, 1]} : vector<64x3xf32> to vector<64x1xf32>
    %17 = vector.broadcast %5 : vector<1x2048xf32> to vector<64x2048xf32>
    %18 = vector.broadcast %16 : vector<64x1xf32> to vector<64x2048xf32>
    %19 = arith.mulf %17, %18 : vector<64x2048xf32>
    %20 = arith.addf %15, %19 : vector<64x2048xf32>
    %c0_3 = arith.constant 0 : index
    %c0_4 = arith.constant 0 : index
    %21 = vector.load %arg3[%c0_3, %c0_4] : memref<64x1xf32, #tpu.memory_space<vmem>>, vector<64x1xf32>
    %22 = vector.broadcast %21 : vector<64x1xf32> to vector<64x2048xf32>
    %23 = arith.addf %20, %22 : vector<64x2048xf32>
    %cst_5 = arith.constant 0.000000e+00 : f32
    %24 = vector.broadcast %cst_5 : f32 to vector<64x2048xf32>
    %25 = arith.maximumf %23, %24 : vector<64x2048xf32>
    %c0_6 = arith.constant 0 : index
    %c0_7 = arith.constant 0 : index
    %26 = vector.load %arg4[%c0_6, %c0_7] : memref<64x1xf32, #tpu.memory_space<vmem>>, vector<64x1xf32>
    %27 = vector.broadcast %26 : vector<64x1xf32> to vector<64x2048xf32>
    %28 = arith.mulf %25, %27 : vector<64x2048xf32>
    %c0_8 = arith.constant 0 : index
    %c0_9 = arith.constant 0 : index
    %29 = vector.load %arg5[%c0_8, %c0_9] : memref<64x1xf32, #tpu.memory_space<vmem>>, vector<64x1xf32>
    %30 = vector.broadcast %29 : vector<64x1xf32> to vector<64x2048xf32>
    %31 = arith.addf %28, %30 : vector<64x2048xf32>
    %32 = vector.extract_strided_slice %31 {offsets = [0, 0], sizes = [64, 1664], strides = [1, 1]} : vector<64x2048xf32> to vector<64x1664xf32>
    %cst_10 = arith.constant 0.000000e+00 : f32
    %33 = vector.broadcast %cst_10 : f32 to vector<64x384xf32>
    %34 = tpu.concatenate %32, %33 in 1 : vector<64x1664xf32>, vector<64x384xf32> -> vector<64x2048xf32>
    %35 = arith.truncf %34 : vector<64x2048xf32> to vector<64x2048xbf16>
    %cst_11 = arith.constant 0.000000e+00 : bf16
    %36 = vector.broadcast %cst_11 : bf16 to vector<64x128xbf16>
    %37 = vector.extract_strided_slice %35 {offsets = [0, 0], sizes = [64, 1920], strides = [1, 1]} : vector<64x2048xbf16> to vector<64x1920xbf16>
    %38 = tpu.concatenate %36, %37 in 1 : vector<64x128xbf16>, vector<64x1920xbf16> -> vector<64x2048xbf16>
    %39 = vector.extract_strided_slice %35 {offsets = [0, 128], sizes = [64, 1920], strides = [1, 1]} : vector<64x2048xbf16> to vector<64x1920xbf16>
    %40 = tpu.concatenate %39, %36 in 1 : vector<64x1920xbf16>, vector<64x128xbf16> -> vector<64x2048xbf16>
    %41 = tpu.concatenate %38, %35, %40 in 0 : vector<64x2048xbf16>, vector<64x2048xbf16>, vector<64x2048xbf16> -> vector<192x2048xbf16>
    %c0_12 = arith.constant 0 : index
    %c0_13 = arith.constant 0 : index
    %42 = vector.load %arg6[%c0_12, %c0_13] : memref<128x192xbf16, #tpu.memory_space<vmem>>, vector<128x192xbf16>
    %cst_14 = arith.constant dense<0.000000e+00> : vector<128x2048xf32>
    %43 = tpu.matmul %42, %41, %cst_14 {dimension_numbers = #tpu.dot_dimension_numbers<[1], [0], [0], [1], [0, 0, 1, 1], [], []>} : vector<128x192xbf16>, vector<192x2048xbf16>, vector<128x2048xf32> -> vector<128x2048xf32>
    %c0_15 = arith.constant 0 : index
    %c0_16 = arith.constant 0 : index
    %44 = vector.load %arg7[%c0_15, %c0_16] : memref<128x1xf32, #tpu.memory_space<vmem>>, vector<128x1xf32>
    %45 = vector.broadcast %44 : vector<128x1xf32> to vector<128x2048xf32>
    %46 = arith.addf %43, %45 : vector<128x2048xf32>
    %cst_17 = arith.constant 0.000000e+00 : f32
    %47 = vector.broadcast %cst_17 : f32 to vector<128x2048xf32>
    %48 = arith.maximumf %46, %47 : vector<128x2048xf32>
    %49 = vector.extract_strided_slice %48 {offsets = [0, 0], sizes = [128, 128], strides = [1, 1]} : vector<128x2048xf32> to vector<128x128xf32>
    %50 = vector.extract_strided_slice %48 {offsets = [0, 128], sizes = [128, 128], strides = [1, 1]} : vector<128x2048xf32> to vector<128x128xf32>
    %51 = vector.extract_strided_slice %48 {offsets = [0, 256], sizes = [128, 128], strides = [1, 1]} : vector<128x2048xf32> to vector<128x128xf32>
    %52 = vector.extract_strided_slice %48 {offsets = [0, 384], sizes = [128, 128], strides = [1, 1]} : vector<128x2048xf32> to vector<128x128xf32>
    %53 = vector.extract_strided_slice %48 {offsets = [0, 512], sizes = [128, 128], strides = [1, 1]} : vector<128x2048xf32> to vector<128x128xf32>
    %54 = vector.extract_strided_slice %48 {offsets = [0, 640], sizes = [128, 128], strides = [1, 1]} : vector<128x2048xf32> to vector<128x128xf32>
    %55 = vector.extract_strided_slice %48 {offsets = [0, 768], sizes = [128, 128], strides = [1, 1]} : vector<128x2048xf32> to vector<128x128xf32>
    %56 = vector.extract_strided_slice %48 {offsets = [0, 896], sizes = [128, 128], strides = [1, 1]} : vector<128x2048xf32> to vector<128x128xf32>
    %57 = vector.extract_strided_slice %48 {offsets = [0, 1024], sizes = [128, 128], strides = [1, 1]} : vector<128x2048xf32> to vector<128x128xf32>
    %58 = vector.extract_strided_slice %48 {offsets = [0, 1152], sizes = [128, 128], strides = [1, 1]} : vector<128x2048xf32> to vector<128x128xf32>
    %59 = vector.extract_strided_slice %48 {offsets = [0, 1280], sizes = [128, 128], strides = [1, 1]} : vector<128x2048xf32> to vector<128x128xf32>
    %60 = vector.extract_strided_slice %48 {offsets = [0, 1408], sizes = [128, 128], strides = [1, 1]} : vector<128x2048xf32> to vector<128x128xf32>
    %61 = vector.extract_strided_slice %48 {offsets = [0, 1536], sizes = [128, 128], strides = [1, 1]} : vector<128x2048xf32> to vector<128x128xf32>
    %62 = arith.addf %49, %50 : vector<128x128xf32>
    %63 = arith.addf %51, %52 : vector<128x128xf32>
    %64 = arith.addf %53, %54 : vector<128x128xf32>
    %65 = arith.addf %55, %56 : vector<128x128xf32>
    %66 = arith.addf %57, %58 : vector<128x128xf32>
    %67 = arith.addf %59, %60 : vector<128x128xf32>
    %68 = arith.addf %62, %63 : vector<128x128xf32>
    %69 = arith.addf %64, %65 : vector<128x128xf32>
    %70 = arith.addf %66, %67 : vector<128x128xf32>
    %71 = arith.addf %68, %69 : vector<128x128xf32>
    %72 = arith.addf %70, %61 : vector<128x128xf32>
    %73 = arith.addf %71, %72 : vector<128x128xf32>
    %c0_18 = arith.constant 0 : index
    %c0_19 = arith.constant 0 : index
    %74 = vector.load %arg8[%c0_18, %c0_19] : memref<8x128xf32, #tpu.memory_space<vmem>>, vector<8x128xf32>
    %cst_20 = arith.constant dense<0.000000e+00> : vector<8x128xf32>
    %75 = tpu.matmul %74, %73, %cst_20 {dimension_numbers = #tpu.dot_dimension_numbers<[1], [0], [0], [1], [0, 0, 1, 1], [], []>} : vector<8x128xf32>, vector<128x128xf32>, vector<8x128xf32> -> vector<8x128xf32>
    %c0_21 = arith.constant 0 : index
    %c0_22 = arith.constant 0 : index
    %76 = vector.load %arg9[%c0_21, %c0_22] : memref<8x1xf32, #tpu.memory_space<vmem>>, vector<8x1xf32>
    %77 = vector.broadcast %76 : vector<8x1xf32> to vector<8x128xf32>
    %78 = arith.addf %75, %77 : vector<8x128xf32>
    %c0_23 = arith.constant 0 : index
    %c0_24 = arith.constant 0 : index
    %79 = vector.load %arg10[%c0_23, %c0_24] : memref<8x128xf32, #tpu.memory_space<vmem>>, vector<8x128xf32>
    tpu.vector_store %arg10[%c0_23, %c0_24], %78 {strides = array<i32>} : memref<8x128xf32, #tpu.memory_space<vmem>>, vector<8x128xf32>,
    return
  }
  func.func @transform_0(%arg0: i32) -> (i32, i32) {
    %c0_i32 = arith.constant 0 : i32
    %c0_i32_0 = arith.constant 0 : i32
    return %c0_i32, %arg0 : i32, i32
  }
  func.func @transform_1(%arg0: i32) -> (i32, i32) {
    %c0_i32 = arith.constant 0 : i32
    %c0_i32_0 = arith.constant 0 : i32
    %c0_i32_1 = arith.constant 0 : i32
    return %c0_i32, %c0_i32_0 : i32, i32
  }
  func.func @transform_2(%arg0: i32) -> (i32, i32) {
    %c0_i32 = arith.constant 0 : i32
    %c0_i32_0 = arith.constant 0 : i32
    %c0_i32_1 = arith.constant 0 : i32
    return %c0_i32, %c0_i32_0 : i32, i32
  }
  func.func @transform_3(%arg0: i32) -> (i32, i32) {
    %c0_i32 = arith.constant 0 : i32
    %c0_i32_0 = arith.constant 0 : i32
    %c0_i32_1 = arith.constant 0 : i32
    return %c0_i32, %c0_i32_0 : i32, i32
  }
  func.func @transform_4(%arg0: i32) -> (i32, i32) {
    %c0_i32 = arith.constant 0 : i32
    %c0_i32_0 = arith.constant 0 : i32
    %c0_i32_1 = arith.constant 0 : i32
    return %c0_i32, %c0_i32_0 : i32, i32
  }
  func.func @transform_5(%arg0: i32) -> (i32, i32) {
    %c0_i32 = arith.constant 0 : i32
    %c0_i32_0 = arith.constant 0 : i32
    %c0_i32_1 = arith.constant 0 : i32
    return %c0_i32, %c0_i32_0 : i32, i32
  }
  func.func @transform_6(%arg0: i32) -> (i32, i32) {
    %c0_i32 = arith.constant 0 : i32
    %c0_i32_0 = arith.constant 0 : i32
    %c0_i32_1 = arith.constant 0 : i32
    return %c0_i32, %c0_i32_0 : i32, i32
  }
  func.func @transform_7(%arg0: i32) -> (i32, i32) {
    %c0_i32 = arith.constant 0 : i32
    %c0_i32_0 = arith.constant 0 : i32
    %c0_i32_1 = arith.constant 0 : i32
    return %c0_i32, %c0_i32_0 : i32, i32
  }
  func.func @transform_8(%arg0: i32) -> (i32, i32) {
    %c0_i32 = arith.constant 0 : i32
    %c0_i32_0 = arith.constant 0 : i32
    %c0_i32_1 = arith.constant 0 : i32
    return %c0_i32, %c0_i32_0 : i32, i32
  }
  func.func @transform_9(%arg0: i32) -> (i32, i32) {
    %c0_i32 = arith.constant 0 : i32
    %c0_i32_0 = arith.constant 0 : i32
    return %c0_i32, %arg0 : i32, i32
  }
}

</mosaic_0001>

<llo_original>
// kernel: tpu_custom_call.1
$region0: #{tpu_custom_call.1}
  #allocation0 [shape = 'u32[]', space=smem, size = 0x4, offset = 0x4, fixed_abs, tag = 'smem constant byte address 0x4 - core index']
  #allocation1 [shape = 'u32[72,128]{1,0:T(1,128)}', space=vmem, size = 0x9000, scoped, tag = 'internal scratch']
  %s0 = inlined_call_operand.vmem [shape: f32[1,2048], index: 0, kind: input, shape index: {}]
  %s1 = inlined_call_operand.vmem [shape: f32[64,3], index: 1, kind: input, shape index: {}]
  %s2 = inlined_call_operand.vmem [shape: f32[64,1], index: 2, kind: input, shape index: {}]
  %s3 = inlined_call_operand.vmem [shape: f32[64,1], index: 3, kind: input, shape index: {}]
  %s4 = inlined_call_operand.vmem [shape: f32[64,1], index: 4, kind: input, shape index: {}]
  %s5 = inlined_call_operand.vmem [shape: bf16[128,192], index: 5, kind: input, shape index: {}]
  %s6 = inlined_call_operand.vmem [shape: f32[128,1], index: 6, kind: input, shape index: {}]
  %s7 = inlined_call_operand.vmem [shape: f32[8,128], index: 7, kind: input, shape index: {}]
  %s8 = inlined_call_operand.vmem [shape: f32[8,1], index: 8, kind: input, shape index: {}]
  %s9 = inlined_call_operand.hbm [shape: f32[8,128], index: 9, kind: output, shape index: {}]
  %s10 = sld [smem:[#allocation0]]
  $region46: #{tpu_custom_call.1} parent=0
    _
  %s12 = ssub.s32 1, %s10
  %s13 = scalar_select 0, %s12, %s10
  $region1: #{tpu_custom_call.1} parent=0
    #allocation2 [shape = 'u8[4096]{0}', space=vmem, size = 0x1000, scoped, tag = 'output window, operand 0, single buffered']
    #allocation3 [shape = 's32[1]{0}', space=sflag, size = 0x4, scoped, tag = 'scoped memory for tpu_custom_call.1']
    %14 = vsyncpa [#allocation3], 0
    // Predicated region
    $region2: #{tpu_custom_call.1} parent=1 // pred_check
      _
    $region3: #{tpu_custom_call.1} parent=1 // pred_check_branch
      %16 = sbr.rel (0) target = $region5
    $region4: #{tpu_custom_call.1} parent=1 // pred_region
      _
    $region5: #{tpu_custom_call.1} parent=1 // pred_fallthru
      _
    // Predicated region
    $region6: #{tpu_custom_call.1} parent=1 // pred_check
      _
    $region7: #{tpu_custom_call.1} parent=1 // pred_check_branch
      %18 = sbr.rel (0) target = $region9
    $region8: #{tpu_custom_call.1} parent=1 // pred_region
      _
    $region9: #{tpu_custom_call.1} parent=1 // pred_fallthru
      _
    // Predicated region
    $region10: #{tpu_custom_call.1} parent=1 // pred_check
      _
    $region11: #{tpu_custom_call.1} parent=1 // pred_check_branch
      %20 = sbr.rel (0) target = $region13
    $region12: #{tpu_custom_call.1} parent=1 // pred_region
      _
    $region13: #{tpu_custom_call.1} parent=1 // pred_fallthru
      _
    // Predicated region
    $region14: #{tpu_custom_call.1} parent=1 // pred_check
      _
    $region15: #{tpu_custom_call.1} parent=1 // pred_check_branch
      %22 = sbr.rel (0) target = $region17
    $region16: #{tpu_custom_call.1} parent=1 // pred_region
      _
    $region17: #{tpu_custom_call.1} parent=1 // pred_fallthru
      _
    // Predicated region
    $region18: #{tpu_custom_call.1} parent=1 // pred_check
      _
    $region19: #{tpu_custom_call.1} parent=1 // pred_check_branch
      %24 = sbr.rel (0) target = $region21
    $region20: #{tpu_custom_call.1} parent=1 // pred_region
      _
    $region21: #{tpu_custom_call.1} parent=1 // pred_fallthru
      _
    // Predicated region
    $region22: #{tpu_custom_call.1} parent=1 // pred_check
      _
    $region23: #{tpu_custom_call.1} parent=1 // pred_check_branch
      %26 = sbr.rel (0) target = $region25
    $region24: #{tpu_custom_call.1} parent=1 // pred_region
      _
    $region25: #{tpu_custom_call.1} parent=1 // pred_fallthru
      _
    // Predicated region
    $region26: #{tpu_custom_call.1} parent=1 // pred_check
      _
    $region27: #{tpu_custom_call.1} parent=1 // pred_check_branch
      %28 = sbr.rel (0) target = $region29
    $region28: #{tpu_custom_call.1} parent=1 // pred_region
      _
    $region29: #{tpu_custom_call.1} parent=1 // pred_fallthru
      _
    // Predicated region
    $region30: #{tpu_custom_call.1} parent=1 // pred_check
      _
    $region31: #{tpu_custom_call.1} parent=1 // pred_check_branch
      %30 = sbr.rel (0) target = $region33
    $region32: #{tpu_custom_call.1} parent=1 // pred_region
      _
    $region33: #{tpu_custom_call.1} parent=1 // pred_fallthru
      _
    // Predicated region
    $region34: #{tpu_custom_call.1} parent=1 // pred_check
      _
    $region35: #{tpu_custom_call.1} parent=1 // pred_check_branch
      %32 = sbr.rel (0) target = $region37
    $region36: #{tpu_custom_call.1} parent=1 // pred_region
      _
    $region37: #{tpu_custom_call.1} parent=1 // pred_fallthru
      _
    %v34 = vld [vmem:[%s0] sm:$0xff]
    %v35 = vld [vmem:[%s0 + $0x8] sm:$0xff]
    %v38 = vperm.slane %v34, 0
    %v39 = vperm.slane %v34, 1
    %v40 = vperm.slane %v34, 2
    %v41 = vperm.slane %v34, 3
    %v42 = vperm.slane %v34, 4
    %v43 = vperm.slane %v34, 5
    %v44 = vperm.slane %v34, 6
    %v45 = vperm.slane %v34, 7
    %v46 = vperm.slane %v35, 0
    %v47 = vperm.slane %v35, 1
    %v48 = vperm.slane %v35, 2
    %v49 = vperm.slane %v35, 3
    %v62 = vperm.slane %v35, 4
    %v63 = vperm.slane %v35, 5
    %v66 = vld [vmem:[%s1] sm:$0xff]
    %v67 = vld [vmem:[%s1 + $0x8] sm:$0xff]
    %v68 = vld [vmem:[%s1 + $0x10] sm:$0xff]
    %v69 = vld [vmem:[%s1 + $0x18] sm:$0xff]
    %v70 = vld [vmem:[%s1 + $0x20] sm:$0xff]
    %v71 = vld [vmem:[%s1 + $0x28] sm:$0xff]
    %v72 = vld [vmem:[%s1 + $0x30] sm:$0xff]
    %v73 = vld [vmem:[%s1 + $0x38] sm:$0xff]
    %v74 = vperm.slane 0.0, 0
    %v75 = vperm.slane %v38, 0
    %v76 = vperm.slane %v39, 0
    %v77 = vperm.slane %v40, 0
    %v78 = vperm.slane %v41, 0
    %v79 = vperm.slane %v42, 0
    %v80 = vperm.slane %v43, 0
    %v81 = vperm.slane %v44, 0
    %v82 = vperm.slane %v45, 0
    %v83 = vperm.slane %v46, 0
    %v84 = vperm.slane %v47, 0
    %v85 = vperm.slane %v48, 0
    %v86 = vperm.slane %v49, 0
    %88 = vset.pattern.permute.xlu0 0
    %89 = vperm.xlu0 %88, %v66
    %v90 = vpop.permute.xlu0 %89
    %93 = vset.pattern.permute.xlu0 0
    %94 = vperm.xlu0 %93, %v67
    %v95 = vpop.permute.xlu0 %94
    %98 = vset.pattern.permute.xlu0 0
    %99 = vperm.xlu0 %98, %v68
    %v100 = vpop.permute.xlu0 %99
    %103 = vset.pattern.permute.xlu0 0
    %104 = vperm.xlu0 %103, %v69
    %v105 = vpop.permute.xlu0 %104
    %108 = vset.pattern.permute.xlu0 0
    %109 = vperm.xlu0 %108, %v70
    %v110 = vpop.permute.xlu0 %109
    %113 = vset.pattern.permute.xlu0 0
    %114 = vperm.xlu0 %113, %v71
    %v115 = vpop.permute.xlu0 %114
    %118 = vset.pattern.permute.xlu0 0
    %119 = vperm.xlu0 %118, %v72
    %v120 = vpop.permute.xlu0 %119
    %123 = vset.pattern.permute.xlu0 0
    %124 = vperm.xlu0 %123, %v73
    %v125 = vpop.permute.xlu0 %124
    %v127 = vmul.f32 %v74, %v90
    %v128 = vmul.f32 %v75, %v90
    %v129 = vmul.f32 %v76, %v90
    %v130 = vmul.f32 %v77, %v90
    %v131 = vmul.f32 %v78, %v90
    %v132 = vmul.f32 %v79, %v90
    %v133 = vmul.f32 %v80, %v90
    %v134 = vmul.f32 %v81, %v90
    %v135 = vmul.f32 %v82, %v90
    %v136 = vmul.f32 %v83, %v90
    %v137 = vmul.f32 %v84, %v90
    %v138 = vmul.f32 %v85, %v90
    %v139 = vmul.f32 %v86, %v90
    %v140 = vmul.f32 %v74, %v95
    %v141 = vmul.f32 %v75, %v95
    %v142 = vmul.f32 %v76, %v95
    %v143 = vmul.f32 %v77, %v95
    %v144 = vmul.f32 %v78, %v95
    %v145 = vmul.f32 %v79, %v95
    %v146 = vmul.f32 %v80, %v95
    %v147 = vmul.f32 %v81, %v95
    %v148 = vmul.f32 %v82, %v95
    %v149 = vmul.f32 %v83, %v95
    %v150 = vmul.f32 %v84, %v95
    %v151 = vmul.f32 %v85, %v95
    %v152 = vmul.f32 %v86, %v95
    %v153 = vmul.f32 %v74, %v100
    %v154 = vmul.f32 %v75, %v100
    %v155 = vmul.f32 %v76, %v100
    %v156 = vmul.f32 %v77, %v100
    %v157 = vmul.f32 %v78, %v100
    %v158 = vmul.f32 %v79, %v100
    %v159 = vmul.f32 %v80, %v100
    %v160 = vmul.f32 %v81, %v100
    %v161 = vmul.f32 %v82, %v100
    %v162 = vmul.f32 %v83, %v100
    %v163 = vmul.f32 %v84, %v100
    %v164 = vmul.f32 %v85, %v100
    %v165 = vmul.f32 %v86, %v100
    %v166 = vmul.f32 %v74, %v105
    %v167 = vmul.f32 %v75, %v105
    %v168 = vmul.f32 %v76, %v105
    %v169 = vmul.f32 %v77, %v105
    %v170 = vmul.f32 %v78, %v105
    %v171 = vmul.f32 %v79, %v105
    %v172 = vmul.f32 %v80, %v105
    %v173 = vmul.f32 %v81, %v105
    %v174 = vmul.f32 %v82, %v105
    %v175 = vmul.f32 %v83, %v105
    %v176 = vmul.f32 %v84, %v105
    %v177 = vmul.f32 %v85, %v105
    %v178 = vmul.f32 %v86, %v105
    %v179 = vmul.f32 %v74, %v110
    %v180 = vmul.f32 %v75, %v110
    %v181 = vmul.f32 %v76, %v110
    %v182 = vmul.f32 %v77, %v110
    %v183 = vmul.f32 %v78, %v110
    %v184 = vmul.f32 %v79, %v110
    %v185 = vmul.f32 %v80, %v110
    %v186 = vmul.f32 %v81, %v110
    %v187 = vmul.f32 %v82, %v110
    %v188 = vmul.f32 %v83, %v110
    %v189 = vmul.f32 %v84, %v110
    %v190 = vmul.f32 %v85, %v110
    %v191 = vmul.f32 %v86, %v110
    %v192 = vmul.f32 %v74, %v115
    %v193 = vmul.f32 %v75, %v115
    %v194 = vmul.f32 %v76, %v115
    %v195 = vmul.f32 %v77, %v115
    %v196 = vmul.f32 %v78, %v115
    %v197 = vmul.f32 %v79, %v115
    %v198 = vmul.f32 %v80, %v115
    %v199 = vmul.f32 %v81, %v115
    %v200 = vmul.f32 %v82, %v115
    %v201 = vmul.f32 %v83, %v115
    %v202 = vmul.f32 %v84, %v115
    %v203 = vmul.f32 %v85, %v115
    %v204 = vmul.f32 %v86, %v115
    %v205 = vmul.f32 %v74, %v120
    %v206 = vmul.f32 %v75, %v120
    %v207 = vmul.f32 %v76, %v120
    %v208 = vmul.f32 %v77, %v120
    %v209 = vmul.f32 %v78, %v120
    %v210 = vmul.f32 %v79, %v120
    %v211 = vmul.f32 %v80, %v120
    %v212 = vmul.f32 %v81, %v120
    %v213 = vmul.f32 %v82, %v120
    %v214 = vmul.f32 %v83, %v120
    %v215 = vmul.f32 %v84, %v120
    %v216 = vmul.f32 %v85, %v120
    %v217 = vmul.f32 %v86, %v120
    %v218 = vmul.f32 %v74, %v125
    %v219 = vmul.f32 %v75, %v125
    %v220 = vmul.f32 %v76, %v125
    %v221 = vmul.f32 %v77, %v125
    %v222 = vmul.f32 %v78, %v125
    %v223 = vmul.f32 %v79, %v125
    %v224 = vmul.f32 %v80, %v125
    %v225 = vmul.f32 %v81, %v125
    %v226 = vmul.f32 %v82, %v125
    %v227 = vmul.f32 %v83, %v125
    %v228 = vmul.f32 %v84, %v125
    %v229 = vmul.f32 %v85, %v125
    %v230 = vmul.f32 %v86, %v125
    %231 = vset.pattern.permute.xlu0 1
    %232 = vperm.xlu0 %231, %v66
    %v233 = vpop.permute.xlu0 %232
    %235 = vset.pattern.permute.xlu0 1
    %236 = vperm.xlu0 %235, %v67
    %v237 = vpop.permute.xlu0 %236
    %239 = vset.pattern.permute.xlu0 1
    %240 = vperm.xlu0 %239, %v68
    %v241 = vpop.permute.xlu0 %240
    %243 = vset.pattern.permute.xlu0 1
    %244 = vperm.xlu0 %243, %v69
    %v245 = vpop.permute.xlu0 %244
    %247 = vset.pattern.permute.xlu0 1
    %248 = vperm.xlu0 %247, %v70
    %v249 = vpop.permute.xlu0 %248
    %251 = vset.pattern.permute.xlu0 1
    %252 = vperm.xlu0 %251, %v71
    %v253 = vpop.permute.xlu0 %252
    %255 = vset.pattern.permute.xlu0 1
    %256 = vperm.xlu0 %255, %v72
    %v257 = vpop.permute.xlu0 %256
    %259 = vset.pattern.permute.xlu0 1
    %260 = vperm.xlu0 %259, %v73
    %v261 = vpop.permute.xlu0 %260
    %v263 = vmul.f32 %v38, %v233
    %v264 = vmul.f32 %v39, %v233
    %v265 = vmul.f32 %v40, %v233
    %v266 = vmul.f32 %v41, %v233
    %v267 = vmul.f32 %v42, %v233
    %v268 = vmul.f32 %v43, %v233
    %v269 = vmul.f32 %v44, %v233
    %v270 = vmul.f32 %v45, %v233
    %v271 = vmul.f32 %v46, %v233
    %v272 = vmul.f32 %v47, %v233
    %v273 = vmul.f32 %v48, %v233
    %v274 = vmul.f32 %v49, %v233
    %v275 = vmul.f32 %v62, %v233
    %v276 = vmul.f32 %v38, %v237
    %v277 = vmul.f32 %v39, %v237
    %v278 = vmul.f32 %v40, %v237
    %v279 = vmul.f32 %v41, %v237
    %v280 = vmul.f32 %v42, %v237
    %v281 = vmul.f32 %v43, %v237
    %v282 = vmul.f32 %v44, %v237
    %v283 = vmul.f32 %v45, %v237
    %v284 = vmul.f32 %v46, %v237
    %v285 = vmul.f32 %v47, %v237
    %v286 = vmul.f32 %v48, %v237
    %v287 = vmul.f32 %v49, %v237
    %v288 = vmul.f32 %v62, %v237
    %v289 = vmul.f32 %v38, %v241
    %v290 = vmul.f32 %v39, %v241
    %v291 = vmul.f32 %v40, %v241
    %v292 = vmul.f32 %v41, %v241
    %v293 = vmul.f32 %v42, %v241
    %v294 = vmul.f32 %v43, %v241
    %v295 = vmul.f32 %v44, %v241
    %v296 = vmul.f32 %v45, %v241
    %v297 = vmul.f32 %v46, %v241
    %v298 = vmul.f32 %v47, %v241
    %v299 = vmul.f32 %v48, %v241
    %v300 = vmul.f32 %v49, %v241
    %v301 = vmul.f32 %v62, %v241
    %v302 = vmul.f32 %v38, %v245
    %v303 = vmul.f32 %v39, %v245
    %v304 = vmul.f32 %v40, %v245
    %v305 = vmul.f32 %v41, %v245
    %v306 = vmul.f32 %v42, %v245
    %v307 = vmul.f32 %v43, %v245
    %v308 = vmul.f32 %v44, %v245
    %v309 = vmul.f32 %v45, %v245
    %v310 = vmul.f32 %v46, %v245
    %v311 = vmul.f32 %v47, %v245
    %v312 = vmul.f32 %v48, %v245
    %v313 = vmul.f32 %v49, %v245
    %v314 = vmul.f32 %v62, %v245
    %v315 = vmul.f32 %v38, %v249
    %v316 = vmul.f32 %v39, %v249
    %v317 = vmul.f32 %v40, %v249
    %v318 = vmul.f32 %v41, %v249
    %v319 = vmul.f32 %v42, %v249
    %v320 = vmul.f32 %v43, %v249
    %v321 = vmul.f32 %v44, %v249
    %v322 = vmul.f32 %v45, %v249
    %v323 = vmul.f32 %v46, %v249
    %v324 = vmul.f32 %v47, %v249
    %v325 = vmul.f32 %v48, %v249
    %v326 = vmul.f32 %v49, %v249
    %v327 = vmul.f32 %v62, %v249
    %v328 = vmul.f32 %v38, %v253
    %v329 = vmul.f32 %v39, %v253
    %v330 = vmul.f32 %v40, %v253
    %v331 = vmul.f32 %v41, %v253
    %v332 = vmul.f32 %v42, %v253
    %v333 = vmul.f32 %v43, %v253
    %v334 = vmul.f32 %v44, %v253
    %v335 = vmul.f32 %v45, %v253
    %v336 = vmul.f32 %v46, %v253
    %v337 = vmul.f32 %v47, %v253
    %v338 = vmul.f32 %v48, %v253
    %v339 = vmul.f32 %v49, %v253
    %v340 = vmul.f32 %v62, %v253
    %v341 = vmul.f32 %v38, %v257
    %v342 = vmul.f32 %v39, %v257
    %v343 = vmul.f32 %v40, %v257
    %v344 = vmul.f32 %v41, %v257
    %v345 = vmul.f32 %v42, %v257
    %v346 = vmul.f32 %v43, %v257
    %v347 = vmul.f32 %v44, %v257
    %v348 = vmul.f32 %v45, %v257
    %v349 = vmul.f32 %v46, %v257
    %v350 = vmul.f32 %v47, %v257
    %v351 = vmul.f32 %v48, %v257
    %v352 = vmul.f32 %v49, %v257
    %v353 = vmul.f32 %v62, %v257
    %v354 = vmul.f32 %v38, %v261
    %v355 = vmul.f32 %v39, %v261
    %v356 = vmul.f32 %v40, %v261
    %v357 = vmul.f32 %v41, %v261
    %v358 = vmul.f32 %v42, %v261
    %v359 = vmul.f32 %v43, %v261
    %v360 = vmul.f32 %v44, %v261
    %v361 = vmul.f32 %v45, %v261
    %v362 = vmul.f32 %v46, %v261
    %v363 = vmul.f32 %v47, %v261
    %v364 = vmul.f32 %v48, %v261
    %v365 = vmul.f32 %v49, %v261
    %v366 = vmul.f32 %v62, %v261
    %v367 = vadd.f32 %v127, %v263
    %v368 = vadd.f32 %v128, %v264
    %v369 = vadd.f32 %v129, %v265
    %v370 = vadd.f32 %v130, %v266
    %v371 = vadd.f32 %v131, %v267
    %v372 = vadd.f32 %v132, %v268
    %v373 = vadd.f32 %v133, %v269
    %v374 = vadd.f32 %v134, %v270
    %v375 = vadd.f32 %v135, %v271
    %v376 = vadd.f32 %v136, %v272
    %v377 = vadd.f32 %v137, %v273
    %v378 = vadd.f32 %v138, %v274
    %v379 = vadd.f32 %v139, %v275
    %v380 = vadd.f32 %v140, %v276
    %v381 = vadd.f32 %v141, %v277
    %v382 = vadd.f32 %v142, %v278
    %v383 = vadd.f32 %v143, %v279
    %v384 = vadd.f32 %v144, %v280
    %v385 = vadd.f32 %v145, %v281
    %v386 = vadd.f32 %v146, %v282
    %v387 = vadd.f32 %v147, %v283
    %v388 = vadd.f32 %v148, %v284
    %v389 = vadd.f32 %v149, %v285
    %v390 = vadd.f32 %v150, %v286
    %v391 = vadd.f32 %v151, %v287
    %v392 = vadd.f32 %v152, %v288
    %v393 = vadd.f32 %v153, %v289
    %v394 = vadd.f32 %v154, %v290
    %v395 = vadd.f32 %v155, %v291
    %v396 = vadd.f32 %v156, %v292
    %v397 = vadd.f32 %v157, %v293
    %v398 = vadd.f32 %v158, %v294
    %v399 = vadd.f32 %v159, %v295
    %v400 = vadd.f32 %v160, %v296
    %v401 = vadd.f32 %v161, %v297
    %v402 = vadd.f32 %v162, %v298
    %v403 = vadd.f32 %v163, %v299
    %v404 = vadd.f32 %v164, %v300
    %v405 = vadd.f32 %v165, %v301
    %v406 = vadd.f32 %v166, %v302
    %v407 = vadd.f32 %v167, %v303
    %v408 = vadd.f32 %v168, %v304
    %v409 = vadd.f32 %v169, %v305
    %v410 = vadd.f32 %v170, %v306
    %v411 = vadd.f32 %v171, %v307
    %v412 = vadd.f32 %v172, %v308
    %v413 = vadd.f32 %v173, %v309
    %v414 = vadd.f32 %v174, %v310
    %v415 = vadd.f32 %v175, %v311
    %v416 = vadd.f32 %v176, %v312
    %v417 = vadd.f32 %v177, %v313
    %v418 = vadd.f32 %v178, %v314
    %v419 = vadd.f32 %v179, %v315
    %v420 = vadd.f32 %v180, %v316
    %v421 = vadd.f32 %v181, %v317
    %v422 = vadd.f32 %v182, %v318
    %v423 = vadd.f32 %v183, %v319
    %v424 = vadd.f32 %v184, %v320
    %v425 = vadd.f32 %v185, %v321
    %v426 = vadd.f32 %v186, %v322
    %v427 = vadd.f32 %v187, %v323
    %v428 = vadd.f32 %v188, %v324
    %v429 = vadd.f32 %v189, %v325
    %v430 = vadd.f32 %v190, %v326
    %v431 = vadd.f32 %v191, %v327
    %v432 = vadd.f32 %v192, %v328
    %v433 = vadd.f32 %v193, %v329
    %v434 = vadd.f32 %v194, %v330
    %v435 = vadd.f32 %v195, %v331
    %v436 = vadd.f32 %v196, %v332
    %v437 = vadd.f32 %v197, %v333
    %v438 = vadd.f32 %v198, %v334
    %v439 = vadd.f32 %v199, %v335
    %v440 = vadd.f32 %v200, %v336
    %v441 = vadd.f32 %v201, %v337
    %v442 = vadd.f32 %v202, %v338
    %v443 = vadd.f32 %v203, %v339
    %v444 = vadd.f32 %v204, %v340
    %v445 = vadd.f32 %v205, %v341
    %v446 = vadd.f32 %v206, %v342
    %v447 = vadd.f32 %v207, %v343
    %v448 = vadd.f32 %v208, %v344
    %v449 = vadd.f32 %v209, %v345
    %v450 = vadd.f32 %v210, %v346
    %v451 = vadd.f32 %v211, %v347
    %v452 = vadd.f32 %v212, %v348
    %v453 = vadd.f32 %v213, %v349
    %v454 = vadd.f32 %v214, %v350
    %v455 = vadd.f32 %v215, %v351
    %v456 = vadd.f32 %v216, %v352
    %v457 = vadd.f32 %v217, %v353
    %v458 = vadd.f32 %v218, %v354
    %v459 = vadd.f32 %v219, %v355
    %v460 = vadd.f32 %v220, %v356
    %v461 = vadd.f32 %v221, %v357
    %v462 = vadd.f32 %v222, %v358
    %v463 = vadd.f32 %v223, %v359
    %v464 = vadd.f32 %v224, %v360
    %v465 = vadd.f32 %v225, %v361
    %v466 = vadd.f32 %v226, %v362
    %v467 = vadd.f32 %v227, %v363
    %v468 = vadd.f32 %v228, %v364
    %v469 = vadd.f32 %v229, %v365
    %v470 = vadd.f32 %v230, %v366
    %v471 = vperm.slane %v62, 0
    %v472 = vperm.slane %v63, 0
    %473 = vset.pattern.permute.xlu0 2
    %474 = vperm.xlu0 %473, %v66
    %v475 = vpop.permute.xlu0 %474
    %477 = vset.pattern.permute.xlu0 2
    %478 = vperm.xlu0 %477, %v67
    %v479 = vpop.permute.xlu0 %478
    %481 = vset.pattern.permute.xlu0 2
    %482 = vperm.xlu0 %481, %v68
    %v483 = vpop.permute.xlu0 %482
    %485 = vset.pattern.permute.xlu0 2
    %486 = vperm.xlu0 %485, %v69
    %v487 = vpop.permute.xlu0 %486
    %489 = vset.pattern.permute.xlu0 2
    %490 = vperm.xlu0 %489, %v70
    %v491 = vpop.permute.xlu0 %490
    %493 = vset.pattern.permute.xlu0 2
    %494 = vperm.xlu0 %493, %v71
    %v495 = vpop.permute.xlu0 %494
    %497 = vset.pattern.permute.xlu0 2
    %498 = vperm.xlu0 %497, %v72
    %v499 = vpop.permute.xlu0 %498
    %501 = vset.pattern.permute.xlu0 2
    %502 = vperm.xlu0 %501, %v73
    %v503 = vpop.permute.xlu0 %502
    %v505 = vmul.f32 %v76, %v475
    %v506 = vmul.f32 %v77, %v475
    %v507 = vmul.f32 %v78, %v475
    %v508 = vmul.f32 %v79, %v475
    %v509 = vmul.f32 %v80, %v475
    %v510 = vmul.f32 %v81, %v475
    %v511 = vmul.f32 %v82, %v475
    %v512 = vmul.f32 %v83, %v475
    %v513 = vmul.f32 %v84, %v475
    %v514 = vmul.f32 %v85, %v475
    %v515 = vmul.f32 %v86, %v475
    %v516 = vmul.f32 %v471, %v475
    %v517 = vmul.f32 %v472, %v475
    %v518 = vmul.f32 %v76, %v479
    %v519 = vmul.f32 %v77, %v479
    %v520 = vmul.f32 %v78, %v479
    %v521 = vmul.f32 %v79, %v479
    %v522 = vmul.f32 %v80, %v479
    %v523 = vmul.f32 %v81, %v479
    %v524 = vmul.f32 %v82, %v479
    %v525 = vmul.f32 %v83, %v479
    %v526 = vmul.f32 %v84, %v479
    %v527 = vmul.f32 %v85, %v479
    %v528 = vmul.f32 %v86, %v479
    %v529 = vmul.f32 %v471, %v479
    %v530 = vmul.f32 %v472, %v479
    %v531 = vmul.f32 %v76, %v483
    %v532 = vmul.f32 %v77, %v483
    %v533 = vmul.f32 %v78, %v483
    %v534 = vmul.f32 %v79, %v483
    %v535 = vmul.f32 %v80, %v483
    %v536 = vmul.f32 %v81, %v483
    %v537 = vmul.f32 %v82, %v483
    %v538 = vmul.f32 %v83, %v483
    %v539 = vmul.f32 %v84, %v483
    %v540 = vmul.f32 %v85, %v483
    %v541 = vmul.f32 %v86, %v483
    %v542 = vmul.f32 %v471, %v483
    %v543 = vmul.f32 %v472, %v483
    %v544 = vmul.f32 %v76, %v487
    %v545 = vmul.f32 %v77, %v487
    %v546 = vmul.f32 %v78, %v487
    %v547 = vmul.f32 %v79, %v487
    %v548 = vmul.f32 %v80, %v487
    %v549 = vmul.f32 %v81, %v487
    %v550 = vmul.f32 %v82, %v487
    %v551 = vmul.f32 %v83, %v487
    %v552 = vmul.f32 %v84, %v487
    %v553 = vmul.f32 %v85, %v487
    %v554 = vmul.f32 %v86, %v487
    %v555 = vmul.f32 %v471, %v487
    %v556 = vmul.f32 %v472, %v487
    %v557 = vmul.f32 %v76, %v491
    %v558 = vmul.f32 %v77, %v491
    %v559 = vmul.f32 %v78, %v491
    %v560 = vmul.f32 %v79, %v491
    %v561 = vmul.f32 %v80, %v491
    %v562 = vmul.f32 %v81, %v491
    %v563 = vmul.f32 %v82, %v491
    %v564 = vmul.f32 %v83, %v491
    %v565 = vmul.f32 %v84, %v491
    %v566 = vmul.f32 %v85, %v491
    %v567 = vmul.f32 %v86, %v491
    %v568 = vmul.f32 %v471, %v491
    %v569 = vmul.f32 %v472, %v491
    %v570 = vmul.f32 %v76, %v495
    %v571 = vmul.f32 %v77, %v495
    %v572 = vmul.f32 %v78, %v495
    %v573 = vmul.f32 %v79, %v495
    %v574 = vmul.f32 %v80, %v495
    %v575 = vmul.f32 %v81, %v495
    %v576 = vmul.f32 %v82, %v495
    %v577 = vmul.f32 %v83, %v495
    %v578 = vmul.f32 %v84, %v495
    %v579 = vmul.f32 %v85, %v495
    %v580 = vmul.f32 %v86, %v495
    %v581 = vmul.f32 %v471, %v495
    %v582 = vmul.f32 %v472, %v495
    %v583 = vmul.f32 %v76, %v499
    %v584 = vmul.f32 %v77, %v499
    %v585 = vmul.f32 %v78, %v499
    %v586 = vmul.f32 %v79, %v499
    %v587 = vmul.f32 %v80, %v499
    %v588 = vmul.f32 %v81, %v499
    %v589 = vmul.f32 %v82, %v499
    %v590 = vmul.f32 %v83, %v499
    %v591 = vmul.f32 %v84, %v499
    %v592 = vmul.f32 %v85, %v499
    %v593 = vmul.f32 %v86, %v499
    %v594 = vmul.f32 %v471, %v499
    %v595 = vmul.f32 %v472, %v499
    %v596 = vmul.f32 %v76, %v503
    %v597 = vmul.f32 %v77, %v503
    %v598 = vmul.f32 %v78, %v503
    %v599 = vmul.f32 %v79, %v503
    %v600 = vmul.f32 %v80, %v503
    %v601 = vmul.f32 %v81, %v503
    %v602 = vmul.f32 %v82, %v503
    %v603 = vmul.f32 %v83, %v503
    %v604 = vmul.f32 %v84, %v503
    %v605 = vmul.f32 %v85, %v503
    %v606 = vmul.f32 %v86, %v503
    %v607 = vmul.f32 %v471, %v503
    %v608 = vmul.f32 %v472, %v503
    %v609 = vadd.f32 %v367, %v505
    %v610 = vadd.f32 %v368, %v506
    %v611 = vadd.f32 %v369, %v507
    %v612 = vadd.f32 %v370, %v508
    %v613 = vadd.f32 %v371, %v509
    %v614 = vadd.f32 %v372, %v510
    %v615 = vadd.f32 %v373, %v511
    %v616 = vadd.f32 %v374, %v512
    %v617 = vadd.f32 %v375, %v513
    %v618 = vadd.f32 %v376, %v514
    %v619 = vadd.f32 %v377, %v515
    %v620 = vadd.f32 %v378, %v516
    %v621 = vadd.f32 %v379, %v517
    %v622 = vadd.f32 %v380, %v518
    %v623 = vadd.f32 %v381, %v519
    %v624 = vadd.f32 %v382, %v520
    %v625 = vadd.f32 %v383, %v521
    %v626 = vadd.f32 %v384, %v522
    %v627 = vadd.f32 %v385, %v523
    %v628 = vadd.f32 %v386, %v524
    %v629 = vadd.f32 %v387, %v525
    %v630 = vadd.f32 %v388, %v526
    %v631 = vadd.f32 %v389, %v527
    %v632 = vadd.f32 %v390, %v528
    %v633 = vadd.f32 %v391, %v529
    %v634 = vadd.f32 %v392, %v530
    %v635 = vadd.f32 %v393, %v531
    %v636 = vadd.f32 %v394, %v532
    %v637 = vadd.f32 %v395, %v533
    %v638 = vadd.f32 %v396, %v534
    %v639 = vadd.f32 %v397, %v535
    %v640 = vadd.f32 %v398, %v536
    %v641 = vadd.f32 %v399, %v537
    %v642 = vadd.f32 %v400, %v538
    %v643 = vadd.f32 %v401, %v539
    %v644 = vadd.f32 %v402, %v540
    %v645 = vadd.f32 %v403, %v541
    %v646 = vadd.f32 %v404, %v542
    %v647 = vadd.f32 %v405, %v543
    %v648 = vadd.f32 %v406, %v544
    %v649 = vadd.f32 %v407, %v545
    %v650 = vadd.f32 %v408, %v546
    %v651 = vadd.f32 %v409, %v547
    %v652 = vadd.f32 %v410, %v548
    %v653 = vadd.f32 %v411, %v549
    %v654 = vadd.f32 %v412, %v550
    %v655 = vadd.f32 %v413, %v551
    %v656 = vadd.f32 %v414, %v552
    %v657 = vadd.f32 %v415, %v553
    %v658 = vadd.f32 %v416, %v554
    %v659 = vadd.f32 %v417, %v555
    %v660 = vadd.f32 %v418, %v556
    %v661 = vadd.f32 %v419, %v557
    %v662 = vadd.f32 %v420, %v558
    %v663 = vadd.f32 %v421, %v559
    %v664 = vadd.f32 %v422, %v560
    %v665 = vadd.f32 %v423, %v561
    %v666 = vadd.f32 %v424, %v562
    %v667 = vadd.f32 %v425, %v563
    %v668 = vadd.f32 %v426, %v564
    %v669 = vadd.f32 %v427, %v565
    %v670 = vadd.f32 %v428, %v566
    %v671 = vadd.f32 %v429, %v567
    %v672 = vadd.f32 %v430, %v568
    %v673 = vadd.f32 %v431, %v569
    %v674 = vadd.f32 %v432, %v570
    %v675 = vadd.f32 %v433, %v571
    %v676 = vadd.f32 %v434, %v572
    %v677 = vadd.f32 %v435, %v573
    %v678 = vadd.f32 %v436, %v574
    %v679 = vadd.f32 %v437, %v575
    %v680 = vadd.f32 %v438, %v576
    %v681 = vadd.f32 %v439, %v577
    %v682 = vadd.f32 %v440, %v578
    %v683 = vadd.f32 %v441, %v579
    %v684 = vadd.f32 %v442, %v580
    %v685 = vadd.f32 %v443, %v581
    %v686 = vadd.f32 %v444, %v582
    %v687 = vadd.f32 %v445, %v583
    %v688 = vadd.f32 %v446, %v584
    %v689 = vadd.f32 %v447, %v585
    %v690 = vadd.f32 %v448, %v586
    %v691 = vadd.f32 %v449, %v587
    %v692 = vadd.f32 %v450, %v588
    %v693 = vadd.f32 %v451, %v589
    %v694 = vadd.f32 %v452, %v590
    %v695 = vadd.f32 %v453, %v591
    %v696 = vadd.f32 %v454, %v592
    %v697 = vadd.f32 %v455, %v593
    %v698 = vadd.f32 %v456, %v594
    %v699 = vadd.f32 %v457, %v595
    %v700 = vadd.f32 %v458, %v596
    %v701 = vadd.f32 %v459, %v597
    %v702 = vadd.f32 %v460, %v598
    %v703 = vadd.f32 %v461, %v599
    %v704 = vadd.f32 %v462, %v600
    %v705 = vadd.f32 %v463, %v601
    %v706 = vadd.f32 %v464, %v602
    %v707 = vadd.f32 %v465, %v603
    %v708 = vadd.f32 %v466, %v604
    %v709 = vadd.f32 %v467, %v605
    %v710 = vadd.f32 %v468, %v606
    %v711 = vadd.f32 %v469, %v607
    %v712 = vadd.f32 %v470, %v608
    %v713 = vld [vmem:[%s2] sm:$0xff]
    %v714 = vld [vmem:[%s2 + $0x8] sm:$0xff]
    %v715 = vld [vmem:[%s2 + $0x10] sm:$0xff]
    %v716 = vld [vmem:[%s2 + $0x18] sm:$0xff]
    %v717 = vld [vmem:[%s2 + $0x20] sm:$0xff]
    %v718 = vld [vmem:[%s2 + $0x28] sm:$0xff]
    %v719 = vld [vmem:[%s2 + $0x30] sm:$0xff]
    %v720 = vld [vmem:[%s2 + $0x38] sm:$0xff]
    %722 = vset.pattern.permute.xlu0 0
    %723 = vperm.xlu0 %722, %v713
    %v724 = vpop.permute.xlu0 %723
    %727 = vset.pattern.permute.xlu0 0
    %728 = vperm.xlu0 %727, %v714
    %v729 = vpop.permute.xlu0 %728
    %732 = vset.pattern.permute.xlu0 0
    %733 = vperm.xlu0 %732, %v715
    %v734 = vpop.permute.xlu0 %733
    %737 = vset.pattern.permute.xlu0 0
    %738 = vperm.xlu0 %737, %v716
    %v739 = vpop.permute.xlu0 %738
    %742 = vset.pattern.permute.xlu0 0
    %743 = vperm.xlu0 %742, %v717
    %v744 = vpop.permute.xlu0 %743
    %747 = vset.pattern.permute.xlu0 0
    %748 = vperm.xlu0 %747, %v718
    %v749 = vpop.permute.xlu0 %748
    %752 = vset.pattern.permute.xlu0 0
    %753 = vperm.xlu0 %752, %v719
    %v754 = vpop.permute.xlu0 %753
    %757 = vset.pattern.permute.xlu0 0
    %758 = vperm.xlu0 %757, %v720
    %v759 = vpop.permute.xlu0 %758
    %v761 = vadd.f32 %v609, %v724
    %v762 = vadd.f32 %v610, %v724
    %v763 = vadd.f32 %v611, %v724
    %v764 = vadd.f32 %v612, %v724
    %v765 = vadd.f32 %v613, %v724
    %v766 = vadd.f32 %v614, %v724
    %v767 = vadd.f32 %v615, %v724
    %v768 = vadd.f32 %v616, %v724
    %v769 = vadd.f32 %v617, %v724
    %v770 = vadd.f32 %v618, %v724
    %v771 = vadd.f32 %v619, %v724
    %v772 = vadd.f32 %v620, %v724
    %v773 = vadd.f32 %v621, %v724
    %v774 = vadd.f32 %v622, %v729
    %v775 = vadd.f32 %v623, %v729
    %v776 = vadd.f32 %v624, %v729
    %v777 = vadd.f32 %v625, %v729
    %v778 = vadd.f32 %v626, %v729
    %v779 = vadd.f32 %v627, %v729
    %v780 = vadd.f32 %v628, %v729
    %v781 = vadd.f32 %v629, %v729
    %v782 = vadd.f32 %v630, %v729
    %v783 = vadd.f32 %v631, %v729
    %v784 = vadd.f32 %v632, %v729
    %v785 = vadd.f32 %v633, %v729
    %v786 = vadd.f32 %v634, %v729
    %v787 = vadd.f32 %v635, %v734
    %v788 = vadd.f32 %v636, %v734
    %v789 = vadd.f32 %v637, %v734
    %v790 = vadd.f32 %v638, %v734
    %v791 = vadd.f32 %v639, %v734
    %v792 = vadd.f32 %v640, %v734
    %v793 = vadd.f32 %v641, %v734
    %v794 = vadd.f32 %v642, %v734
    %v795 = vadd.f32 %v643, %v734
    %v796 = vadd.f32 %v644, %v734
    %v797 = vadd.f32 %v645, %v734
    %v798 = vadd.f32 %v646, %v734
    %v799 = vadd.f32 %v647, %v734
    %v800 = vadd.f32 %v648, %v739
    %v801 = vadd.f32 %v649, %v739
    %v802 = vadd.f32 %v650, %v739
    %v803 = vadd.f32 %v651, %v739
    %v804 = vadd.f32 %v652, %v739
    %v805 = vadd.f32 %v653, %v739
    %v806 = vadd.f32 %v654, %v739
    %v807 = vadd.f32 %v655, %v739
    %v808 = vadd.f32 %v656, %v739
    %v809 = vadd.f32 %v657, %v739
    %v810 = vadd.f32 %v658, %v739
    %v811 = vadd.f32 %v659, %v739
    %v812 = vadd.f32 %v660, %v739
    %v813 = vadd.f32 %v661, %v744
    %v814 = vadd.f32 %v662, %v744
    %v815 = vadd.f32 %v663, %v744
    %v816 = vadd.f32 %v664, %v744
    %v817 = vadd.f32 %v665, %v744
    %v818 = vadd.f32 %v666, %v744
    %v819 = vadd.f32 %v667, %v744
    %v820 = vadd.f32 %v668, %v744
    %v821 = vadd.f32 %v669, %v744
    %v822 = vadd.f32 %v670, %v744
    %v823 = vadd.f32 %v671, %v744
    %v824 = vadd.f32 %v672, %v744
    %v825 = vadd.f32 %v673, %v744
    %v826 = vadd.f32 %v674, %v749
    %v827 = vadd.f32 %v675, %v749
    %v828 = vadd.f32 %v676, %v749
    %v829 = vadd.f32 %v677, %v749
    %v830 = vadd.f32 %v678, %v749
    %v831 = vadd.f32 %v679, %v749
    %v832 = vadd.f32 %v680, %v749
    %v833 = vadd.f32 %v681, %v749
    %v834 = vadd.f32 %v682, %v749
    %v835 = vadd.f32 %v683, %v749
    %v836 = vadd.f32 %v684, %v749
    %v837 = vadd.f32 %v685, %v749
    %v838 = vadd.f32 %v686, %v749
    %v839 = vadd.f32 %v687, %v754
    %v840 = vadd.f32 %v688, %v754
    %v841 = vadd.f32 %v689, %v754
    %v842 = vadd.f32 %v690, %v754
    %v843 = vadd.f32 %v691, %v754
    %v844 = vadd.f32 %v692, %v754
    %v845 = vadd.f32 %v693, %v754
    %v846 = vadd.f32 %v694, %v754
    %v847 = vadd.f32 %v695, %v754
    %v848 = vadd.f32 %v696, %v754
    %v849 = vadd.f32 %v697, %v754
    %v850 = vadd.f32 %v698, %v754
    %v851 = vadd.f32 %v699, %v754
    %v852 = vadd.f32 %v700, %v759
    %v853 = vadd.f32 %v701, %v759
    %v854 = vadd.f32 %v702, %v759
    %v855 = vadd.f32 %v703, %v759
    %v856 = vadd.f32 %v704, %v759
    %v857 = vadd.f32 %v705, %v759
    %v858 = vadd.f32 %v706, %v759
    %v859 = vadd.f32 %v707, %v759
    %v860 = vadd.f32 %v708, %v759
    %v861 = vadd.f32 %v709, %v759
    %v862 = vadd.f32 %v710, %v759
    %v863 = vadd.f32 %v711, %v759
    %v864 = vadd.f32 %v712, %v759
    %v865 = vmax.f32 %v761, 0.0
    %v866 = vmax.f32 %v762, 0.0
    %v867 = vmax.f32 %v763, 0.0
    %v868 = vmax.f32 %v764, 0.0
    %v869 = vmax.f32 %v765, 0.0
    %v870 = vmax.f32 %v766, 0.0
    %v871 = vmax.f32 %v767, 0.0
    %v872 = vmax.f32 %v768, 0.0
    %v873 = vmax.f32 %v769, 0.0
    %v874 = vmax.f32 %v770, 0.0
    %v875 = vmax.f32 %v771, 0.0
    %v876 = vmax.f32 %v772, 0.0
    %v877 = vmax.f32 %v773, 0.0
    %v878 = vmax.f32 %v774, 0.0
    %v879 = vmax.f32 %v775, 0.0
    %v880 = vmax.f32 %v776, 0.0
    %v881 = vmax.f32 %v777, 0.0
    %v882 = vmax.f32 %v778, 0.0
    %v883 = vmax.f32 %v779, 0.0
    %v884 = vmax.f32 %v780, 0.0
    %v885 = vmax.f32 %v781, 0.0
    %v886 = vmax.f32 %v782, 0.0
    %v887 = vmax.f32 %v783, 0.0
    %v888 = vmax.f32 %v784, 0.0
    %v889 = vmax.f32 %v785, 0.0
    %v890 = vmax.f32 %v786, 0.0
    %v891 = vmax.f32 %v787, 0.0
    %v892 = vmax.f32 %v788, 0.0
    %v893 = vmax.f32 %v789, 0.0
    %v894 = vmax.f32 %v790, 0.0
    %v895 = vmax.f32 %v791, 0.0
    %v896 = vmax.f32 %v792, 0.0
    %v897 = vmax.f32 %v793, 0.0
    %v898 = vmax.f32 %v794, 0.0
    %v899 = vmax.f32 %v795, 0.0
    %v900 = vmax.f32 %v796, 0.0
    %v901 = vmax.f32 %v797, 0.0
    %v902 = vmax.f32 %v798, 0.0
    %v903 = vmax.f32 %v799, 0.0
    %v904 = vmax.f32 %v800, 0.0
    %v905 = vmax.f32 %v801, 0.0
    %v906 = vmax.f32 %v802, 0.0
    %v907 = vmax.f32 %v803, 0.0
    %v908 = vmax.f32 %v804, 0.0
    %v909 = vmax.f32 %v805, 0.0
    %v910 = vmax.f32 %v806, 0.0
    %v911 = vmax.f32 %v807, 0.0
    %v912 = vmax.f32 %v808, 0.0
    %v913 = vmax.f32 %v809, 0.0
    %v914 = vmax.f32 %v810, 0.0
    %v915 = vmax.f32 %v811, 0.0
    %v916 = vmax.f32 %v812, 0.0
    %v917 = vmax.f32 %v813, 0.0
    %v918 = vmax.f32 %v814, 0.0
    %v919 = vmax.f32 %v815, 0.0
    %v920 = vmax.f32 %v816, 0.0
    %v921 = vmax.f32 %v817, 0.0
    %v922 = vmax.f32 %v818, 0.0
    %v923 = vmax.f32 %v819, 0.0
    %v924 = vmax.f32 %v820, 0.0
    %v925 = vmax.f32 %v821, 0.0
    %v926 = vmax.f32 %v822, 0.0
    %v927 = vmax.f32 %v823, 0.0
    %v928 = vmax.f32 %v824, 0.0
    %v929 = vmax.f32 %v825, 0.0
    %v930 = vmax.f32 %v826, 0.0
    %v931 = vmax.f32 %v827, 0.0
    %v932 = vmax.f32 %v828, 0.0
    %v933 = vmax.f32 %v829, 0.0
    %v934 = vmax.f32 %v830, 0.0
    %v935 = vmax.f32 %v831, 0.0
    %v936 = vmax.f32 %v832, 0.0
    %v937 = vmax.f32 %v833, 0.0
    %v938 = vmax.f32 %v834, 0.0
    %v939 = vmax.f32 %v835, 0.0
    %v940 = vmax.f32 %v836, 0.0
    %v941 = vmax.f32 %v837, 0.0
    %v942 = vmax.f32 %v838, 0.0
    %v943 = vmax.f32 %v839, 0.0
    %v944 = vmax.f32 %v840, 0.0
    %v945 = vmax.f32 %v841, 0.0
    %v946 = vmax.f32 %v842, 0.0
    %v947 = vmax.f32 %v843, 0.0
    %v948 = vmax.f32 %v844, 0.0
    %v949 = vmax.f32 %v845, 0.0
    %v950 = vmax.f32 %v846, 0.0
    %v951 = vmax.f32 %v847, 0.0
    %v952 = vmax.f32 %v848, 0.0
    %v953 = vmax.f32 %v849, 0.0
    %v954 = vmax.f32 %v850, 0.0
    %v955 = vmax.f32 %v851, 0.0
    %v956 = vmax.f32 %v852, 0.0
    %v957 = vmax.f32 %v853, 0.0
    %v958 = vmax.f32 %v854, 0.0
    %v959 = vmax.f32 %v855, 0.0
    %v960 = vmax.f32 %v856, 0.0
    %v961 = vmax.f32 %v857, 0.0
    %v962 = vmax.f32 %v858, 0.0
    %v963 = vmax.f32 %v859, 0.0
    %v964 = vmax.f32 %v860, 0.0
    %v965 = vmax.f32 %v861, 0.0
    %v966 = vmax.f32 %v862, 0.0
    %v967 = vmax.f32 %v863, 0.0
    %v968 = vmax.f32 %v864, 0.0
    %v969 = vld [vmem:[%s3] sm:$0xff]
    %v970 = vld [vmem:[%s3 + $0x8] sm:$0xff]
    %v971 = vld [vmem:[%s3 + $0x10] sm:$0xff]
    %v972 = vld [vmem:[%s3 + $0x18] sm:$0xff]
    %v973 = vld [vmem:[%s3 + $0x20] sm:$0xff]
    %v974 = vld [vmem:[%s3 + $0x28] sm:$0xff]
    %v975 = vld [vmem:[%s3 + $0x30] sm:$0xff]
    %v976 = vld [vmem:[%s3 + $0x38] sm:$0xff]
    %978 = vset.pattern.permute.xlu0 0
    %979 = vperm.xlu0 %978, %v969
    %v980 = vpop.permute.xlu0 %979
    %983 = vset.pattern.permute.xlu0 0
    %984 = vperm.xlu0 %983, %v970
    %v985 = vpop.permute.xlu0 %984
    %988 = vset.pattern.permute.xlu0 0
    %989 = vperm.xlu0 %988, %v971
    %v990 = vpop.permute.xlu0 %989
    %993 = vset.pattern.permute.xlu0 0
    %994 = vperm.xlu0 %993, %v972
    %v995 = vpop.permute.xlu0 %994
    %998 = vset.pattern.permute.xlu0 0
    %999 = vperm.xlu0 %998, %v973
    %v1000 = vpop.permute.xlu0 %999
    %1003 = vset.pattern.permute.xlu0 0
    %1004 = vperm.xlu0 %1003, %v974
    %v1005 = vpop.permute.xlu0 %1004
    %1008 = vset.pattern.permute.xlu0 0
    %1009 = vperm.xlu0 %1008, %v975
    %v1010 = vpop.permute.xlu0 %1009
    %1013 = vset.pattern.permute.xlu0 0
    %1014 = vperm.xlu0 %1013, %v976
    %v1015 = vpop.permute.xlu0 %1014
    %v1017 = vmul.f32 %v865, %v980
    %v1018 = vmul.f32 %v866, %v980
    %v1019 = vmul.f32 %v867, %v980
    %v1020 = vmul.f32 %v868, %v980
    %v1021 = vmul.f32 %v869, %v980
    %v1022 = vmul.f32 %v870, %v980
    %v1023 = vmul.f32 %v871, %v980
    %v1024 = vmul.f32 %v872, %v980
    %v1025 = vmul.f32 %v873, %v980
    %v1026 = vmul.f32 %v874, %v980
    %v1027 = vmul.f32 %v875, %v980
    %v1028 = vmul.f32 %v876, %v980
    %v1029 = vmul.f32 %v877, %v980
    %v1030 = vmul.f32 %v878, %v985
    %v1031 = vmul.f32 %v879, %v985
    %v1032 = vmul.f32 %v880, %v985
    %v1033 = vmul.f32 %v881, %v985
    %v1034 = vmul.f32 %v882, %v985
    %v1035 = vmul.f32 %v883, %v985
    %v1036 = vmul.f32 %v884, %v985
    %v1037 = vmul.f32 %v885, %v985
    %v1038 = vmul.f32 %v886, %v985
    %v1039 = vmul.f32 %v887, %v985
    %v1040 = vmul.f32 %v888, %v985
    %v1041 = vmul.f32 %v889, %v985
    %v1042 = vmul.f32 %v890, %v985
    %v1043 = vmul.f32 %v891, %v990
    %v1044 = vmul.f32 %v892, %v990
    %v1045 = vmul.f32 %v893, %v990
    %v1046 = vmul.f32 %v894, %v990
    %v1047 = vmul.f32 %v895, %v990
    %v1048 = vmul.f32 %v896, %v990
    %v1049 = vmul.f32 %v897, %v990
    %v1050 = vmul.f32 %v898, %v990
    %v1051 = vmul.f32 %v899, %v990
    %v1052 = vmul.f32 %v900, %v990
    %v1053 = vmul.f32 %v901, %v990
    %v1054 = vmul.f32 %v902, %v990
    %v1055 = vmul.f32 %v903, %v990
    %v1056 = vmul.f32 %v904, %v995
    %v1057 = vmul.f32 %v905, %v995
    %v1058 = vmul.f32 %v906, %v995
    %v1059 = vmul.f32 %v907, %v995
    %v1060 = vmul.f32 %v908, %v995
    %v1061 = vmul.f32 %v909, %v995
    %v1062 = vmul.f32 %v910, %v995
    %v1063 = vmul.f32 %v911, %v995
    %v1064 = vmul.f32 %v912, %v995
    %v1065 = vmul.f32 %v913, %v995
    %v1066 = vmul.f32 %v914, %v995
    %v1067 = vmul.f32 %v915, %v995
    %v1068 = vmul.f32 %v916, %v995
    %v1069 = vmul.f32 %v917, %v1000
    %v1070 = vmul.f32 %v918, %v1000
    %v1071 = vmul.f32 %v919, %v1000
    %v1072 = vmul.f32 %v920, %v1000
    %v1073 = vmul.f32 %v921, %v1000
    %v1074 = vmul.f32 %v922, %v1000
    %v1075 = vmul.f32 %v923, %v1000
    %v1076 = vmul.f32 %v924, %v1000
    %v1077 = vmul.f32 %v925, %v1000
    %v1078 = vmul.f32 %v926, %v1000
    %v1079 = vmul.f32 %v927, %v1000
    %v1080 = vmul.f32 %v928, %v1000
    %v1081 = vmul.f32 %v929, %v1000
    %v1082 = vmul.f32 %v930, %v1005
    %v1083 = vmul.f32 %v931, %v1005
    %v1084 = vmul.f32 %v932, %v1005
    %v1085 = vmul.f32 %v933, %v1005
    %v1086 = vmul.f32 %v934, %v1005
    %v1087 = vmul.f32 %v935, %v1005
    %v1088 = vmul.f32 %v936, %v1005
    %v1089 = vmul.f32 %v937, %v1005
    %v1090 = vmul.f32 %v938, %v1005
    %v1091 = vmul.f32 %v939, %v1005
    %v1092 = vmul.f32 %v940, %v1005
    %v1093 = vmul.f32 %v941, %v1005
    %v1094 = vmul.f32 %v942, %v1005
    %v1095 = vmul.f32 %v943, %v1010
    %v1096 = vmul.f32 %v944, %v1010
    %v1097 = vmul.f32 %v945, %v1010
    %v1098 = vmul.f32 %v946, %v1010
    %v1099 = vmul.f32 %v947, %v1010
    %v1100 = vmul.f32 %v948, %v1010
    %v1101 = vmul.f32 %v949, %v1010
    %v1102 = vmul.f32 %v950, %v1010
    %v1103 = vmul.f32 %v951, %v1010
    %v1104 = vmul.f32 %v952, %v1010
    %v1105 = vmul.f32 %v953, %v1010
    %v1106 = vmul.f32 %v954, %v1010
    %v1107 = vmul.f32 %v955, %v1010
    %v1108 = vmul.f32 %v956, %v1015
    %v1109 = vmul.f32 %v957, %v1015
    %v1110 = vmul.f32 %v958, %v1015
    %v1111 = vmul.f32 %v959, %v1015
    %v1112 = vmul.f32 %v960, %v1015
    %v1113 = vmul.f32 %v961, %v1015
    %v1114 = vmul.f32 %v962, %v1015
    %v1115 = vmul.f32 %v963, %v1015
    %v1116 = vmul.f32 %v964, %v1015
    %v1117 = vmul.f32 %v965, %v1015
    %v1118 = vmul.f32 %v966, %v1015
    %v1119 = vmul.f32 %v967, %v1015
    %v1120 = vmul.f32 %v968, %v1015
    %v1121 = vld [vmem:[%s4] sm:$0xff]
    %v1122 = vld [vmem:[%s4 + $0x8] sm:$0xff]
    %v1123 = vld [vmem:[%s4 + $0x10] sm:$0xff]
    %v1124 = vld [vmem:[%s4 + $0x18] sm:$0xff]
    %v1125 = vld [vmem:[%s4 + $0x20] sm:$0xff]
    %v1126 = vld [vmem:[%s4 + $0x28] sm:$0xff]
    %v1127 = vld [vmem:[%s4 + $0x30] sm:$0xff]
    %v1128 = vld [vmem:[%s4 + $0x38] sm:$0xff]
    %1130 = vset.pattern.permute.xlu0 0
    %1131 = vperm.xlu0 %1130, %v1121
    %v1132 = vpop.permute.xlu0 %1131
    %1135 = vset.pattern.permute.xlu0 0
    %1136 = vperm.xlu0 %1135, %v1122
    %v1137 = vpop.permute.xlu0 %1136
    %1140 = vset.pattern.permute.xlu0 0
    %1141 = vperm.xlu0 %1140, %v1123
    %v1142 = vpop.permute.xlu0 %1141
    %1145 = vset.pattern.permute.xlu0 0
    %1146 = vperm.xlu0 %1145, %v1124
    %v1147 = vpop.permute.xlu0 %1146
    %1150 = vset.pattern.permute.xlu0 0
    %1151 = vperm.xlu0 %1150, %v1125
    %v1152 = vpop.permute.xlu0 %1151
    %1155 = vset.pattern.permute.xlu0 0
    %1156 = vperm.xlu0 %1155, %v1126
    %v1157 = vpop.permute.xlu0 %1156
    %1160 = vset.pattern.permute.xlu0 0
    %1161 = vperm.xlu0 %1160, %v1127
    %v1162 = vpop.permute.xlu0 %1161
    %1165 = vset.pattern.permute.xlu0 0
    %1166 = vperm.xlu0 %1165, %v1128
    %v1167 = vpop.permute.xlu0 %1166
    %v1169 = vadd.f32 %v1017, %v1132
    %v1170 = vadd.f32 %v1018, %v1132
    %v1171 = vadd.f32 %v1019, %v1132
    %v1172 = vadd.f32 %v1020, %v1132
    %v1173 = vadd.f32 %v1021, %v1132
    %v1174 = vadd.f32 %v1022, %v1132
    %v1175 = vadd.f32 %v1023, %v1132
    %v1176 = vadd.f32 %v1024, %v1132
    %v1177 = vadd.f32 %v1025, %v1132
    %v1178 = vadd.f32 %v1026, %v1132
    %v1179 = vadd.f32 %v1027, %v1132
    %v1180 = vadd.f32 %v1028, %v1132
    %v1181 = vadd.f32 %v1029, %v1132
    %v1182 = vadd.f32 %v1030, %v1137
    %v1183 = vadd.f32 %v1031, %v1137
    %v1184 = vadd.f32 %v1032, %v1137
    %v1185 = vadd.f32 %v1033, %v1137
    %v1186 = vadd.f32 %v1034, %v1137
    %v1187 = vadd.f32 %v1035, %v1137
    %v1188 = vadd.f32 %v1036, %v1137
    %v1189 = vadd.f32 %v1037, %v1137
    %v1190 = vadd.f32 %v1038, %v1137
    %v1191 = vadd.f32 %v1039, %v1137
    %v1192 = vadd.f32 %v1040, %v1137
    %v1193 = vadd.f32 %v1041, %v1137
    %v1194 = vadd.f32 %v1042, %v1137
    %v1195 = vadd.f32 %v1043, %v1142
    %v1196 = vadd.f32 %v1044, %v1142
    %v1197 = vadd.f32 %v1045, %v1142
    %v1198 = vadd.f32 %v1046, %v1142
    %v1199 = vadd.f32 %v1047, %v1142
    %v1200 = vadd.f32 %v1048, %v1142
    %v1201 = vadd.f32 %v1049, %v1142
    %v1202 = vadd.f32 %v1050, %v1142
    %v1203 = vadd.f32 %v1051, %v1142
    %v1204 = vadd.f32 %v1052, %v1142
    %v1205 = vadd.f32 %v1053, %v1142
    %v1206 = vadd.f32 %v1054, %v1142
    %v1207 = vadd.f32 %v1055, %v1142
    %v1208 = vadd.f32 %v1056, %v1147
    %v1209 = vadd.f32 %v1057, %v1147
    %v1210 = vadd.f32 %v1058, %v1147
    %v1211 = vadd.f32 %v1059, %v1147
    %v1212 = vadd.f32 %v1060, %v1147
    %v1213 = vadd.f32 %v1061, %v1147
    %v1214 = vadd.f32 %v1062, %v1147
    %v1215 = vadd.f32 %v1063, %v1147
    %v1216 = vadd.f32 %v1064, %v1147
    %v1217 = vadd.f32 %v1065, %v1147
    %v1218 = vadd.f32 %v1066, %v1147
    %v1219 = vadd.f32 %v1067, %v1147
    %v1220 = vadd.f32 %v1068, %v1147
    %v1221 = vadd.f32 %v1069, %v1152
    %v1222 = vadd.f32 %v1070, %v1152
    %v1223 = vadd.f32 %v1071, %v1152
    %v1224 = vadd.f32 %v1072, %v1152
    %v1225 = vadd.f32 %v1073, %v1152
    %v1226 = vadd.f32 %v1074, %v1152
    %v1227 = vadd.f32 %v1075, %v1152
    %v1228 = vadd.f32 %v1076, %v1152
    %v1229 = vadd.f32 %v1077, %v1152
    %v1230 = vadd.f32 %v1078, %v1152
    %v1231 = vadd.f32 %v1079, %v1152
    %v1232 = vadd.f32 %v1080, %v1152
    %v1233 = vadd.f32 %v1081, %v1152
    %v1234 = vadd.f32 %v1082, %v1157
    %v1235 = vadd.f32 %v1083, %v1157
    %v1236 = vadd.f32 %v1084, %v1157
    %v1237 = vadd.f32 %v1085, %v1157
    %v1238 = vadd.f32 %v1086, %v1157
    %v1239 = vadd.f32 %v1087, %v1157
    %v1240 = vadd.f32 %v1088, %v1157
    %v1241 = vadd.f32 %v1089, %v1157
    %v1242 = vadd.f32 %v1090, %v1157
    %v1243 = vadd.f32 %v1091, %v1157
    %v1244 = vadd.f32 %v1092, %v1157
    %v1245 = vadd.f32 %v1093, %v1157
    %v1246 = vadd.f32 %v1094, %v1157
    %v1247 = vadd.f32 %v1095, %v1162
    %v1248 = vadd.f32 %v1096, %v1162
    %v1249 = vadd.f32 %v1097, %v1162
    %v1250 = vadd.f32 %v1098, %v1162
    %v1251 = vadd.f32 %v1099, %v1162
    %v1252 = vadd.f32 %v1100, %v1162
    %v1253 = vadd.f32 %v1101, %v1162
    %v1254 = vadd.f32 %v1102, %v1162
    %v1255 = vadd.f32 %v1103, %v1162
    %v1256 = vadd.f32 %v1104, %v1162
    %v1257 = vadd.f32 %v1105, %v1162
    %v1258 = vadd.f32 %v1106, %v1162
    %v1259 = vadd.f32 %v1107, %v1162
    %v1260 = vadd.f32 %v1108, %v1167
    %v1261 = vadd.f32 %v1109, %v1167
    %v1262 = vadd.f32 %v1110, %v1167
    %v1263 = vadd.f32 %v1111, %v1167
    %v1264 = vadd.f32 %v1112, %v1167
    %v1265 = vadd.f32 %v1113, %v1167
    %v1266 = vadd.f32 %v1114, %v1167
    %v1267 = vadd.f32 %v1115, %v1167
    %v1268 = vadd.f32 %v1116, %v1167
    %v1269 = vadd.f32 %v1117, %v1167
    %v1270 = vadd.f32 %v1118, %v1167
    %v1271 = vadd.f32 %v1119, %v1167
    %v1272 = vadd.f32 %v1120, %v1167
    %v1273 = vpack.c.bf16 %v1170, %v1169
    %v1274 = vpack.c.bf16 %v1172, %v1171
    %v1275 = vpack.c.bf16 %v1174, %v1173
    %v1276 = vpack.c.bf16 %v1176, %v1175
    %v1277 = vpack.c.bf16 %v1178, %v1177
    %v1278 = vpack.c.bf16 %v1180, %v1179
    %v1279 = vpack.c.bf16 0.0, %v1181
    %v1280 = vpack.c.bf16 %v1183, %v1182
    %v1281 = vpack.c.bf16 %v1185, %v1184
    %v1282 = vpack.c.bf16 %v1187, %v1186
    %v1283 = vpack.c.bf16 %v1189, %v1188
    %v1284 = vpack.c.bf16 %v1191, %v1190
    %v1285 = vpack.c.bf16 %v1193, %v1192
    %v1286 = vpack.c.bf16 0.0, %v1194
    %v1287 = vpack.c.bf16 %v1196, %v1195
    %v1288 = vpack.c.bf16 %v1198, %v1197
    %v1289 = vpack.c.bf16 %v1200, %v1199
    %v1290 = vpack.c.bf16 %v1202, %v1201
    %v1291 = vpack.c.bf16 %v1204, %v1203
    %v1292 = vpack.c.bf16 %v1206, %v1205
    %v1293 = vpack.c.bf16 0.0, %v1207
    %v1294 = vpack.c.bf16 %v1209, %v1208
    %v1295 = vpack.c.bf16 %v1211, %v1210
    %v1296 = vpack.c.bf16 %v1213, %v1212
    %v1297 = vpack.c.bf16 %v1215, %v1214
    %v1298 = vpack.c.bf16 %v1217, %v1216
    %v1299 = vpack.c.bf16 %v1219, %v1218
    %v1300 = vpack.c.bf16 0.0, %v1220
    %v1301 = vpack.c.bf16 %v1222, %v1221
    %v1302 = vpack.c.bf16 %v1224, %v1223
    %v1303 = vpack.c.bf16 %v1226, %v1225
    %v1304 = vpack.c.bf16 %v1228, %v1227
    %v1305 = vpack.c.bf16 %v1230, %v1229
    %v1306 = vpack.c.bf16 %v1232, %v1231
    %v1307 = vpack.c.bf16 0.0, %v1233
    %v1308 = vpack.c.bf16 %v1235, %v1234
    %v1309 = vpack.c.bf16 %v1237, %v1236
    %v1310 = vpack.c.bf16 %v1239, %v1238
    %v1311 = vpack.c.bf16 %v1241, %v1240
    %v1312 = vpack.c.bf16 %v1243, %v1242
    %v1313 = vpack.c.bf16 %v1245, %v1244
    %v1314 = vpack.c.bf16 0.0, %v1246
    %v1315 = vpack.c.bf16 %v1248, %v1247
    %v1316 = vpack.c.bf16 %v1250, %v1249
    %v1317 = vpack.c.bf16 %v1252, %v1251
    %v1318 = vpack.c.bf16 %v1254, %v1253
    %v1319 = vpack.c.bf16 %v1256, %v1255
    %v1320 = vpack.c.bf16 %v1258, %v1257
    %v1321 = vpack.c.bf16 0.0, %v1259
    %v1322 = vpack.c.bf16 %v1261, %v1260
    %v1323 = vpack.c.bf16 %v1263, %v1262
    %v1324 = vpack.c.bf16 %v1265, %v1264
    %v1325 = vpack.c.bf16 %v1267, %v1266
    %v1326 = vpack.c.bf16 %v1269, %v1268
    %v1327 = vpack.c.bf16 %v1271, %v1270
    %v1328 = vpack.c.bf16 0.0, %v1272
    %v1377 = vunpack.c.l.b16 %v1273
    %v1378 = vunpack.c.h.b16 %v1273
    %v1379 = vunpack.c.l.b16 %v1274
    %v1380 = vunpack.c.h.b16 %v1274
    %v1381 = vunpack.c.l.b16 %v1275
    %v1382 = vunpack.c.h.b16 %v1275
    %v1383 = vunpack.c.l.b16 %v1276
    %v1384 = vunpack.c.h.b16 %v1276
    %v1385 = vunpack.c.l.b16 %v1277
    %v1386 = vunpack.c.h.b16 %v1277
    %v1387 = vunpack.c.l.b16 %v1278
    %v1388 = vunpack.c.h.b16 %v1278
    %v1389 = vunpack.c.l.b16 %v1280
    %v1390 = vunpack.c.h.b16 %v1280
    %v1391 = vunpack.c.l.b16 %v1281
    %v1392 = vunpack.c.h.b16 %v1281
    %v1393 = vunpack.c.l.b16 %v1282
    %v1394 = vunpack.c.h.b16 %v1282
    %v1395 = vunpack.c.l.b16 %v1283
    %v1396 = vunpack.c.h.b16 %v1283
    %v1397 = vunpack.c.l.b16 %v1284
    %v1398 = vunpack.c.h.b16 %v1284
    %v1399 = vunpack.c.l.b16 %v1285
    %v1400 = vunpack.c.h.b16 %v1285
    %v1401 = vunpack.c.l.b16 %v1287
    %v1402 = vunpack.c.h.b16 %v1287
    %v1403 = vunpack.c.l.b16 %v1288
    %v1404 = vunpack.c.h.b16 %v1288
    %v1405 = vunpack.c.l.b16 %v1289
    %v1406 = vunpack.c.h.b16 %v1289
    %v1407 = vunpack.c.l.b16 %v1290
    %v1408 = vunpack.c.h.b16 %v1290
    %v1409 = vunpack.c.l.b16 %v1291
    %v1410 = vunpack.c.h.b16 %v1291
    %v1411 = vunpack.c.l.b16 %v1292
    %v1412 = vunpack.c.h.b16 %v1292
    %v1413 = vunpack.c.l.b16 %v1294
    %v1414 = vunpack.c.h.b16 %v1294
    %v1415 = vunpack.c.l.b16 %v1295
    %v1416 = vunpack.c.h.b16 %v1295
    %v1417 = vunpack.c.l.b16 %v1296
    %v1418 = vunpack.c.h.b16 %v1296
    %v1419 = vunpack.c.l.b16 %v1297
    %v1420 = vunpack.c.h.b16 %v1297
    %v1421 = vunpack.c.l.b16 %v1298
    %v1422 = vunpack.c.h.b16 %v1298
    %v1423 = vunpack.c.l.b16 %v1299
    %v1424 = vunpack.c.h.b16 %v1299
    %v1425 = vunpack.c.l.b16 %v1301
    %v1426 = vunpack.c.h.b16 %v1301
    %v1427 = vunpack.c.l.b16 %v1302
    %v1428 = vunpack.c.h.b16 %v1302
    %v1429 = vunpack.c.l.b16 %v1303
    %v1430 = vunpack.c.h.b16 %v1303
    %v1431 = vunpack.c.l.b16 %v1304
    %v1432 = vunpack.c.h.b16 %v1304
    %v1433 = vunpack.c.l.b16 %v1305
    %v1434 = vunpack.c.h.b16 %v1305
    %v1435 = vunpack.c.l.b16 %v1306
    %v1436 = vunpack.c.h.b16 %v1306
    %v1437 = vunpack.c.l.b16 %v1308
    %v1438 = vunpack.c.h.b16 %v1308
    %v1439 = vunpack.c.l.b16 %v1309
    %v1440 = vunpack.c.h.b16 %v1309
    %v1441 = vunpack.c.l.b16 %v1310
    %v1442 = vunpack.c.h.b16 %v1310
    %v1443 = vunpack.c.l.b16 %v1311
    %v1444 = vunpack.c.h.b16 %v1311
    %v1445 = vunpack.c.l.b16 %v1312
    %v1446 = vunpack.c.h.b16 %v1312
    %v1447 = vunpack.c.l.b16 %v1313
    %v1448 = vunpack.c.h.b16 %v1313
    %v1449 = vunpack.c.l.b16 %v1315
    %v1450 = vunpack.c.h.b16 %v1315
    %v1451 = vunpack.c.l.b16 %v1316
    %v1452 = vunpack.c.h.b16 %v1316
    %v1453 = vunpack.c.l.b16 %v1317
    %v1454 = vunpack.c.h.b16 %v1317
    %v1455 = vunpack.c.l.b16 %v1318
    %v1456 = vunpack.c.h.b16 %v1318
    %v1457 = vunpack.c.l.b16 %v1319
    %v1458 = vunpack.c.h.b16 %v1319
    %v1459 = vunpack.c.l.b16 %v1320
    %v1460 = vunpack.c.h.b16 %v1320
    %v1461 = vunpack.c.l.b16 %v1322
    %v1462 = vunpack.c.h.b16 %v1322
    %v1463 = vunpack.c.l.b16 %v1323
    %v1464 = vunpack.c.h.b16 %v1323
    %v1465 = vunpack.c.l.b16 %v1324
    %v1466 = vunpack.c.h.b16 %v1324
    %v1467 = vunpack.c.l.b16 %v1325
    %v1468 = vunpack.c.h.b16 %v1325
    %v1469 = vunpack.c.l.b16 %v1326
    %v1470 = vunpack.c.h.b16 %v1326
    %v1471 = vunpack.c.l.b16 %v1327
    %v1472 = vunpack.c.h.b16 %v1327
    %v1473 = vpack.c.b16 %v1389, %v1377
    %v1474 = vpack.c.b16 %v1390, %v1378
    %v1475 = vpack.c.b16 %v1391, %v1379
    %v1476 = vpack.c.b16 %v1392, %v1380
    %v1477 = vpack.c.b16 %v1393, %v1381
    %v1478 = vpack.c.b16 %v1394, %v1382
    %v1479 = vpack.c.b16 %v1395, %v1383
    %v1480 = vpack.c.b16 %v1396, %v1384
    %v1481 = vpack.c.b16 %v1397, %v1385
    %v1482 = vpack.c.b16 %v1398, %v1386
    %v1483 = vpack.c.b16 %v1399, %v1387
    %v1484 = vpack.c.b16 %v1400, %v1388
    %v1485 = vpack.c.b16 %v1413, %v1401
    %v1486 = vpack.c.b16 %v1414, %v1402
    %v1487 = vpack.c.b16 %v1415, %v1403
    %v1488 = vpack.c.b16 %v1416, %v1404
    %v1489 = vpack.c.b16 %v1417, %v1405
    %v1490 = vpack.c.b16 %v1418, %v1406
    %v1491 = vpack.c.b16 %v1419, %v1407
    %v1492 = vpack.c.b16 %v1420, %v1408
    %v1493 = vpack.c.b16 %v1421, %v1409
    %v1494 = vpack.c.b16 %v1422, %v1410
    %v1495 = vpack.c.b16 %v1423, %v1411
    %v1496 = vpack.c.b16 %v1424, %v1412
    %v1497 = vpack.c.b16 %v1437, %v1425
    %v1498 = vpack.c.b16 %v1438, %v1426
    %v1499 = vpack.c.b16 %v1439, %v1427
    %v1500 = vpack.c.b16 %v1440, %v1428
    %v1501 = vpack.c.b16 %v1441, %v1429
    %v1502 = vpack.c.b16 %v1442, %v1430
    %v1503 = vpack.c.b16 %v1443, %v1431
    %v1504 = vpack.c.b16 %v1444, %v1432
    %v1505 = vpack.c.b16 %v1445, %v1433
    %v1506 = vpack.c.b16 %v1446, %v1434
    %v1507 = vpack.c.b16 %v1447, %v1435
    %v1508 = vpack.c.b16 %v1448, %v1436
    %v1509 = vpack.c.b16 %v1461, %v1449
    %v1510 = vpack.c.b16 %v1462, %v1450
    %v1511 = vpack.c.b16 %v1463, %v1451
    %v1512 = vpack.c.b16 %v1464, %v1452
    %v1513 = vpack.c.b16 %v1465, %v1453
    %v1514 = vpack.c.b16 %v1466, %v1454
    %v1515 = vpack.c.b16 %v1467, %v1455
    %v1516 = vpack.c.b16 %v1468, %v1456
    %v1517 = vpack.c.b16 %v1469, %v1457
    %v1518 = vpack.c.b16 %v1470, %v1458
    %v1519 = vpack.c.b16 %v1471, %v1459
    %v1520 = vpack.c.b16 %v1472, %v1460
    %v1577 = vunpack.c.l.b16 %v1279
    %v1578 = vunpack.c.h.b16 %v1279
    %v1579 = vunpack.c.l.b16 %v1286
    %v1580 = vunpack.c.h.b16 %v1286
    %v1581 = vunpack.c.l.b16 %v1293
    %v1582 = vunpack.c.h.b16 %v1293
    %v1583 = vunpack.c.l.b16 %v1300
    %v1584 = vunpack.c.h.b16 %v1300
    %v1585 = vunpack.c.l.b16 %v1307
    %v1586 = vunpack.c.h.b16 %v1307
    %v1587 = vunpack.c.l.b16 %v1314
    %v1588 = vunpack.c.h.b16 %v1314
    %v1589 = vunpack.c.l.b16 %v1321
    %v1590 = vunpack.c.h.b16 %v1321
    %v1591 = vunpack.c.l.b16 %v1328
    %v1592 = vunpack.c.h.b16 %v1328
    %v1593 = vpack.c.b16 %v1579, %v1577
    %v1594 = vpack.c.b16 %v1580, %v1578
    %v1595 = vpack.c.b16 %v1583, %v1581
    %v1596 = vpack.c.b16 %v1584, %v1582
    %v1597 = vpack.c.b16 %v1587, %v1585
    %v1598 = vpack.c.b16 %v1588, %v1586
    %v1599 = vpack.c.b16 %v1591, %v1589
    %v1600 = vpack.c.b16 %v1592, %v1590
    %v1609 = vld [vmem:[%s5] sm:$0xff]
    %v1610 = vld [vmem:[%s5 + $0x8] sm:$0xff]
    %v1611 = vld [vmem:[%s5 + $0x10] sm:$0xff]
    %v1612 = vld [vmem:[%s5 + $0x18] sm:$0xff]
    %v1613 = vld [vmem:[%s5 + $0x20] sm:$0xff]
    %v1614 = vld [vmem:[%s5 + $0x28] sm:$0xff]
    %v1615 = vld [vmem:[%s5 + $0x30] sm:$0xff]
    %v1616 = vld [vmem:[%s5 + $0x38] sm:$0xff]
    %v1617 = vld [vmem:[%s5 + $0x40] sm:$0xff]
    %v1618 = vld [vmem:[%s5 + $0x48] sm:$0xff]
    %v1619 = vld [vmem:[%s5 + $0x50] sm:$0xff]
    %v1620 = vld [vmem:[%s5 + $0x58] sm:$0xff]
    %v1621 = vld [vmem:[%s5 + $0x60] sm:$0xff]
    %v1622 = vld [vmem:[%s5 + $0x68] sm:$0xff]
    %v1623 = vld [vmem:[%s5 + $0x70] sm:$0xff]
    %v1624 = vld [vmem:[%s5 + $0x78] sm:$0xff]
    %v1625 = vld [vmem:[%s6] sm:$0xff]
    %v1626 = vld [vmem:[%s6 + $0x8] sm:$0xff]
    %v1627 = vld [vmem:[%s6 + $0x10] sm:$0xff]
    %v1628 = vld [vmem:[%s6 + $0x18] sm:$0xff]
    %v1629 = vld [vmem:[%s6 + $0x20] sm:$0xff]
    %v1630 = vld [vmem:[%s6 + $0x28] sm:$0xff]
    %v1631 = vld [vmem:[%s6 + $0x30] sm:$0xff]
    %v1632 = vld [vmem:[%s6 + $0x38] sm:$0xff]
    %v1633 = vld [vmem:[%s6 + $0x40] sm:$0xff]
    %v1634 = vld [vmem:[%s6 + $0x48] sm:$0xff]
    %v1635 = vld [vmem:[%s6 + $0x50] sm:$0xff]
    %v1636 = vld [vmem:[%s6 + $0x58] sm:$0xff]
    %v1637 = vld [vmem:[%s6 + $0x60] sm:$0xff]
    %v1638 = vld [vmem:[%s6 + $0x68] sm:$0xff]
    %v1639 = vld [vmem:[%s6 + $0x70] sm:$0xff]
    %v1640 = vld [vmem:[%s6 + $0x78] sm:$0xff]
    %1642 = vset.pattern.permute.xlu0 0
    %1643 = vperm.xlu0 %1642, %v1625
    %v1644 = vpop.permute.xlu0 %1643
    %1647 = vset.pattern.permute.xlu0 0
    %1648 = vperm.xlu0 %1647, %v1626
    %v1649 = vpop.permute.xlu0 %1648
    %1652 = vset.pattern.permute.xlu0 0
    %1653 = vperm.xlu0 %1652, %v1627
    %v1654 = vpop.permute.xlu0 %1653
    %1657 = vset.pattern.permute.xlu0 0
    %1658 = vperm.xlu0 %1657, %v1628
    %v1659 = vpop.permute.xlu0 %1658
    %1662 = vset.pattern.permute.xlu0 0
    %1663 = vperm.xlu0 %1662, %v1629
    %v1664 = vpop.permute.xlu0 %1663
    %1667 = vset.pattern.permute.xlu0 0
    %1668 = vperm.xlu0 %1667, %v1630
    %v1669 = vpop.permute.xlu0 %1668
    %1672 = vset.pattern.permute.xlu0 0
    %1673 = vperm.xlu0 %1672, %v1631
    %v1674 = vpop.permute.xlu0 %1673
    %1677 = vset.pattern.permute.xlu0 0
    %1678 = vperm.xlu0 %1677, %v1632
    %v1679 = vpop.permute.xlu0 %1678
    %1682 = vset.pattern.permute.xlu0 0
    %1683 = vperm.xlu0 %1682, %v1633
    %v1684 = vpop.permute.xlu0 %1683
    %1687 = vset.pattern.permute.xlu0 0
    %1688 = vperm.xlu0 %1687, %v1634
    %v1689 = vpop.permute.xlu0 %1688
    %1692 = vset.pattern.permute.xlu0 0
    %1693 = vperm.xlu0 %1692, %v1635
    %v1694 = vpop.permute.xlu0 %1693
    %1697 = vset.pattern.permute.xlu0 0
    %1698 = vperm.xlu0 %1697, %v1636
    %v1699 = vpop.permute.xlu0 %1698
    %1702 = vset.pattern.permute.xlu0 0
    %1703 = vperm.xlu0 %1702, %v1637
    %v1704 = vpop.permute.xlu0 %1703
    %1707 = vset.pattern.permute.xlu0 0
    %1708 = vperm.xlu0 %1707, %v1638
    %v1709 = vpop.permute.xlu0 %1708
    %1712 = vset.pattern.permute.xlu0 0
    %1713 = vperm.xlu0 %1712, %v1639
    %v1714 = vpop.permute.xlu0 %1713
    %1717 = vset.pattern.permute.xlu0 0
    %1718 = vperm.xlu0 %1717, %v1640
    %v1719 = vpop.permute.xlu0 %1718
    %v1737 = vunpack.c.l.b16 %v1609
    %v1738 = vunpack.c.h.b16 %v1609
    %v1739 = vunpack.c.l.b16 %v1610
    %v1740 = vunpack.c.h.b16 %v1610
    %v1741 = vunpack.c.l.b16 %v1611
    %v1742 = vunpack.c.h.b16 %v1611
    %v1743 = vunpack.c.l.b16 %v1612
    %v1744 = vunpack.c.h.b16 %v1612
    %v1745 = vunpack.c.l.b16 %v1613
    %v1746 = vunpack.c.h.b16 %v1613
    %v1747 = vunpack.c.l.b16 %v1614
    %v1748 = vunpack.c.h.b16 %v1614
    %v1749 = vunpack.c.l.b16 %v1615
    %v1750 = vunpack.c.h.b16 %v1615
    %v1751 = vunpack.c.l.b16 %v1616
    %v1752 = vunpack.c.h.b16 %v1616
    %v1753 = vunpack.c.l.b16 %v1617
    %v1754 = vunpack.c.h.b16 %v1617
    %v1755 = vunpack.c.l.b16 %v1618
    %v1756 = vunpack.c.h.b16 %v1618
    %v1757 = vunpack.c.l.b16 %v1619
    %v1758 = vunpack.c.h.b16 %v1619
    %v1759 = vunpack.c.l.b16 %v1620
    %v1760 = vunpack.c.h.b16 %v1620
    %v1761 = vunpack.c.l.b16 %v1621
    %v1762 = vunpack.c.h.b16 %v1621
    %v1763 = vunpack.c.l.b16 %v1622
    %v1764 = vunpack.c.h.b16 %v1622
    %v1765 = vunpack.c.l.b16 %v1623
    %v1766 = vunpack.c.h.b16 %v1623
    %v1767 = vunpack.c.l.b16 %v1624
    %v1768 = vunpack.c.h.b16 %v1624
    %v1769 = vpack.c.b16 %v1739, %v1737
    %v1770 = vpack.c.b16 %v1740, %v1738
    %v1771 = vpack.c.b16 %v1743, %v1741
    %v1772 = vpack.c.b16 %v1744, %v1742
    %v1773 = vpack.c.b16 %v1747, %v1745
    %v1774 = vpack.c.b16 %v1748, %v1746
    %v1775 = vpack.c.b16 %v1751, %v1749
    %v1776 = vpack.c.b16 %v1752, %v1750
    %v1777 = vpack.c.b16 %v1755, %v1753
    %v1778 = vpack.c.b16 %v1756, %v1754
    %v1779 = vpack.c.b16 %v1759, %v1757
    %v1780 = vpack.c.b16 %v1760, %v1758
    %v1781 = vpack.c.b16 %v1763, %v1761
    %v1782 = vpack.c.b16 %v1764, %v1762
    %v1783 = vpack.c.b16 %v1767, %v1765
    %v1784 = vpack.c.b16 %v1768, %v1766
    %vm1793 = vcmask 523264
    %v1795 = vsel %vm1793, %v1770, 0
    %v1798 = vsel %vm1793, %v1772, 0
    %v1801 = vsel %vm1793, %v1774, 0
    %v1804 = vsel %vm1793, %v1776, 0
    %v1807 = vsel %vm1793, %v1778, 0
    %v1810 = vsel %vm1793, %v1780, 0
    %v1813 = vsel %vm1793, %v1782, 0
    %v1816 = vsel %vm1793, %v1784, 0
    %1818 = vmatpush.bf16.msra.mxu0 %v1509
    %1819 = vmatpush.bf16.msra.mxu0 %v1497
    %1820 = vmatpush.bf16.msra.mxu0 %v1485
    %1821 = vmatpush.bf16.msra.mxu0 %v1473
    %1822 = vmatpush.bf16.msra.mxu0 0
    %1823 = vmatpush.bf16.msra.mxu0 0
    %1824 = vmatpush.bf16.msra.mxu0 0
    %1825 = vmatpush.bf16.msra.mxu0 0
    %1826 = vmatmul.bf16.gmra.mxu0 %v1769
    %v1827 = vpop.f32.mrf.mxu0
    %v1828 = vadd.f32 %v1644, %v1827
    %v1829 = vpop.f32.mrf.mxu0
    %v1830 = vadd.f32 %v1649, %v1829
    %1831 = vmatmul.bf16.gmra.mxu0 %v1771
    %v1832 = vpop.f32.mrf.mxu0
    %v1833 = vadd.f32 %v1654, %v1832
    %v1834 = vpop.f32.mrf.mxu0
    %v1835 = vadd.f32 %v1659, %v1834
    %1836 = vmatmul.bf16.gmra.mxu0 %v1773
    %v1837 = vpop.f32.mrf.mxu0
    %v1838 = vadd.f32 %v1664, %v1837
    %v1839 = vpop.f32.mrf.mxu0
    %v1840 = vadd.f32 %v1669, %v1839
    %1841 = vmatmul.bf16.gmra.mxu0 %v1775
    %v1842 = vpop.f32.mrf.mxu0
    %v1843 = vadd.f32 %v1674, %v1842
    %v1844 = vpop.f32.mrf.mxu0
    %v1845 = vadd.f32 %v1679, %v1844
    %1846 = vmatmul.bf16.gmra.mxu0 %v1777
    %v1847 = vpop.f32.mrf.mxu0
    %v1848 = vadd.f32 %v1684, %v1847
    %v1849 = vpop.f32.mrf.mxu0
    %v1850 = vadd.f32 %v1689, %v1849
    %1851 = vmatmul.bf16.gmra.mxu0 %v1779
    %v1852 = vpop.f32.mrf.mxu0
    %v1853 = vadd.f32 %v1694, %v1852
    %v1854 = vpop.f32.mrf.mxu0
    %v1855 = vadd.f32 %v1699, %v1854
    %1856 = vmatmul.bf16.gmra.mxu0 %v1781
    %v1857 = vpop.f32.mrf.mxu0
    %v1858 = vadd.f32 %v1704, %v1857
    %v1859 = vpop.f32.mrf.mxu0
    %v1860 = vadd.f32 %v1709, %v1859
    %1861 = vmatmul.bf16.gmra.mxu0 %v1783
    %v1862 = vpop.f32.mrf.mxu0
    %v1863 = vadd.f32 %v1714, %v1862
    %v1864 = vpop.f32.mrf.mxu0
    %v1865 = vadd.f32 %v1719, %v1864
    %1866 = vdwg.mxu0
    %1867 = vmatpush.bf16.msra.mxu0 0
    %1868 = vmatpush.bf16.msra.mxu0 0
    %1869 = vmatpush.bf16.msra.mxu0 0
    %1870 = vmatpush.bf16.msra.mxu0 0
    %1871 = vmatpush.bf16.msra.mxu0 %v1510
    %1872 = vmatpush.bf16.msra.mxu0 %v1498
    %1873 = vmatpush.bf16.msra.mxu0 %v1486
    %1874 = vmatpush.bf16.msra.mxu0 %v1474
    %1875 = vmatmul.bf16.gmra.mxu0 %v1795
    %v1876 = vpop.f32.mrf.mxu0
    %v1877 = vadd.f32 %v1828, %v1876
    %v1878 = vpop.f32.mrf.mxu0
    %v1879 = vadd.f32 %v1830, %v1878
    %1880 = vmatmul.bf16.gmra.mxu0 %v1798
    %v1881 = vpop.f32.mrf.mxu0
    %v1882 = vadd.f32 %v1833, %v1881
    %v1883 = vpop.f32.mrf.mxu0
    %v1884 = vadd.f32 %v1835, %v1883
    %1885 = vmatmul.bf16.gmra.mxu0 %v1801
    %v1886 = vpop.f32.mrf.mxu0
    %v1887 = vadd.f32 %v1838, %v1886
    %v1888 = vpop.f32.mrf.mxu0
    %v1889 = vadd.f32 %v1840, %v1888
    %1890 = vmatmul.bf16.gmra.mxu0 %v1804
    %v1891 = vpop.f32.mrf.mxu0
    %v1892 = vadd.f32 %v1843, %v1891
    %v1893 = vpop.f32.mrf.mxu0
    %v1894 = vadd.f32 %v1845, %v1893
    %1895 = vmatmul.bf16.gmra.mxu0 %v1807
    %v1896 = vpop.f32.mrf.mxu0
    %v1897 = vadd.f32 %v1848, %v1896
    %v1898 = vpop.f32.mrf.mxu0
    %v1899 = vadd.f32 %v1850, %v1898
    %1900 = vmatmul.bf16.gmra.mxu0 %v1810
    %v1901 = vpop.f32.mrf.mxu0
    %v1902 = vadd.f32 %v1853, %v1901
    %v1903 = vpop.f32.mrf.mxu0
    %v1904 = vadd.f32 %v1855, %v1903
    %1905 = vmatmul.bf16.gmra.mxu0 %v1813
    %v1906 = vpop.f32.mrf.mxu0
    %v1907 = vadd.f32 %v1858, %v1906
    %v1908 = vpop.f32.mrf.mxu0
    %v1909 = vadd.f32 %v1860, %v1908
    %1910 = vmatmul.bf16.gmra.mxu0 %v1816
    %v1911 = vpop.f32.mrf.mxu0
    %v1912 = vadd.f32 %v1863, %v1911
    %v1913 = vpop.f32.mrf.mxu0
    %v1914 = vadd.f32 %v1865, %v1913
    %1915 = vdwg.mxu0
    %1916 = vmatpush.bf16.msra.mxu0 %v1510
    %1917 = vmatpush.bf16.msra.mxu0 %v1498
    %1918 = vmatpush.bf16.msra.mxu0 %v1486
    %1919 = vmatpush.bf16.msra.mxu0 %v1474
    %1920 = vmatpush.bf16.msra.mxu0 %v1509
    %1921 = vmatpush.bf16.msra.mxu0 %v1497
    %1922 = vmatpush.bf16.msra.mxu0 %v1485
    %1923 = vmatpush.bf16.msra.mxu0 %v1473
    %1924 = vmatmul.bf16.gmra.mxu0 %v1769
    %v1925 = vpop.f32.mrf.mxu0
    %v1926 = vadd.f32 %v1644, %v1925
    %v1927 = vpop.f32.mrf.mxu0
    %v1928 = vadd.f32 %v1649, %v1927
    %1929 = vmatmul.bf16.gmra.mxu0 %v1771
    %v1930 = vpop.f32.mrf.mxu0
    %v1931 = vadd.f32 %v1654, %v1930
    %v1932 = vpop.f32.mrf.mxu0
    %v1933 = vadd.f32 %v1659, %v1932
    %1934 = vmatmul.bf16.gmra.mxu0 %v1773
    %v1935 = vpop.f32.mrf.mxu0
    %v1936 = vadd.f32 %v1664, %v1935
    %v1937 = vpop.f32.mrf.mxu0
    %v1938 = vadd.f32 %v1669, %v1937
    %1939 = vmatmul.bf16.gmra.mxu0 %v1775
    %v1940 = vpop.f32.mrf.mxu0
    %v1941 = vadd.f32 %v1674, %v1940
    %v1942 = vpop.f32.mrf.mxu0
    %v1943 = vadd.f32 %v1679, %v1942
    %1944 = vmatmul.bf16.gmra.mxu0 %v1777
    %v1945 = vpop.f32.mrf.mxu0
    %v1946 = vadd.f32 %v1684, %v1945
    %v1947 = vpop.f32.mrf.mxu0
    %v1948 = vadd.f32 %v1689, %v1947
    %1949 = vmatmul.bf16.gmra.mxu0 %v1779
    %v1950 = vpop.f32.mrf.mxu0
    %v1951 = vadd.f32 %v1694, %v1950
    %v1952 = vpop.f32.mrf.mxu0
    %v1953 = vadd.f32 %v1699, %v1952
    %1954 = vmatmul.bf16.gmra.mxu0 %v1781
    %v1955 = vpop.f32.mrf.mxu0
    %v1956 = vadd.f32 %v1704, %v1955
    %v1957 = vpop.f32.mrf.mxu0
    %v1958 = vadd.f32 %v1709, %v1957
    %1959 = vmatmul.bf16.gmra.mxu0 %v1783
    %v1960 = vpop.f32.mrf.mxu0
    %v1961 = vadd.f32 %v1714, %v1960
    %v1962 = vpop.f32.mrf.mxu0
    %v1963 = vadd.f32 %v1719, %v1962
    %1964 = vdwg.mxu0
    %1965 = vmatpush.bf16.msra.mxu0 0
    %1966 = vmatpush.bf16.msra.mxu0 0
    %1967 = vmatpush.bf16.msra.mxu0 0
    %1968 = vmatpush.bf16.msra.mxu0 0
    %1969 = vmatpush.bf16.msra.mxu0 %v1511
    %1970 = vmatpush.bf16.msra.mxu0 %v1499
    %1971 = vmatpush.bf16.msra.mxu0 %v1487
    %1972 = vmatpush.bf16.msra.mxu0 %v1475
    %1973 = vmatmul.bf16.gmra.mxu0 %v1795
    %v1974 = vpop.f32.mrf.mxu0
    %v1975 = vadd.f32 %v1926, %v1974
    %v1976 = vpop.f32.mrf.mxu0
    %v1977 = vadd.f32 %v1928, %v1976
    %1978 = vmatmul.bf16.gmra.mxu0 %v1798
    %v1979 = vpop.f32.mrf.mxu0
    %v1980 = vadd.f32 %v1931, %v1979
    %v1981 = vpop.f32.mrf.mxu0
    %v1982 = vadd.f32 %v1933, %v1981
    %1983 = vmatmul.bf16.gmra.mxu0 %v1801
    %v1984 = vpop.f32.mrf.mxu0
    %v1985 = vadd.f32 %v1936, %v1984
    %v1986 = vpop.f32.mrf.mxu0
    %v1987 = vadd.f32 %v1938, %v1986
    %1988 = vmatmul.bf16.gmra.mxu0 %v1804
    %v1989 = vpop.f32.mrf.mxu0
    %v1990 = vadd.f32 %v1941, %v1989
    %v1991 = vpop.f32.mrf.mxu0
    %v1992 = vadd.f32 %v1943, %v1991
    %1993 = vmatmul.bf16.gmra.mxu0 %v1807
    %v1994 = vpop.f32.mrf.mxu0
    %v1995 = vadd.f32 %v1946, %v1994
    %v1996 = vpop.f32.mrf.mxu0
    %v1997 = vadd.f32 %v1948, %v1996
    %1998 = vmatmul.bf16.gmra.mxu0 %v1810
    %v1999 = vpop.f32.mrf.mxu0
    %v2000 = vadd.f32 %v1951, %v1999
    %v2001 = vpop.f32.mrf.mxu0
    %v2002 = vadd.f32 %v1953, %v2001
    %2003 = vmatmul.bf16.gmra.mxu0 %v1813
    %v2004 = vpop.f32.mrf.mxu0
    %v2005 = vadd.f32 %v1956, %v2004
    %v2006 = vpop.f32.mrf.mxu0
    %v2007 = vadd.f32 %v1958, %v2006
    %2008 = vmatmul.bf16.gmra.mxu0 %v1816
    %v2009 = vpop.f32.mrf.mxu0
    %v2010 = vadd.f32 %v1961, %v2009
    %v2011 = vpop.f32.mrf.mxu0
    %v2012 = vadd.f32 %v1963, %v2011
    %2013 = vdwg.mxu0
    %2014 = vmatpush.bf16.msra.mxu0 %v1511
    %2015 = vmatpush.bf16.msra.mxu0 %v1499
    %2016 = vmatpush.bf16.msra.mxu0 %v1487
    %2017 = vmatpush.bf16.msra.mxu0 %v1475
    %2018 = vmatpush.bf16.msra.mxu0 %v1510
    %2019 = vmatpush.bf16.msra.mxu0 %v1498
    %2020 = vmatpush.bf16.msra.mxu0 %v1486
    %2021 = vmatpush.bf16.msra.mxu0 %v1474
    %2022 = vmatmul.bf16.gmra.mxu0 %v1769
    %v2023 = vpop.f32.mrf.mxu0
    %v2024 = vadd.f32 %v1644, %v2023
    %v2025 = vpop.f32.mrf.mxu0
    %v2026 = vadd.f32 %v1649, %v2025
    %2027 = vmatmul.bf16.gmra.mxu0 %v1771
    %v2028 = vpop.f32.mrf.mxu0
    %v2029 = vadd.f32 %v1654, %v2028
    %v2030 = vpop.f32.mrf.mxu0
    %v2031 = vadd.f32 %v1659, %v2030
    %2032 = vmatmul.bf16.gmra.mxu0 %v1773
    %v2033 = vpop.f32.mrf.mxu0
    %v2034 = vadd.f32 %v1664, %v2033
    %v2035 = vpop.f32.mrf.mxu0
    %v2036 = vadd.f32 %v1669, %v2035
    %2037 = vmatmul.bf16.gmra.mxu0 %v1775
    %v2038 = vpop.f32.mrf.mxu0
    %v2039 = vadd.f32 %v1674, %v2038
    %v2040 = vpop.f32.mrf.mxu0
    %v2041 = vadd.f32 %v1679, %v2040
    %2042 = vmatmul.bf16.gmra.mxu0 %v1777
    %v2043 = vpop.f32.mrf.mxu0
    %v2044 = vadd.f32 %v1684, %v2043
    %v2045 = vpop.f32.mrf.mxu0
    %v2046 = vadd.f32 %v1689, %v2045
    %2047 = vmatmul.bf16.gmra.mxu0 %v1779
    %v2048 = vpop.f32.mrf.mxu0
    %v2049 = vadd.f32 %v1694, %v2048
    %v2050 = vpop.f32.mrf.mxu0
    %v2051 = vadd.f32 %v1699, %v2050
    %2052 = vmatmul.bf16.gmra.mxu0 %v1781
    %v2053 = vpop.f32.mrf.mxu0
    %v2054 = vadd.f32 %v1704, %v2053
    %v2055 = vpop.f32.mrf.mxu0
    %v2056 = vadd.f32 %v1709, %v2055
    %2057 = vmatmul.bf16.gmra.mxu0 %v1783
    %v2058 = vpop.f32.mrf.mxu0
    %v2059 = vadd.f32 %v1714, %v2058
    %v2060 = vpop.f32.mrf.mxu0
    %v2061 = vadd.f32 %v1719, %v2060
    %2062 = vdwg.mxu0
    %2063 = vmatpush.bf16.msra.mxu0 0
    %2064 = vmatpush.bf16.msra.mxu0 0
    %2065 = vmatpush.bf16.msra.mxu0 0
    %2066 = vmatpush.bf16.msra.mxu0 0
    %2067 = vmatpush.bf16.msra.mxu0 %v1512
    %2068 = vmatpush.bf16.msra.mxu0 %v1500
    %2069 = vmatpush.bf16.msra.mxu0 %v1488
    %2070 = vmatpush.bf16.msra.mxu0 %v1476
    %2071 = vmatmul.bf16.gmra.mxu0 %v1795
    %v2072 = vpop.f32.mrf.mxu0
    %v2073 = vadd.f32 %v2024, %v2072
    %v2074 = vpop.f32.mrf.mxu0
    %v2075 = vadd.f32 %v2026, %v2074
    %2076 = vmatmul.bf16.gmra.mxu0 %v1798
    %v2077 = vpop.f32.mrf.mxu0
    %v2078 = vadd.f32 %v2029, %v2077
    %v2079 = vpop.f32.mrf.mxu0
    %v2080 = vadd.f32 %v2031, %v2079
    %2081 = vmatmul.bf16.gmra.mxu0 %v1801
    %v2082 = vpop.f32.mrf.mxu0
    %v2083 = vadd.f32 %v2034, %v2082
    %v2084 = vpop.f32.mrf.mxu0
    %v2085 = vadd.f32 %v2036, %v2084
    %2086 = vmatmul.bf16.gmra.mxu0 %v1804
    %v2087 = vpop.f32.mrf.mxu0
    %v2088 = vadd.f32 %v2039, %v2087
    %v2089 = vpop.f32.mrf.mxu0
    %v2090 = vadd.f32 %v2041, %v2089
    %2091 = vmatmul.bf16.gmra.mxu0 %v1807
    %v2092 = vpop.f32.mrf.mxu0
    %v2093 = vadd.f32 %v2044, %v2092
    %v2094 = vpop.f32.mrf.mxu0
    %v2095 = vadd.f32 %v2046, %v2094
    %2096 = vmatmul.bf16.gmra.mxu0 %v1810
    %v2097 = vpop.f32.mrf.mxu0
    %v2098 = vadd.f32 %v2049, %v2097
    %v2099 = vpop.f32.mrf.mxu0
    %v2100 = vadd.f32 %v2051, %v2099
    %2101 = vmatmul.bf16.gmra.mxu0 %v1813
    %v2102 = vpop.f32.mrf.mxu0
    %v2103 = vadd.f32 %v2054, %v2102
    %v2104 = vpop.f32.mrf.mxu0
    %v2105 = vadd.f32 %v2056, %v2104
    %2106 = vmatmul.bf16.gmra.mxu0 %v1816
    %v2107 = vpop.f32.mrf.mxu0
    %v2108 = vadd.f32 %v2059, %v2107
    %v2109 = vpop.f32.mrf.mxu0
    %v2110 = vadd.f32 %v2061, %v2109
    %2111 = vdwg.mxu0
    %2112 = vmatpush.bf16.msra.mxu0 %v1512
    %2113 = vmatpush.bf16.msra.mxu0 %v1500
    %2114 = vmatpush.bf16.msra.mxu0 %v1488
    %2115 = vmatpush.bf16.msra.mxu0 %v1476
    %2116 = vmatpush.bf16.msra.mxu0 %v1511
    %2117 = vmatpush.bf16.msra.mxu0 %v1499
    %2118 = vmatpush.bf16.msra.mxu0 %v1487
    %2119 = vmatpush.bf16.msra.mxu0 %v1475
    %2120 = vmatmul.bf16.gmra.mxu0 %v1769
    %v2121 = vpop.f32.mrf.mxu0
    %v2122 = vadd.f32 %v1644, %v2121
    %v2123 = vpop.f32.mrf.mxu0
    %v2124 = vadd.f32 %v1649, %v2123
    %2125 = vmatmul.bf16.gmra.mxu0 %v1771
    %v2126 = vpop.f32.mrf.mxu0
    %v2127 = vadd.f32 %v1654, %v2126
    %v2128 = vpop.f32.mrf.mxu0
    %v2129 = vadd.f32 %v1659, %v2128
    %2130 = vmatmul.bf16.gmra.mxu0 %v1773
    %v2131 = vpop.f32.mrf.mxu0
    %v2132 = vadd.f32 %v1664, %v2131
    %v2133 = vpop.f32.mrf.mxu0
    %v2134 = vadd.f32 %v1669, %v2133
    %2135 = vmatmul.bf16.gmra.mxu0 %v1775
    %v2136 = vpop.f32.mrf.mxu0
    %v2137 = vadd.f32 %v1674, %v2136
    %v2138 = vpop.f32.mrf.mxu0
    %v2139 = vadd.f32 %v1679, %v2138
    %2140 = vmatmul.bf16.gmra.mxu0 %v1777
    %v2141 = vpop.f32.mrf.mxu0
    %v2142 = vadd.f32 %v1684, %v2141
    %v2143 = vpop.f32.mrf.mxu0
    %v2144 = vadd.f32 %v1689, %v2143
    %2145 = vmatmul.bf16.gmra.mxu0 %v1779
    %v2146 = vpop.f32.mrf.mxu0
    %v2147 = vadd.f32 %v1694, %v2146
    %v2148 = vpop.f32.mrf.mxu0
    %v2149 = vadd.f32 %v1699, %v2148
    %2150 = vmatmul.bf16.gmra.mxu0 %v1781
    %v2151 = vpop.f32.mrf.mxu0
    %v2152 = vadd.f32 %v1704, %v2151
    %v2153 = vpop.f32.mrf.mxu0
    %v2154 = vadd.f32 %v1709, %v2153
    %2155 = vmatmul.bf16.gmra.mxu0 %v1783
    %v2156 = vpop.f32.mrf.mxu0
    %v2157 = vadd.f32 %v1714, %v2156
    %v2158 = vpop.f32.mrf.mxu0
    %v2159 = vadd.f32 %v1719, %v2158
    %2160 = vdwg.mxu0
    %2161 = vmatpush.bf16.msra.mxu0 0
    %2162 = vmatpush.bf16.msra.mxu0 0
    %2163 = vmatpush.bf16.msra.mxu0 0
    %2164 = vmatpush.bf16.msra.mxu0 0
    %2165 = vmatpush.bf16.msra.mxu0 %v1513
    %2166 = vmatpush.bf16.msra.mxu0 %v1501
    %2167 = vmatpush.bf16.msra.mxu0 %v1489
    %2168 = vmatpush.bf16.msra.mxu0 %v1477
    %2169 = vmatmul.bf16.gmra.mxu0 %v1795
    %v2170 = vpop.f32.mrf.mxu0
    %v2171 = vadd.f32 %v2122, %v2170
    %v2172 = vpop.f32.mrf.mxu0
    %v2173 = vadd.f32 %v2124, %v2172
    %2174 = vmatmul.bf16.gmra.mxu0 %v1798
    %v2175 = vpop.f32.mrf.mxu0
    %v2176 = vadd.f32 %v2127, %v2175
    %v2177 = vpop.f32.mrf.mxu0
    %v2178 = vadd.f32 %v2129, %v2177
    %2179 = vmatmul.bf16.gmra.mxu0 %v1801
    %v2180 = vpop.f32.mrf.mxu0
    %v2181 = vadd.f32 %v2132, %v2180
    %v2182 = vpop.f32.mrf.mxu0
    %v2183 = vadd.f32 %v2134, %v2182
    %2184 = vmatmul.bf16.gmra.mxu0 %v1804
    %v2185 = vpop.f32.mrf.mxu0
    %v2186 = vadd.f32 %v2137, %v2185
    %v2187 = vpop.f32.mrf.mxu0
    %v2188 = vadd.f32 %v2139, %v2187
    %2189 = vmatmul.bf16.gmra.mxu0 %v1807
    %v2190 = vpop.f32.mrf.mxu0
    %v2191 = vadd.f32 %v2142, %v2190
    %v2192 = vpop.f32.mrf.mxu0
    %v2193 = vadd.f32 %v2144, %v2192
    %2194 = vmatmul.bf16.gmra.mxu0 %v1810
    %v2195 = vpop.f32.mrf.mxu0
    %v2196 = vadd.f32 %v2147, %v2195
    %v2197 = vpop.f32.mrf.mxu0
    %v2198 = vadd.f32 %v2149, %v2197
    %2199 = vmatmul.bf16.gmra.mxu0 %v1813
    %v2200 = vpop.f32.mrf.mxu0
    %v2201 = vadd.f32 %v2152, %v2200
    %v2202 = vpop.f32.mrf.mxu0
    %v2203 = vadd.f32 %v2154, %v2202
    %2204 = vmatmul.bf16.gmra.mxu0 %v1816
    %v2205 = vpop.f32.mrf.mxu0
    %v2206 = vadd.f32 %v2157, %v2205
    %v2207 = vpop.f32.mrf.mxu0
    %v2208 = vadd.f32 %v2159, %v2207
    %2209 = vdwg.mxu0
    %2210 = vmatpush.bf16.msra.mxu0 %v1513
    %2211 = vmatpush.bf16.msra.mxu0 %v1501
    %2212 = vmatpush.bf16.msra.mxu0 %v1489
    %2213 = vmatpush.bf16.msra.mxu0 %v1477
    %2214 = vmatpush.bf16.msra.mxu0 %v1512
    %2215 = vmatpush.bf16.msra.mxu0 %v1500
    %2216 = vmatpush.bf16.msra.mxu0 %v1488
    %2217 = vmatpush.bf16.msra.mxu0 %v1476
    %2218 = vmatmul.bf16.gmra.mxu0 %v1769
    %v2219 = vpop.f32.mrf.mxu0
    %v2220 = vadd.f32 %v1644, %v2219
    %v2221 = vpop.f32.mrf.mxu0
    %v2222 = vadd.f32 %v1649, %v2221
    %2223 = vmatmul.bf16.gmra.mxu0 %v1771
    %v2224 = vpop.f32.mrf.mxu0
    %v2225 = vadd.f32 %v1654, %v2224
    %v2226 = vpop.f32.mrf.mxu0
    %v2227 = vadd.f32 %v1659, %v2226
    %2228 = vmatmul.bf16.gmra.mxu0 %v1773
    %v2229 = vpop.f32.mrf.mxu0
    %v2230 = vadd.f32 %v1664, %v2229
    %v2231 = vpop.f32.mrf.mxu0
    %v2232 = vadd.f32 %v1669, %v2231
    %2233 = vmatmul.bf16.gmra.mxu0 %v1775
    %v2234 = vpop.f32.mrf.mxu0
    %v2235 = vadd.f32 %v1674, %v2234
    %v2236 = vpop.f32.mrf.mxu0
    %v2237 = vadd.f32 %v1679, %v2236
    %2238 = vmatmul.bf16.gmra.mxu0 %v1777
    %v2239 = vpop.f32.mrf.mxu0
    %v2240 = vadd.f32 %v1684, %v2239
    %v2241 = vpop.f32.mrf.mxu0
    %v2242 = vadd.f32 %v1689, %v2241
    %2243 = vmatmul.bf16.gmra.mxu0 %v1779
    %v2244 = vpop.f32.mrf.mxu0
    %v2245 = vadd.f32 %v1694, %v2244
    %v2246 = vpop.f32.mrf.mxu0
    %v2247 = vadd.f32 %v1699, %v2246
    %2248 = vmatmul.bf16.gmra.mxu0 %v1781
    %v2249 = vpop.f32.mrf.mxu0
    %v2250 = vadd.f32 %v1704, %v2249
    %v2251 = vpop.f32.mrf.mxu0
    %v2252 = vadd.f32 %v1709, %v2251
    %2253 = vmatmul.bf16.gmra.mxu0 %v1783
    %v2254 = vpop.f32.mrf.mxu0
    %v2255 = vadd.f32 %v1714, %v2254
    %v2256 = vpop.f32.mrf.mxu0
    %v2257 = vadd.f32 %v1719, %v2256
    %2258 = vdwg.mxu0
    %2259 = vmatpush.bf16.msra.mxu0 0
    %2260 = vmatpush.bf16.msra.mxu0 0
    %2261 = vmatpush.bf16.msra.mxu0 0
    %2262 = vmatpush.bf16.msra.mxu0 0
    %2263 = vmatpush.bf16.msra.mxu0 %v1514
    %2264 = vmatpush.bf16.msra.mxu0 %v1502
    %2265 = vmatpush.bf16.msra.mxu0 %v1490
    %2266 = vmatpush.bf16.msra.mxu0 %v1478
    %2267 = vmatmul.bf16.gmra.mxu0 %v1795
    %v2268 = vpop.f32.mrf.mxu0
    %v2269 = vadd.f32 %v2220, %v2268
    %v2270 = vpop.f32.mrf.mxu0
    %v2271 = vadd.f32 %v2222, %v2270
    %2272 = vmatmul.bf16.gmra.mxu0 %v1798
    %v2273 = vpop.f32.mrf.mxu0
    %v2274 = vadd.f32 %v2225, %v2273
    %v2275 = vpop.f32.mrf.mxu0
    %v2276 = vadd.f32 %v2227, %v2275
    %2277 = vmatmul.bf16.gmra.mxu0 %v1801
    %v2278 = vpop.f32.mrf.mxu0
    %v2279 = vadd.f32 %v2230, %v2278
    %v2280 = vpop.f32.mrf.mxu0
    %v2281 = vadd.f32 %v2232, %v2280
    %2282 = vmatmul.bf16.gmra.mxu0 %v1804
    %v2283 = vpop.f32.mrf.mxu0
    %v2284 = vadd.f32 %v2235, %v2283
    %v2285 = vpop.f32.mrf.mxu0
    %v2286 = vadd.f32 %v2237, %v2285
    %2287 = vmatmul.bf16.gmra.mxu0 %v1807
    %v2288 = vpop.f32.mrf.mxu0
    %v2289 = vadd.f32 %v2240, %v2288
    %v2290 = vpop.f32.mrf.mxu0
    %v2291 = vadd.f32 %v2242, %v2290
    %2292 = vmatmul.bf16.gmra.mxu0 %v1810
    %v2293 = vpop.f32.mrf.mxu0
    %v2294 = vadd.f32 %v2245, %v2293
    %v2295 = vpop.f32.mrf.mxu0
    %v2296 = vadd.f32 %v2247, %v2295
    %2297 = vmatmul.bf16.gmra.mxu0 %v1813
    %v2298 = vpop.f32.mrf.mxu0
    %v2299 = vadd.f32 %v2250, %v2298
    %v2300 = vpop.f32.mrf.mxu0
    %v2301 = vadd.f32 %v2252, %v2300
    %2302 = vmatmul.bf16.gmra.mxu0 %v1816
    %v2303 = vpop.f32.mrf.mxu0
    %v2304 = vadd.f32 %v2255, %v2303
    %v2305 = vpop.f32.mrf.mxu0
    %v2306 = vadd.f32 %v2257, %v2305
    %2307 = vdwg.mxu0
    %2308 = vmatpush.bf16.msra.mxu0 %v1514
    %2309 = vmatpush.bf16.msra.mxu0 %v1502
    %2310 = vmatpush.bf16.msra.mxu0 %v1490
    %2311 = vmatpush.bf16.msra.mxu0 %v1478
    %2312 = vmatpush.bf16.msra.mxu0 %v1513
    %2313 = vmatpush.bf16.msra.mxu0 %v1501
    %2314 = vmatpush.bf16.msra.mxu0 %v1489
    %2315 = vmatpush.bf16.msra.mxu0 %v1477
    %2316 = vmatmul.bf16.gmra.mxu0 %v1769
    %v2317 = vpop.f32.mrf.mxu0
    %v2318 = vadd.f32 %v1644, %v2317
    %v2319 = vpop.f32.mrf.mxu0
    %v2320 = vadd.f32 %v1649, %v2319
    %2321 = vmatmul.bf16.gmra.mxu0 %v1771
    %v2322 = vpop.f32.mrf.mxu0
    %v2323 = vadd.f32 %v1654, %v2322
    %v2324 = vpop.f32.mrf.mxu0
    %v2325 = vadd.f32 %v1659, %v2324
    %2326 = vmatmul.bf16.gmra.mxu0 %v1773
    %v2327 = vpop.f32.mrf.mxu0
    %v2328 = vadd.f32 %v1664, %v2327
    %v2329 = vpop.f32.mrf.mxu0
    %v2330 = vadd.f32 %v1669, %v2329
    %2331 = vmatmul.bf16.gmra.mxu0 %v1775
    %v2332 = vpop.f32.mrf.mxu0
    %v2333 = vadd.f32 %v1674, %v2332
    %v2334 = vpop.f32.mrf.mxu0
    %v2335 = vadd.f32 %v1679, %v2334
    %2336 = vmatmul.bf16.gmra.mxu0 %v1777
    %v2337 = vpop.f32.mrf.mxu0
    %v2338 = vadd.f32 %v1684, %v2337
    %v2339 = vpop.f32.mrf.mxu0
    %v2340 = vadd.f32 %v1689, %v2339
    %2341 = vmatmul.bf16.gmra.mxu0 %v1779
    %v2342 = vpop.f32.mrf.mxu0
    %v2343 = vadd.f32 %v1694, %v2342
    %v2344 = vpop.f32.mrf.mxu0
    %v2345 = vadd.f32 %v1699, %v2344
    %2346 = vmatmul.bf16.gmra.mxu0 %v1781
    %v2347 = vpop.f32.mrf.mxu0
    %v2348 = vadd.f32 %v1704, %v2347
    %v2349 = vpop.f32.mrf.mxu0
    %v2350 = vadd.f32 %v1709, %v2349
    %2351 = vmatmul.bf16.gmra.mxu0 %v1783
    %v2352 = vpop.f32.mrf.mxu0
    %v2353 = vadd.f32 %v1714, %v2352
    %v2354 = vpop.f32.mrf.mxu0
    %v2355 = vadd.f32 %v1719, %v2354
    %2356 = vdwg.mxu0
    %2357 = vmatpush.bf16.msra.mxu0 0
    %2358 = vmatpush.bf16.msra.mxu0 0
    %2359 = vmatpush.bf16.msra.mxu0 0
    %2360 = vmatpush.bf16.msra.mxu0 0
    %2361 = vmatpush.bf16.msra.mxu0 %v1515
    %2362 = vmatpush.bf16.msra.mxu0 %v1503
    %2363 = vmatpush.bf16.msra.mxu0 %v1491
    %2364 = vmatpush.bf16.msra.mxu0 %v1479
    %2365 = vmatmul.bf16.gmra.mxu0 %v1795
    %v2366 = vpop.f32.mrf.mxu0
    %v2367 = vadd.f32 %v2318, %v2366
    %v2368 = vpop.f32.mrf.mxu0
    %v2369 = vadd.f32 %v2320, %v2368
    %2370 = vmatmul.bf16.gmra.mxu0 %v1798
    %v2371 = vpop.f32.mrf.mxu0
    %v2372 = vadd.f32 %v2323, %v2371
    %v2373 = vpop.f32.mrf.mxu0
    %v2374 = vadd.f32 %v2325, %v2373
    %2375 = vmatmul.bf16.gmra.mxu0 %v1801
    %v2376 = vpop.f32.mrf.mxu0
    %v2377 = vadd.f32 %v2328, %v2376
    %v2378 = vpop.f32.mrf.mxu0
    %v2379 = vadd.f32 %v2330, %v2378
    %2380 = vmatmul.bf16.gmra.mxu0 %v1804
    %v2381 = vpop.f32.mrf.mxu0
    %v2382 = vadd.f32 %v2333, %v2381
    %v2383 = vpop.f32.mrf.mxu0
    %v2384 = vadd.f32 %v2335, %v2383
    %2385 = vmatmul.bf16.gmra.mxu0 %v1807
    %v2386 = vpop.f32.mrf.mxu0
    %v2387 = vadd.f32 %v2338, %v2386
    %v2388 = vpop.f32.mrf.mxu0
    %v2389 = vadd.f32 %v2340, %v2388
    %2390 = vmatmul.bf16.gmra.mxu0 %v1810
    %v2391 = vpop.f32.mrf.mxu0
    %v2392 = vadd.f32 %v2343, %v2391
    %v2393 = vpop.f32.mrf.mxu0
    %v2394 = vadd.f32 %v2345, %v2393
    %2395 = vmatmul.bf16.gmra.mxu0 %v1813
    %v2396 = vpop.f32.mrf.mxu0
    %v2397 = vadd.f32 %v2348, %v2396
    %v2398 = vpop.f32.mrf.mxu0
    %v2399 = vadd.f32 %v2350, %v2398
    %2400 = vmatmul.bf16.gmra.mxu0 %v1816
    %v2401 = vpop.f32.mrf.mxu0
    %v2402 = vadd.f32 %v2353, %v2401
    %v2403 = vpop.f32.mrf.mxu0
    %v2404 = vadd.f32 %v2355, %v2403
    %2405 = vdwg.mxu0
    %2406 = vmatpush.bf16.msra.mxu0 %v1515
    %2407 = vmatpush.bf16.msra.mxu0 %v1503
    %2408 = vmatpush.bf16.msra.mxu0 %v1491
    %2409 = vmatpush.bf16.msra.mxu0 %v1479
    %2410 = vmatpush.bf16.msra.mxu0 %v1514
    %2411 = vmatpush.bf16.msra.mxu0 %v1502
    %2412 = vmatpush.bf16.msra.mxu0 %v1490
    %2413 = vmatpush.bf16.msra.mxu0 %v1478
    %2414 = vmatmul.bf16.gmra.mxu0 %v1769
    %v2415 = vpop.f32.mrf.mxu0
    %v2416 = vadd.f32 %v1644, %v2415
    %v2417 = vpop.f32.mrf.mxu0
    %v2418 = vadd.f32 %v1649, %v2417
    %2419 = vmatmul.bf16.gmra.mxu0 %v1771
    %v2420 = vpop.f32.mrf.mxu0
    %v2421 = vadd.f32 %v1654, %v2420
    %v2422 = vpop.f32.mrf.mxu0
    %v2423 = vadd.f32 %v1659, %v2422
    %2424 = vmatmul.bf16.gmra.mxu0 %v1773
    %v2425 = vpop.f32.mrf.mxu0
    %v2426 = vadd.f32 %v1664, %v2425
    %v2427 = vpop.f32.mrf.mxu0
    %v2428 = vadd.f32 %v1669, %v2427
    %2429 = vmatmul.bf16.gmra.mxu0 %v1775
    %v2430 = vpop.f32.mrf.mxu0
    %v2431 = vadd.f32 %v1674, %v2430
    %v2432 = vpop.f32.mrf.mxu0
    %v2433 = vadd.f32 %v1679, %v2432
    %2434 = vmatmul.bf16.gmra.mxu0 %v1777
    %v2435 = vpop.f32.mrf.mxu0
    %v2436 = vadd.f32 %v1684, %v2435
    %v2437 = vpop.f32.mrf.mxu0
    %v2438 = vadd.f32 %v1689, %v2437
    %2439 = vmatmul.bf16.gmra.mxu0 %v1779
    %v2440 = vpop.f32.mrf.mxu0
    %v2441 = vadd.f32 %v1694, %v2440
    %v2442 = vpop.f32.mrf.mxu0
    %v2443 = vadd.f32 %v1699, %v2442
    %2444 = vmatmul.bf16.gmra.mxu0 %v1781
    %v2445 = vpop.f32.mrf.mxu0
    %v2446 = vadd.f32 %v1704, %v2445
    %v2447 = vpop.f32.mrf.mxu0
    %v2448 = vadd.f32 %v1709, %v2447
    %2449 = vmatmul.bf16.gmra.mxu0 %v1783
    %v2450 = vpop.f32.mrf.mxu0
    %v2451 = vadd.f32 %v1714, %v2450
    %v2452 = vpop.f32.mrf.mxu0
    %v2453 = vadd.f32 %v1719, %v2452
    %2454 = vdwg.mxu0
    %2455 = vmatpush.bf16.msra.mxu0 0
    %2456 = vmatpush.bf16.msra.mxu0 0
    %2457 = vmatpush.bf16.msra.mxu0 0
    %2458 = vmatpush.bf16.msra.mxu0 0
    %2459 = vmatpush.bf16.msra.mxu0 %v1516
    %2460 = vmatpush.bf16.msra.mxu0 %v1504
    %2461 = vmatpush.bf16.msra.mxu0 %v1492
    %2462 = vmatpush.bf16.msra.mxu0 %v1480
    %2463 = vmatmul.bf16.gmra.mxu0 %v1795
    %v2464 = vpop.f32.mrf.mxu0
    %v2465 = vadd.f32 %v2416, %v2464
    %v2466 = vpop.f32.mrf.mxu0
    %v2467 = vadd.f32 %v2418, %v2466
    %2468 = vmatmul.bf16.gmra.mxu0 %v1798
    %v2469 = vpop.f32.mrf.mxu0
    %v2470 = vadd.f32 %v2421, %v2469
    %v2471 = vpop.f32.mrf.mxu0
    %v2472 = vadd.f32 %v2423, %v2471
    %2473 = vmatmul.bf16.gmra.mxu0 %v1801
    %v2474 = vpop.f32.mrf.mxu0
    %v2475 = vadd.f32 %v2426, %v2474
    %v2476 = vpop.f32.mrf.mxu0
    %v2477 = vadd.f32 %v2428, %v2476
    %2478 = vmatmul.bf16.gmra.mxu0 %v1804
    %v2479 = vpop.f32.mrf.mxu0
    %v2480 = vadd.f32 %v2431, %v2479
    %v2481 = vpop.f32.mrf.mxu0
    %v2482 = vadd.f32 %v2433, %v2481
    %2483 = vmatmul.bf16.gmra.mxu0 %v1807
    %v2484 = vpop.f32.mrf.mxu0
    %v2485 = vadd.f32 %v2436, %v2484
    %v2486 = vpop.f32.mrf.mxu0
    %v2487 = vadd.f32 %v2438, %v2486
    %2488 = vmatmul.bf16.gmra.mxu0 %v1810
    %v2489 = vpop.f32.mrf.mxu0
    %v2490 = vadd.f32 %v2441, %v2489
    %v2491 = vpop.f32.mrf.mxu0
    %v2492 = vadd.f32 %v2443, %v2491
    %2493 = vmatmul.bf16.gmra.mxu0 %v1813
    %v2494 = vpop.f32.mrf.mxu0
    %v2495 = vadd.f32 %v2446, %v2494
    %v2496 = vpop.f32.mrf.mxu0
    %v2497 = vadd.f32 %v2448, %v2496
    %2498 = vmatmul.bf16.gmra.mxu0 %v1816
    %v2499 = vpop.f32.mrf.mxu0
    %v2500 = vadd.f32 %v2451, %v2499
    %v2501 = vpop.f32.mrf.mxu0
    %v2502 = vadd.f32 %v2453, %v2501
    %2503 = vdwg.mxu0
    %2504 = vmatpush.bf16.msra.mxu0 %v1516
    %2505 = vmatpush.bf16.msra.mxu0 %v1504
    %2506 = vmatpush.bf16.msra.mxu0 %v1492
    %2507 = vmatpush.bf16.msra.mxu0 %v1480
    %2508 = vmatpush.bf16.msra.mxu0 %v1515
    %2509 = vmatpush.bf16.msra.mxu0 %v1503
    %2510 = vmatpush.bf16.msra.mxu0 %v1491
    %2511 = vmatpush.bf16.msra.mxu0 %v1479
    %2512 = vmatmul.bf16.gmra.mxu0 %v1769
    %v2513 = vpop.f32.mrf.mxu0
    %v2514 = vadd.f32 %v1644, %v2513
    %v2515 = vpop.f32.mrf.mxu0
    %v2516 = vadd.f32 %v1649, %v2515
    %2517 = vmatmul.bf16.gmra.mxu0 %v1771
    %v2518 = vpop.f32.mrf.mxu0
    %v2519 = vadd.f32 %v1654, %v2518
    %v2520 = vpop.f32.mrf.mxu0
    %v2521 = vadd.f32 %v1659, %v2520
    %2522 = vmatmul.bf16.gmra.mxu0 %v1773
    %v2523 = vpop.f32.mrf.mxu0
    %v2524 = vadd.f32 %v1664, %v2523
    %v2525 = vpop.f32.mrf.mxu0
    %v2526 = vadd.f32 %v1669, %v2525
    %2527 = vmatmul.bf16.gmra.mxu0 %v1775
    %v2528 = vpop.f32.mrf.mxu0
    %v2529 = vadd.f32 %v1674, %v2528
    %v2530 = vpop.f32.mrf.mxu0
    %v2531 = vadd.f32 %v1679, %v2530
    %2532 = vmatmul.bf16.gmra.mxu0 %v1777
    %v2533 = vpop.f32.mrf.mxu0
    %v2534 = vadd.f32 %v1684, %v2533
    %v2535 = vpop.f32.mrf.mxu0
    %v2536 = vadd.f32 %v1689, %v2535
    %2537 = vmatmul.bf16.gmra.mxu0 %v1779
    %v2538 = vpop.f32.mrf.mxu0
    %v2539 = vadd.f32 %v1694, %v2538
    %v2540 = vpop.f32.mrf.mxu0
    %v2541 = vadd.f32 %v1699, %v2540
    %2542 = vmatmul.bf16.gmra.mxu0 %v1781
    %v2543 = vpop.f32.mrf.mxu0
    %v2544 = vadd.f32 %v1704, %v2543
    %v2545 = vpop.f32.mrf.mxu0
    %v2546 = vadd.f32 %v1709, %v2545
    %2547 = vmatmul.bf16.gmra.mxu0 %v1783
    %v2548 = vpop.f32.mrf.mxu0
    %v2549 = vadd.f32 %v1714, %v2548
    %v2550 = vpop.f32.mrf.mxu0
    %v2551 = vadd.f32 %v1719, %v2550
    %2552 = vdwg.mxu0
    %2553 = vmatpush.bf16.msra.mxu0 0
    %2554 = vmatpush.bf16.msra.mxu0 0
    %2555 = vmatpush.bf16.msra.mxu0 0
    %2556 = vmatpush.bf16.msra.mxu0 0
    %2557 = vmatpush.bf16.msra.mxu0 %v1517
    %2558 = vmatpush.bf16.msra.mxu0 %v1505
    %2559 = vmatpush.bf16.msra.mxu0 %v1493
    %2560 = vmatpush.bf16.msra.mxu0 %v1481
    %2561 = vmatmul.bf16.gmra.mxu0 %v1795
    %v2562 = vpop.f32.mrf.mxu0
    %v2563 = vadd.f32 %v2514, %v2562
    %v2564 = vpop.f32.mrf.mxu0
    %v2565 = vadd.f32 %v2516, %v2564
    %2566 = vmatmul.bf16.gmra.mxu0 %v1798
    %v2567 = vpop.f32.mrf.mxu0
    %v2568 = vadd.f32 %v2519, %v2567
    %v2569 = vpop.f32.mrf.mxu0
    %v2570 = vadd.f32 %v2521, %v2569
    %2571 = vmatmul.bf16.gmra.mxu0 %v1801
    %v2572 = vpop.f32.mrf.mxu0
    %v2573 = vadd.f32 %v2524, %v2572
    %v2574 = vpop.f32.mrf.mxu0
    %v2575 = vadd.f32 %v2526, %v2574
    %2576 = vmatmul.bf16.gmra.mxu0 %v1804
    %v2577 = vpop.f32.mrf.mxu0
    %v2578 = vadd.f32 %v2529, %v2577
    %v2579 = vpop.f32.mrf.mxu0
    %v2580 = vadd.f32 %v2531, %v2579
    %2581 = vmatmul.bf16.gmra.mxu0 %v1807
    %v2582 = vpop.f32.mrf.mxu0
    %v2583 = vadd.f32 %v2534, %v2582
    %v2584 = vpop.f32.mrf.mxu0
    %v2585 = vadd.f32 %v2536, %v2584
    %2586 = vmatmul.bf16.gmra.mxu0 %v1810
    %v2587 = vpop.f32.mrf.mxu0
    %v2588 = vadd.f32 %v2539, %v2587
    %v2589 = vpop.f32.mrf.mxu0
    %v2590 = vadd.f32 %v2541, %v2589
    %2591 = vmatmul.bf16.gmra.mxu0 %v1813
    %v2592 = vpop.f32.mrf.mxu0
    %v2593 = vadd.f32 %v2544, %v2592
    %v2594 = vpop.f32.mrf.mxu0
    %v2595 = vadd.f32 %v2546, %v2594
    %2596 = vmatmul.bf16.gmra.mxu0 %v1816
    %v2597 = vpop.f32.mrf.mxu0
    %v2598 = vadd.f32 %v2549, %v2597
    %v2599 = vpop.f32.mrf.mxu0
    %v2600 = vadd.f32 %v2551, %v2599
    %2601 = vdwg.mxu0
    %2602 = vmatpush.bf16.msra.mxu0 %v1517
    %2603 = vmatpush.bf16.msra.mxu0 %v1505
    %2604 = vmatpush.bf16.msra.mxu0 %v1493
    %2605 = vmatpush.bf16.msra.mxu0 %v1481
    %2606 = vmatpush.bf16.msra.mxu0 %v1516
    %2607 = vmatpush.bf16.msra.mxu0 %v1504
    %2608 = vmatpush.bf16.msra.mxu0 %v1492
    %2609 = vmatpush.bf16.msra.mxu0 %v1480
    %2610 = vmatmul.bf16.gmra.mxu0 %v1769
    %v2611 = vpop.f32.mrf.mxu0
    %v2612 = vadd.f32 %v1644, %v2611
    %v2613 = vpop.f32.mrf.mxu0
    %v2614 = vadd.f32 %v1649, %v2613
    %2615 = vmatmul.bf16.gmra.mxu0 %v1771
    %v2616 = vpop.f32.mrf.mxu0
    %v2617 = vadd.f32 %v1654, %v2616
    %v2618 = vpop.f32.mrf.mxu0
    %v2619 = vadd.f32 %v1659, %v2618
    %2620 = vmatmul.bf16.gmra.mxu0 %v1773
    %v2621 = vpop.f32.mrf.mxu0
    %v2622 = vadd.f32 %v1664, %v2621
    %v2623 = vpop.f32.mrf.mxu0
    %v2624 = vadd.f32 %v1669, %v2623
    %2625 = vmatmul.bf16.gmra.mxu0 %v1775
    %v2626 = vpop.f32.mrf.mxu0
    %v2627 = vadd.f32 %v1674, %v2626
    %v2628 = vpop.f32.mrf.mxu0
    %v2629 = vadd.f32 %v1679, %v2628
    %2630 = vmatmul.bf16.gmra.mxu0 %v1777
    %v2631 = vpop.f32.mrf.mxu0
    %v2632 = vadd.f32 %v1684, %v2631
    %v2633 = vpop.f32.mrf.mxu0
    %v2634 = vadd.f32 %v1689, %v2633
    %2635 = vmatmul.bf16.gmra.mxu0 %v1779
    %v2636 = vpop.f32.mrf.mxu0
    %v2637 = vadd.f32 %v1694, %v2636
    %v2638 = vpop.f32.mrf.mxu0
    %v2639 = vadd.f32 %v1699, %v2638
    %2640 = vmatmul.bf16.gmra.mxu0 %v1781
    %v2641 = vpop.f32.mrf.mxu0
    %v2642 = vadd.f32 %v1704, %v2641
    %v2643 = vpop.f32.mrf.mxu0
    %v2644 = vadd.f32 %v1709, %v2643
    %2645 = vmatmul.bf16.gmra.mxu0 %v1783
    %v2646 = vpop.f32.mrf.mxu0
    %v2647 = vadd.f32 %v1714, %v2646
    %v2648 = vpop.f32.mrf.mxu0
    %v2649 = vadd.f32 %v1719, %v2648
    %2650 = vdwg.mxu0
    %2651 = vmatpush.bf16.msra.mxu0 0
    %2652 = vmatpush.bf16.msra.mxu0 0
    %2653 = vmatpush.bf16.msra.mxu0 0
    %2654 = vmatpush.bf16.msra.mxu0 0
    %2655 = vmatpush.bf16.msra.mxu0 %v1518
    %2656 = vmatpush.bf16.msra.mxu0 %v1506
    %2657 = vmatpush.bf16.msra.mxu0 %v1494
    %2658 = vmatpush.bf16.msra.mxu0 %v1482
    %2659 = vmatmul.bf16.gmra.mxu0 %v1795
    %v2660 = vpop.f32.mrf.mxu0
    %v2661 = vadd.f32 %v2612, %v2660
    %v2662 = vpop.f32.mrf.mxu0
    %v2663 = vadd.f32 %v2614, %v2662
    %2664 = vmatmul.bf16.gmra.mxu0 %v1798
    %v2665 = vpop.f32.mrf.mxu0
    %v2666 = vadd.f32 %v2617, %v2665
    %v2667 = vpop.f32.mrf.mxu0
    %v2668 = vadd.f32 %v2619, %v2667
    %2669 = vmatmul.bf16.gmra.mxu0 %v1801
    %v2670 = vpop.f32.mrf.mxu0
    %v2671 = vadd.f32 %v2622, %v2670
    %v2672 = vpop.f32.mrf.mxu0
    %v2673 = vadd.f32 %v2624, %v2672
    %2674 = vmatmul.bf16.gmra.mxu0 %v1804
    %v2675 = vpop.f32.mrf.mxu0
    %v2676 = vadd.f32 %v2627, %v2675
    %v2677 = vpop.f32.mrf.mxu0
    %v2678 = vadd.f32 %v2629, %v2677
    %2679 = vmatmul.bf16.gmra.mxu0 %v1807
    %v2680 = vpop.f32.mrf.mxu0
    %v2681 = vadd.f32 %v2632, %v2680
    %v2682 = vpop.f32.mrf.mxu0
    %v2683 = vadd.f32 %v2634, %v2682
    %2684 = vmatmul.bf16.gmra.mxu0 %v1810
    %v2685 = vpop.f32.mrf.mxu0
    %v2686 = vadd.f32 %v2637, %v2685
    %v2687 = vpop.f32.mrf.mxu0
    %v2688 = vadd.f32 %v2639, %v2687
    %2689 = vmatmul.bf16.gmra.mxu0 %v1813
    %v2690 = vpop.f32.mrf.mxu0
    %v2691 = vadd.f32 %v2642, %v2690
    %v2692 = vpop.f32.mrf.mxu0
    %v2693 = vadd.f32 %v2644, %v2692
    %2694 = vmatmul.bf16.gmra.mxu0 %v1816
    %v2695 = vpop.f32.mrf.mxu0
    %v2696 = vadd.f32 %v2647, %v2695
    %v2697 = vpop.f32.mrf.mxu0
    %v2698 = vadd.f32 %v2649, %v2697
    %2699 = vdwg.mxu0
    %2700 = vmatpush.bf16.msra.mxu0 %v1518
    %2701 = vmatpush.bf16.msra.mxu0 %v1506
    %2702 = vmatpush.bf16.msra.mxu0 %v1494
    %2703 = vmatpush.bf16.msra.mxu0 %v1482
    %2704 = vmatpush.bf16.msra.mxu0 %v1517
    %2705 = vmatpush.bf16.msra.mxu0 %v1505
    %2706 = vmatpush.bf16.msra.mxu0 %v1493
    %2707 = vmatpush.bf16.msra.mxu0 %v1481
    %2708 = vmatmul.bf16.gmra.mxu0 %v1769
    %v2709 = vpop.f32.mrf.mxu0
    %v2710 = vadd.f32 %v1644, %v2709
    %v2711 = vpop.f32.mrf.mxu0
    %v2712 = vadd.f32 %v1649, %v2711
    %2713 = vmatmul.bf16.gmra.mxu0 %v1771
    %v2714 = vpop.f32.mrf.mxu0
    %v2715 = vadd.f32 %v1654, %v2714
    %v2716 = vpop.f32.mrf.mxu0
    %v2717 = vadd.f32 %v1659, %v2716
    %2718 = vmatmul.bf16.gmra.mxu0 %v1773
    %v2719 = vpop.f32.mrf.mxu0
    %v2720 = vadd.f32 %v1664, %v2719
    %v2721 = vpop.f32.mrf.mxu0
    %v2722 = vadd.f32 %v1669, %v2721
    %2723 = vmatmul.bf16.gmra.mxu0 %v1775
    %v2724 = vpop.f32.mrf.mxu0
    %v2725 = vadd.f32 %v1674, %v2724
    %v2726 = vpop.f32.mrf.mxu0
    %v2727 = vadd.f32 %v1679, %v2726
    %2728 = vmatmul.bf16.gmra.mxu0 %v1777
    %v2729 = vpop.f32.mrf.mxu0
    %v2730 = vadd.f32 %v1684, %v2729
    %v2731 = vpop.f32.mrf.mxu0
    %v2732 = vadd.f32 %v1689, %v2731
    %2733 = vmatmul.bf16.gmra.mxu0 %v1779
    %v2734 = vpop.f32.mrf.mxu0
    %v2735 = vadd.f32 %v1694, %v2734
    %v2736 = vpop.f32.mrf.mxu0
    %v2737 = vadd.f32 %v1699, %v2736
    %2738 = vmatmul.bf16.gmra.mxu0 %v1781
    %v2739 = vpop.f32.mrf.mxu0
    %v2740 = vadd.f32 %v1704, %v2739
    %v2741 = vpop.f32.mrf.mxu0
    %v2742 = vadd.f32 %v1709, %v2741
    %2743 = vmatmul.bf16.gmra.mxu0 %v1783
    %v2744 = vpop.f32.mrf.mxu0
    %v2745 = vadd.f32 %v1714, %v2744
    %v2746 = vpop.f32.mrf.mxu0
    %v2747 = vadd.f32 %v1719, %v2746
    %2748 = vdwg.mxu0
    %2749 = vmatpush.bf16.msra.mxu0 0
    %2750 = vmatpush.bf16.msra.mxu0 0
    %2751 = vmatpush.bf16.msra.mxu0 0
    %2752 = vmatpush.bf16.msra.mxu0 0
    %2753 = vmatpush.bf16.msra.mxu0 %v1519
    %2754 = vmatpush.bf16.msra.mxu0 %v1507
    %2755 = vmatpush.bf16.msra.mxu0 %v1495
    %2756 = vmatpush.bf16.msra.mxu0 %v1483
    %2757 = vmatmul.bf16.gmra.mxu0 %v1795
    %v2758 = vpop.f32.mrf.mxu0
    %v2759 = vadd.f32 %v2710, %v2758
    %v2760 = vpop.f32.mrf.mxu0
    %v2761 = vadd.f32 %v2712, %v2760
    %2762 = vmatmul.bf16.gmra.mxu0 %v1798
    %v2763 = vpop.f32.mrf.mxu0
    %v2764 = vadd.f32 %v2715, %v2763
    %v2765 = vpop.f32.mrf.mxu0
    %v2766 = vadd.f32 %v2717, %v2765
    %2767 = vmatmul.bf16.gmra.mxu0 %v1801
    %v2768 = vpop.f32.mrf.mxu0
    %v2769 = vadd.f32 %v2720, %v2768
    %v2770 = vpop.f32.mrf.mxu0
    %v2771 = vadd.f32 %v2722, %v2770
    %2772 = vmatmul.bf16.gmra.mxu0 %v1804
    %v2773 = vpop.f32.mrf.mxu0
    %v2774 = vadd.f32 %v2725, %v2773
    %v2775 = vpop.f32.mrf.mxu0
    %v2776 = vadd.f32 %v2727, %v2775
    %2777 = vmatmul.bf16.gmra.mxu0 %v1807
    %v2778 = vpop.f32.mrf.mxu0
    %v2779 = vadd.f32 %v2730, %v2778
    %v2780 = vpop.f32.mrf.mxu0
    %v2781 = vadd.f32 %v2732, %v2780
    %2782 = vmatmul.bf16.gmra.mxu0 %v1810
    %v2783 = vpop.f32.mrf.mxu0
    %v2784 = vadd.f32 %v2735, %v2783
    %v2785 = vpop.f32.mrf.mxu0
    %v2786 = vadd.f32 %v2737, %v2785
    %2787 = vmatmul.bf16.gmra.mxu0 %v1813
    %v2788 = vpop.f32.mrf.mxu0
    %v2789 = vadd.f32 %v2740, %v2788
    %v2790 = vpop.f32.mrf.mxu0
    %v2791 = vadd.f32 %v2742, %v2790
    %2792 = vmatmul.bf16.gmra.mxu0 %v1816
    %v2793 = vpop.f32.mrf.mxu0
    %v2794 = vadd.f32 %v2745, %v2793
    %v2795 = vpop.f32.mrf.mxu0
    %v2796 = vadd.f32 %v2747, %v2795
    %2797 = vdwg.mxu0
    %2798 = vmatpush.bf16.msra.mxu0 %v1519
    %2799 = vmatpush.bf16.msra.mxu0 %v1507
    %2800 = vmatpush.bf16.msra.mxu0 %v1495
    %2801 = vmatpush.bf16.msra.mxu0 %v1483
    %2802 = vmatpush.bf16.msra.mxu0 %v1518
    %2803 = vmatpush.bf16.msra.mxu0 %v1506
    %2804 = vmatpush.bf16.msra.mxu0 %v1494
    %2805 = vmatpush.bf16.msra.mxu0 %v1482
    %2806 = vmatmul.bf16.gmra.mxu0 %v1769
    %v2807 = vpop.f32.mrf.mxu0
    %v2808 = vadd.f32 %v1644, %v2807
    %v2809 = vpop.f32.mrf.mxu0
    %v2810 = vadd.f32 %v1649, %v2809
    %2811 = vmatmul.bf16.gmra.mxu0 %v1771
    %v2812 = vpop.f32.mrf.mxu0
    %v2813 = vadd.f32 %v1654, %v2812
    %v2814 = vpop.f32.mrf.mxu0
    %v2815 = vadd.f32 %v1659, %v2814
    %2816 = vmatmul.bf16.gmra.mxu0 %v1773
    %v2817 = vpop.f32.mrf.mxu0
    %v2818 = vadd.f32 %v1664, %v2817
    %v2819 = vpop.f32.mrf.mxu0
    %v2820 = vadd.f32 %v1669, %v2819
    %2821 = vmatmul.bf16.gmra.mxu0 %v1775
    %v2822 = vpop.f32.mrf.mxu0
    %v2823 = vadd.f32 %v1674, %v2822
    %v2824 = vpop.f32.mrf.mxu0
    %v2825 = vadd.f32 %v1679, %v2824
    %2826 = vmatmul.bf16.gmra.mxu0 %v1777
    %v2827 = vpop.f32.mrf.mxu0
    %v2828 = vadd.f32 %v1684, %v2827
    %v2829 = vpop.f32.mrf.mxu0
    %v2830 = vadd.f32 %v1689, %v2829
    %2831 = vmatmul.bf16.gmra.mxu0 %v1779
    %v2832 = vpop.f32.mrf.mxu0
    %v2833 = vadd.f32 %v1694, %v2832
    %v2834 = vpop.f32.mrf.mxu0
    %v2835 = vadd.f32 %v1699, %v2834
    %2836 = vmatmul.bf16.gmra.mxu0 %v1781
    %v2837 = vpop.f32.mrf.mxu0
    %v2838 = vadd.f32 %v1704, %v2837
    %v2839 = vpop.f32.mrf.mxu0
    %v2840 = vadd.f32 %v1709, %v2839
    %2841 = vmatmul.bf16.gmra.mxu0 %v1783
    %v2842 = vpop.f32.mrf.mxu0
    %v2843 = vadd.f32 %v1714, %v2842
    %v2844 = vpop.f32.mrf.mxu0
    %v2845 = vadd.f32 %v1719, %v2844
    %2846 = vdwg.mxu0
    %2847 = vmatpush.bf16.msra.mxu0 0
    %2848 = vmatpush.bf16.msra.mxu0 0
    %2849 = vmatpush.bf16.msra.mxu0 0
    %2850 = vmatpush.bf16.msra.mxu0 0
    %2851 = vmatpush.bf16.msra.mxu0 %v1520
    %2852 = vmatpush.bf16.msra.mxu0 %v1508
    %2853 = vmatpush.bf16.msra.mxu0 %v1496
    %2854 = vmatpush.bf16.msra.mxu0 %v1484
    %2855 = vmatmul.bf16.gmra.mxu0 %v1795
    %v2856 = vpop.f32.mrf.mxu0
    %v2857 = vadd.f32 %v2808, %v2856
    %v2858 = vpop.f32.mrf.mxu0
    %v2859 = vadd.f32 %v2810, %v2858
    %2860 = vmatmul.bf16.gmra.mxu0 %v1798
    %v2861 = vpop.f32.mrf.mxu0
    %v2862 = vadd.f32 %v2813, %v2861
    %v2863 = vpop.f32.mrf.mxu0
    %v2864 = vadd.f32 %v2815, %v2863
    %2865 = vmatmul.bf16.gmra.mxu0 %v1801
    %v2866 = vpop.f32.mrf.mxu0
    %v2867 = vadd.f32 %v2818, %v2866
    %v2868 = vpop.f32.mrf.mxu0
    %v2869 = vadd.f32 %v2820, %v2868
    %2870 = vmatmul.bf16.gmra.mxu0 %v1804
    %v2871 = vpop.f32.mrf.mxu0
    %v2872 = vadd.f32 %v2823, %v2871
    %v2873 = vpop.f32.mrf.mxu0
    %v2874 = vadd.f32 %v2825, %v2873
    %2875 = vmatmul.bf16.gmra.mxu0 %v1807
    %v2876 = vpop.f32.mrf.mxu0
    %v2877 = vadd.f32 %v2828, %v2876
    %v2878 = vpop.f32.mrf.mxu0
    %v2879 = vadd.f32 %v2830, %v2878
    %2880 = vmatmul.bf16.gmra.mxu0 %v1810
    %v2881 = vpop.f32.mrf.mxu0
    %v2882 = vadd.f32 %v2833, %v2881
    %v2883 = vpop.f32.mrf.mxu0
    %v2884 = vadd.f32 %v2835, %v2883
    %2885 = vmatmul.bf16.gmra.mxu0 %v1813
    %v2886 = vpop.f32.mrf.mxu0
    %v2887 = vadd.f32 %v2838, %v2886
    %v2888 = vpop.f32.mrf.mxu0
    %v2889 = vadd.f32 %v2840, %v2888
    %2890 = vmatmul.bf16.gmra.mxu0 %v1816
    %v2891 = vpop.f32.mrf.mxu0
    %v2892 = vadd.f32 %v2843, %v2891
    %v2893 = vpop.f32.mrf.mxu0
    %v2894 = vadd.f32 %v2845, %v2893
    %2895 = vdwg.mxu0
    %2896 = vmatpush.bf16.msra.mxu0 %v1520
    %2897 = vmatpush.bf16.msra.mxu0 %v1508
    %2898 = vmatpush.bf16.msra.mxu0 %v1496
    %2899 = vmatpush.bf16.msra.mxu0 %v1484
    %2900 = vmatpush.bf16.msra.mxu0 %v1519
    %2901 = vmatpush.bf16.msra.mxu0 %v1507
    %2902 = vmatpush.bf16.msra.mxu0 %v1495
    %2903 = vmatpush.bf16.msra.mxu0 %v1483
    %2904 = vmatmul.bf16.gmra.mxu0 %v1769
    %v2905 = vpop.f32.mrf.mxu0
    %v2906 = vadd.f32 %v1644, %v2905
    %v2907 = vpop.f32.mrf.mxu0
    %v2908 = vadd.f32 %v1649, %v2907
    %2909 = vmatmul.bf16.gmra.mxu0 %v1771
    %v2910 = vpop.f32.mrf.mxu0
    %v2911 = vadd.f32 %v1654, %v2910
    %v2912 = vpop.f32.mrf.mxu0
    %v2913 = vadd.f32 %v1659, %v2912
    %2914 = vmatmul.bf16.gmra.mxu0 %v1773
    %v2915 = vpop.f32.mrf.mxu0
    %v2916 = vadd.f32 %v1664, %v2915
    %v2917 = vpop.f32.mrf.mxu0
    %v2918 = vadd.f32 %v1669, %v2917
    %2919 = vmatmul.bf16.gmra.mxu0 %v1775
    %v2920 = vpop.f32.mrf.mxu0
    %v2921 = vadd.f32 %v1674, %v2920
    %v2922 = vpop.f32.mrf.mxu0
    %v2923 = vadd.f32 %v1679, %v2922
    %2924 = vmatmul.bf16.gmra.mxu0 %v1777
    %v2925 = vpop.f32.mrf.mxu0
    %v2926 = vadd.f32 %v1684, %v2925
    %v2927 = vpop.f32.mrf.mxu0
    %v2928 = vadd.f32 %v1689, %v2927
    %2929 = vmatmul.bf16.gmra.mxu0 %v1779
    %v2930 = vpop.f32.mrf.mxu0
    %v2931 = vadd.f32 %v1694, %v2930
    %v2932 = vpop.f32.mrf.mxu0
    %v2933 = vadd.f32 %v1699, %v2932
    %2934 = vmatmul.bf16.gmra.mxu0 %v1781
    %v2935 = vpop.f32.mrf.mxu0
    %v2936 = vadd.f32 %v1704, %v2935
    %v2937 = vpop.f32.mrf.mxu0
    %v2938 = vadd.f32 %v1709, %v2937
    %2939 = vmatmul.bf16.gmra.mxu0 %v1783
    %v2940 = vpop.f32.mrf.mxu0
    %v2941 = vadd.f32 %v1714, %v2940
    %v2942 = vpop.f32.mrf.mxu0
    %v2943 = vadd.f32 %v1719, %v2942
    %2944 = vdwg.mxu0
    %2945 = vmatpush.bf16.msra.mxu0 0
    %2946 = vmatpush.bf16.msra.mxu0 0
    %2947 = vmatpush.bf16.msra.mxu0 0
    %2948 = vmatpush.bf16.msra.mxu0 0
    %2949 = vmatpush.bf16.msra.mxu0 %v1599
    %2950 = vmatpush.bf16.msra.mxu0 %v1597
    %2951 = vmatpush.bf16.msra.mxu0 %v1595
    %2952 = vmatpush.bf16.msra.mxu0 %v1593
    %2953 = vmatmul.bf16.gmra.mxu0 %v1795
    %v2954 = vpop.f32.mrf.mxu0
    %v2955 = vadd.f32 %v2906, %v2954
    %v2956 = vpop.f32.mrf.mxu0
    %v2957 = vadd.f32 %v2908, %v2956
    %2958 = vmatmul.bf16.gmra.mxu0 %v1798
    %v2959 = vpop.f32.mrf.mxu0
    %v2960 = vadd.f32 %v2911, %v2959
    %v2961 = vpop.f32.mrf.mxu0
    %v2962 = vadd.f32 %v2913, %v2961
    %2963 = vmatmul.bf16.gmra.mxu0 %v1801
    %v2964 = vpop.f32.mrf.mxu0
    %v2965 = vadd.f32 %v2916, %v2964
    %v2966 = vpop.f32.mrf.mxu0
    %v2967 = vadd.f32 %v2918, %v2966
    %2968 = vmatmul.bf16.gmra.mxu0 %v1804
    %v2969 = vpop.f32.mrf.mxu0
    %v2970 = vadd.f32 %v2921, %v2969
    %v2971 = vpop.f32.mrf.mxu0
    %v2972 = vadd.f32 %v2923, %v2971
    %2973 = vmatmul.bf16.gmra.mxu0 %v1807
    %v2974 = vpop.f32.mrf.mxu0
    %v2975 = vadd.f32 %v2926, %v2974
    %v2976 = vpop.f32.mrf.mxu0
    %v2977 = vadd.f32 %v2928, %v2976
    %2978 = vmatmul.bf16.gmra.mxu0 %v1810
    %v2979 = vpop.f32.mrf.mxu0
    %v2980 = vadd.f32 %v2931, %v2979
    %v2981 = vpop.f32.mrf.mxu0
    %v2982 = vadd.f32 %v2933, %v2981
    %2983 = vmatmul.bf16.gmra.mxu0 %v1813
    %v2984 = vpop.f32.mrf.mxu0
    %v2985 = vadd.f32 %v2936, %v2984
    %v2986 = vpop.f32.mrf.mxu0
    %v2987 = vadd.f32 %v2938, %v2986
    %2988 = vmatmul.bf16.gmra.mxu0 %v1816
    %v2989 = vpop.f32.mrf.mxu0
    %v2990 = vadd.f32 %v2941, %v2989
    %v2991 = vpop.f32.mrf.mxu0
    %v2992 = vadd.f32 %v2943, %v2991
    %2993 = vdwg.mxu0
    %2994 = vmatpush.bf16.msra.mxu0 %v1599
    %2995 = vmatpush.bf16.msra.mxu0 %v1597
    %2996 = vmatpush.bf16.msra.mxu0 %v1595
    %2997 = vmatpush.bf16.msra.mxu0 %v1593
    %2998 = vmatpush.bf16.msra.mxu0 %v1520
    %2999 = vmatpush.bf16.msra.mxu0 %v1508
    %3000 = vmatpush.bf16.msra.mxu0 %v1496
    %3001 = vmatpush.bf16.msra.mxu0 %v1484
    %3002 = vmatmul.bf16.gmra.mxu0 %v1769
    %v3003 = vpop.f32.mrf.mxu0
    %v3004 = vadd.f32 %v1644, %v3003
    %v3005 = vpop.f32.mrf.mxu0
    %v3006 = vadd.f32 %v1649, %v3005
    %3007 = vmatmul.bf16.gmra.mxu0 %v1771
    %v3008 = vpop.f32.mrf.mxu0
    %v3009 = vadd.f32 %v1654, %v3008
    %v3010 = vpop.f32.mrf.mxu0
    %v3011 = vadd.f32 %v1659, %v3010
    %3012 = vmatmul.bf16.gmra.mxu0 %v1773
    %v3013 = vpop.f32.mrf.mxu0
    %v3014 = vadd.f32 %v1664, %v3013
    %v3015 = vpop.f32.mrf.mxu0
    %v3016 = vadd.f32 %v1669, %v3015
    %3017 = vmatmul.bf16.gmra.mxu0 %v1775
    %v3018 = vpop.f32.mrf.mxu0
    %v3019 = vadd.f32 %v1674, %v3018
    %v3020 = vpop.f32.mrf.mxu0
    %v3021 = vadd.f32 %v1679, %v3020
    %3022 = vmatmul.bf16.gmra.mxu0 %v1777
    %v3023 = vpop.f32.mrf.mxu0
    %v3024 = vadd.f32 %v1684, %v3023
    %v3025 = vpop.f32.mrf.mxu0
    %v3026 = vadd.f32 %v1689, %v3025
    %3027 = vmatmul.bf16.gmra.mxu0 %v1779
    %v3028 = vpop.f32.mrf.mxu0
    %v3029 = vadd.f32 %v1694, %v3028
    %v3030 = vpop.f32.mrf.mxu0
    %v3031 = vadd.f32 %v1699, %v3030
    %3032 = vmatmul.bf16.gmra.mxu0 %v1781
    %v3033 = vpop.f32.mrf.mxu0
    %v3034 = vadd.f32 %v1704, %v3033
    %v3035 = vpop.f32.mrf.mxu0
    %v3036 = vadd.f32 %v1709, %v3035
    %3037 = vmatmul.bf16.gmra.mxu0 %v1783
    %v3038 = vpop.f32.mrf.mxu0
    %v3039 = vadd.f32 %v1714, %v3038
    %v3040 = vpop.f32.mrf.mxu0
    %v3041 = vadd.f32 %v1719, %v3040
    %3042 = vdwg.mxu0
    %3043 = vmatpush.bf16.msra.mxu0 0
    %3044 = vmatpush.bf16.msra.mxu0 0
    %3045 = vmatpush.bf16.msra.mxu0 0
    %3046 = vmatpush.bf16.msra.mxu0 0
    %3047 = vmatpush.bf16.msra.mxu0 %v1600
    %3048 = vmatpush.bf16.msra.mxu0 %v1598
    %3049 = vmatpush.bf16.msra.mxu0 %v1596
    %3050 = vmatpush.bf16.msra.mxu0 %v1594
    %3051 = vmatmul.bf16.gmra.mxu0 %v1795
    %v3052 = vpop.f32.mrf.mxu0
    %v3053 = vadd.f32 %v3004, %v3052
    %v3054 = vpop.f32.mrf.mxu0
    %v3055 = vadd.f32 %v3006, %v3054
    %3056 = vmatmul.bf16.gmra.mxu0 %v1798
    %v3057 = vpop.f32.mrf.mxu0
    %v3058 = vadd.f32 %v3009, %v3057
    %v3059 = vpop.f32.mrf.mxu0
    %v3060 = vadd.f32 %v3011, %v3059
    %3061 = vmatmul.bf16.gmra.mxu0 %v1801
    %v3062 = vpop.f32.mrf.mxu0
    %v3063 = vadd.f32 %v3014, %v3062
    %v3064 = vpop.f32.mrf.mxu0
    %v3065 = vadd.f32 %v3016, %v3064
    %3066 = vmatmul.bf16.gmra.mxu0 %v1804
    %v3067 = vpop.f32.mrf.mxu0
    %v3068 = vadd.f32 %v3019, %v3067
    %v3069 = vpop.f32.mrf.mxu0
    %v3070 = vadd.f32 %v3021, %v3069
    %3071 = vmatmul.bf16.gmra.mxu0 %v1807
    %v3072 = vpop.f32.mrf.mxu0
    %v3073 = vadd.f32 %v3024, %v3072
    %v3074 = vpop.f32.mrf.mxu0
    %v3075 = vadd.f32 %v3026, %v3074
    %3076 = vmatmul.bf16.gmra.mxu0 %v1810
    %v3077 = vpop.f32.mrf.mxu0
    %v3078 = vadd.f32 %v3029, %v3077
    %v3079 = vpop.f32.mrf.mxu0
    %v3080 = vadd.f32 %v3031, %v3079
    %3081 = vmatmul.bf16.gmra.mxu0 %v1813
    %v3082 = vpop.f32.mrf.mxu0
    %v3083 = vadd.f32 %v3034, %v3082
    %v3084 = vpop.f32.mrf.mxu0
    %v3085 = vadd.f32 %v3036, %v3084
    %3086 = vmatmul.bf16.gmra.mxu0 %v1816
    %v3087 = vpop.f32.mrf.mxu0
    %v3088 = vadd.f32 %v3039, %v3087
    %v3089 = vpop.f32.mrf.mxu0
    %v3090 = vadd.f32 %v3041, %v3089
    %3091 = vdwg.mxu0
    %v3092 = vmax.f32 %v1877, 0.0
    %v3093 = vmax.f32 %v1975, 0.0
    %v3094 = vmax.f32 %v2073, 0.0
    %v3095 = vmax.f32 %v2171, 0.0
    %v3096 = vmax.f32 %v2269, 0.0
    %v3097 = vmax.f32 %v2367, 0.0
    %v3098 = vmax.f32 %v2465, 0.0
    %v3099 = vmax.f32 %v2563, 0.0
    %v3100 = vmax.f32 %v2661, 0.0
    %v3101 = vmax.f32 %v2759, 0.0
    %v3102 = vmax.f32 %v2857, 0.0
    %v3103 = vmax.f32 %v2955, 0.0
    %v3104 = vmax.f32 %v3053, 0.0
    %v3105 = vmax.f32 %v1879, 0.0
    %v3106 = vmax.f32 %v1977, 0.0
    %v3107 = vmax.f32 %v2075, 0.0
    %v3108 = vmax.f32 %v2173, 0.0
    %v3109 = vmax.f32 %v2271, 0.0
    %v3110 = vmax.f32 %v2369, 0.0
    %v3111 = vmax.f32 %v2467, 0.0
    %v3112 = vmax.f32 %v2565, 0.0
    %v3113 = vmax.f32 %v2663, 0.0
    %v3114 = vmax.f32 %v2761, 0.0
    %v3115 = vmax.f32 %v2859, 0.0
    %v3116 = vmax.f32 %v2957, 0.0
    %v3117 = vmax.f32 %v3055, 0.0
    %v3118 = vmax.f32 %v1882, 0.0
    %v3119 = vmax.f32 %v1980, 0.0
    %v3120 = vmax.f32 %v2078, 0.0
    %v3121 = vmax.f32 %v2176, 0.0
    %v3122 = vmax.f32 %v2274, 0.0
    %v3123 = vmax.f32 %v2372, 0.0
    %v3124 = vmax.f32 %v2470, 0.0
    %v3125 = vmax.f32 %v2568, 0.0
    %v3126 = vmax.f32 %v2666, 0.0
    %v3127 = vmax.f32 %v2764, 0.0
    %v3128 = vmax.f32 %v2862, 0.0
    %v3129 = vmax.f32 %v2960, 0.0
    %v3130 = vmax.f32 %v3058, 0.0
    %v3131 = vmax.f32 %v1884, 0.0
    %v3132 = vmax.f32 %v1982, 0.0
    %v3133 = vmax.f32 %v2080, 0.0
    %v3134 = vmax.f32 %v2178, 0.0
    %v3135 = vmax.f32 %v2276, 0.0
    %v3136 = vmax.f32 %v2374, 0.0
    %v3137 = vmax.f32 %v2472, 0.0
    %v3138 = vmax.f32 %v2570, 0.0
    %v3139 = vmax.f32 %v2668, 0.0
    %v3140 = vmax.f32 %v2766, 0.0
    %v3141 = vmax.f32 %v2864, 0.0
    %v3142 = vmax.f32 %v2962, 0.0
    %v3143 = vmax.f32 %v3060, 0.0
    %v3144 = vmax.f32 %v1887, 0.0
    %v3145 = vmax.f32 %v1985, 0.0
    %v3146 = vmax.f32 %v2083, 0.0
    %v3147 = vmax.f32 %v2181, 0.0
    %v3148 = vmax.f32 %v2279, 0.0
    %v3149 = vmax.f32 %v2377, 0.0
    %v3150 = vmax.f32 %v2475, 0.0
    %v3151 = vmax.f32 %v2573, 0.0
    %v3152 = vmax.f32 %v2671, 0.0
    %v3153 = vmax.f32 %v2769, 0.0
    %v3154 = vmax.f32 %v2867, 0.0
    %v3155 = vmax.f32 %v2965, 0.0
    %v3156 = vmax.f32 %v3063, 0.0
    %v3157 = vmax.f32 %v1889, 0.0
    %v3158 = vmax.f32 %v1987, 0.0
    %v3159 = vmax.f32 %v2085, 0.0
    %v3160 = vmax.f32 %v2183, 0.0
    %v3161 = vmax.f32 %v2281, 0.0
    %v3162 = vmax.f32 %v2379, 0.0
    %v3163 = vmax.f32 %v2477, 0.0
    %v3164 = vmax.f32 %v2575, 0.0
    %v3165 = vmax.f32 %v2673, 0.0
    %v3166 = vmax.f32 %v2771, 0.0
    %v3167 = vmax.f32 %v2869, 0.0
    %v3168 = vmax.f32 %v2967, 0.0
    %v3169 = vmax.f32 %v3065, 0.0
    %v3170 = vmax.f32 %v1892, 0.0
    %v3171 = vmax.f32 %v1990, 0.0
    %v3172 = vmax.f32 %v2088, 0.0
    %v3173 = vmax.f32 %v2186, 0.0
    %v3174 = vmax.f32 %v2284, 0.0
    %v3175 = vmax.f32 %v2382, 0.0
    %v3176 = vmax.f32 %v2480, 0.0
    %v3177 = vmax.f32 %v2578, 0.0
    %v3178 = vmax.f32 %v2676, 0.0
    %v3179 = vmax.f32 %v2774, 0.0
    %v3180 = vmax.f32 %v2872, 0.0
    %v3181 = vmax.f32 %v2970, 0.0
    %v3182 = vmax.f32 %v3068, 0.0
    %v3183 = vmax.f32 %v1894, 0.0
    %v3184 = vmax.f32 %v1992, 0.0
    %v3185 = vmax.f32 %v2090, 0.0
    %v3186 = vmax.f32 %v2188, 0.0
    %v3187 = vmax.f32 %v2286, 0.0
    %v3188 = vmax.f32 %v2384, 0.0
    %v3189 = vmax.f32 %v2482, 0.0
    %v3190 = vmax.f32 %v2580, 0.0
    %v3191 = vmax.f32 %v2678, 0.0
    %v3192 = vmax.f32 %v2776, 0.0
    %v3193 = vmax.f32 %v2874, 0.0
    %v3194 = vmax.f32 %v2972, 0.0
    %v3195 = vmax.f32 %v3070, 0.0
    %v3196 = vmax.f32 %v1897, 0.0
    %v3197 = vmax.f32 %v1995, 0.0
    %v3198 = vmax.f32 %v2093, 0.0
    %v3199 = vmax.f32 %v2191, 0.0
    %v3200 = vmax.f32 %v2289, 0.0
    %v3201 = vmax.f32 %v2387, 0.0
    %v3202 = vmax.f32 %v2485, 0.0
    %v3203 = vmax.f32 %v2583, 0.0
    %v3204 = vmax.f32 %v2681, 0.0
    %v3205 = vmax.f32 %v2779, 0.0
    %v3206 = vmax.f32 %v2877, 0.0
    %v3207 = vmax.f32 %v2975, 0.0
    %v3208 = vmax.f32 %v3073, 0.0
    %v3209 = vmax.f32 %v1899, 0.0
    %v3210 = vmax.f32 %v1997, 0.0
    %v3211 = vmax.f32 %v2095, 0.0
    %v3212 = vmax.f32 %v2193, 0.0
    %v3213 = vmax.f32 %v2291, 0.0
    %v3214 = vmax.f32 %v2389, 0.0
    %v3215 = vmax.f32 %v2487, 0.0
    %v3216 = vmax.f32 %v2585, 0.0
    %v3217 = vmax.f32 %v2683, 0.0
    %v3218 = vmax.f32 %v2781, 0.0
    %v3219 = vmax.f32 %v2879, 0.0
    %v3220 = vmax.f32 %v2977, 0.0
    %v3221 = vmax.f32 %v3075, 0.0
    %v3222 = vmax.f32 %v1902, 0.0
    %v3223 = vmax.f32 %v2000, 0.0
    %v3224 = vmax.f32 %v2098, 0.0
    %v3225 = vmax.f32 %v2196, 0.0
    %v3226 = vmax.f32 %v2294, 0.0
    %v3227 = vmax.f32 %v2392, 0.0
    %v3228 = vmax.f32 %v2490, 0.0
    %v3229 = vmax.f32 %v2588, 0.0
    %v3230 = vmax.f32 %v2686, 0.0
    %v3231 = vmax.f32 %v2784, 0.0
    %v3232 = vmax.f32 %v2882, 0.0
    %v3233 = vmax.f32 %v2980, 0.0
    %v3234 = vmax.f32 %v3078, 0.0
    %v3235 = vmax.f32 %v1904, 0.0
    %v3236 = vmax.f32 %v2002, 0.0
    %v3237 = vmax.f32 %v2100, 0.0
    %v3238 = vmax.f32 %v2198, 0.0
    %v3239 = vmax.f32 %v2296, 0.0
    %v3240 = vmax.f32 %v2394, 0.0
    %v3241 = vmax.f32 %v2492, 0.0
    %v3242 = vmax.f32 %v2590, 0.0
    %v3243 = vmax.f32 %v2688, 0.0
    %v3244 = vmax.f32 %v2786, 0.0
    %v3245 = vmax.f32 %v2884, 0.0
    %v3246 = vmax.f32 %v2982, 0.0
    %v3247 = vmax.f32 %v3080, 0.0
    %v3248 = vmax.f32 %v1907, 0.0
    %v3249 = vmax.f32 %v2005, 0.0
    %v3250 = vmax.f32 %v2103, 0.0
    %v3251 = vmax.f32 %v2201, 0.0
    %v3252 = vmax.f32 %v2299, 0.0
    %v3253 = vmax.f32 %v2397, 0.0
    %v3254 = vmax.f32 %v2495, 0.0
    %v3255 = vmax.f32 %v2593, 0.0
    %v3256 = vmax.f32 %v2691, 0.0
    %v3257 = vmax.f32 %v2789, 0.0
    %v3258 = vmax.f32 %v2887, 0.0
    %v3259 = vmax.f32 %v2985, 0.0
    %v3260 = vmax.f32 %v3083, 0.0
    %v3261 = vmax.f32 %v1909, 0.0
    %v3262 = vmax.f32 %v2007, 0.0
    %v3263 = vmax.f32 %v2105, 0.0
    %v3264 = vmax.f32 %v2203, 0.0
    %v3265 = vmax.f32 %v2301, 0.0
    %v3266 = vmax.f32 %v2399, 0.0
    %v3267 = vmax.f32 %v2497, 0.0
    %v3268 = vmax.f32 %v2595, 0.0
    %v3269 = vmax.f32 %v2693, 0.0
    %v3270 = vmax.f32 %v2791, 0.0
    %v3271 = vmax.f32 %v2889, 0.0
    %v3272 = vmax.f32 %v2987, 0.0
    %v3273 = vmax.f32 %v3085, 0.0
    %v3274 = vmax.f32 %v1912, 0.0
    %v3275 = vmax.f32 %v2010, 0.0
    %v3276 = vmax.f32 %v2108, 0.0
    %v3277 = vmax.f32 %v2206, 0.0
    %v3278 = vmax.f32 %v2304, 0.0
    %v3279 = vmax.f32 %v2402, 0.0
    %v3280 = vmax.f32 %v2500, 0.0
    %v3281 = vmax.f32 %v2598, 0.0
    %v3282 = vmax.f32 %v2696, 0.0
    %v3283 = vmax.f32 %v2794, 0.0
    %v3284 = vmax.f32 %v2892, 0.0
    %v3285 = vmax.f32 %v2990, 0.0
    %v3286 = vmax.f32 %v3088, 0.0
    %v3287 = vmax.f32 %v1914, 0.0
    %v3288 = vmax.f32 %v2012, 0.0
    %v3289 = vmax.f32 %v2110, 0.0
    %v3290 = vmax.f32 %v2208, 0.0
    %v3291 = vmax.f32 %v2306, 0.0
    %v3292 = vmax.f32 %v2404, 0.0
    %v3293 = vmax.f32 %v2502, 0.0
    %v3294 = vmax.f32 %v2600, 0.0
    %v3295 = vmax.f32 %v2698, 0.0
    %v3296 = vmax.f32 %v2796, 0.0
    %v3297 = vmax.f32 %v2894, 0.0
    %v3298 = vmax.f32 %v2992, 0.0
    %v3299 = vmax.f32 %v3090, 0.0
    %v3300 = vadd.f32 %v3092, %v3093
    %v3301 = vadd.f32 %v3105, %v3106
    %v3302 = vadd.f32 %v3118, %v3119
    %v3303 = vadd.f32 %v3131, %v3132
    %v3304 = vadd.f32 %v3144, %v3145
    %v3305 = vadd.f32 %v3157, %v3158
    %v3306 = vadd.f32 %v3170, %v3171
    %v3307 = vadd.f32 %v3183, %v3184
    %v3308 = vadd.f32 %v3196, %v3197
    %v3309 = vadd.f32 %v3209, %v3210
    %v3310 = vadd.f32 %v3222, %v3223
    %v3311 = vadd.f32 %v3235, %v3236
    %v3312 = vadd.f32 %v3248, %v3249
    %v3313 = vadd.f32 %v3261, %v3262
    %v3314 = vadd.f32 %v3274, %v3275
    %v3315 = vadd.f32 %v3287, %v3288
    %v3316 = vadd.f32 %v3094, %v3095
    %v3317 = vadd.f32 %v3107, %v3108
    %v3318 = vadd.f32 %v3120, %v3121
    %v3319 = vadd.f32 %v3133, %v3134
    %v3320 = vadd.f32 %v3146, %v3147
    %v3321 = vadd.f32 %v3159, %v3160
    %v3322 = vadd.f32 %v3172, %v3173
    %v3323 = vadd.f32 %v3185, %v3186
    %v3324 = vadd.f32 %v3198, %v3199
    %v3325 = vadd.f32 %v3211, %v3212
    %v3326 = vadd.f32 %v3224, %v3225
    %v3327 = vadd.f32 %v3237, %v3238
    %v3328 = vadd.f32 %v3250, %v3251
    %v3329 = vadd.f32 %v3263, %v3264
    %v3330 = vadd.f32 %v3276, %v3277
    %v3331 = vadd.f32 %v3289, %v3290
    %v3332 = vadd.f32 %v3096, %v3097
    %v3333 = vadd.f32 %v3109, %v3110
    %v3334 = vadd.f32 %v3122, %v3123
    %v3335 = vadd.f32 %v3135, %v3136
    %v3336 = vadd.f32 %v3148, %v3149
    %v3337 = vadd.f32 %v3161, %v3162
    %v3338 = vadd.f32 %v3174, %v3175
    %v3339 = vadd.f32 %v3187, %v3188
    %v3340 = vadd.f32 %v3200, %v3201
    %v3341 = vadd.f32 %v3213, %v3214
    %v3342 = vadd.f32 %v3226, %v3227
    %v3343 = vadd.f32 %v3239, %v3240
    %v3344 = vadd.f32 %v3252, %v3253
    %v3345 = vadd.f32 %v3265, %v3266
    %v3346 = vadd.f32 %v3278, %v3279
    %v3347 = vadd.f32 %v3291, %v3292
    %v3348 = vadd.f32 %v3098, %v3099
    %v3349 = vadd.f32 %v3111, %v3112
    %v3350 = vadd.f32 %v3124, %v3125
    %v3351 = vadd.f32 %v3137, %v3138
    %v3352 = vadd.f32 %v3150, %v3151
    %v3353 = vadd.f32 %v3163, %v3164
    %v3354 = vadd.f32 %v3176, %v3177
    %v3355 = vadd.f32 %v3189, %v3190
    %v3356 = vadd.f32 %v3202, %v3203
    %v3357 = vadd.f32 %v3215, %v3216
    %v3358 = vadd.f32 %v3228, %v3229
    %v3359 = vadd.f32 %v3241, %v3242
    %v3360 = vadd.f32 %v3254, %v3255
    %v3361 = vadd.f32 %v3267, %v3268
    %v3362 = vadd.f32 %v3280, %v3281
    %v3363 = vadd.f32 %v3293, %v3294
    %v3364 = vadd.f32 %v3100, %v3101
    %v3365 = vadd.f32 %v3113, %v3114
    %v3366 = vadd.f32 %v3126, %v3127
    %v3367 = vadd.f32 %v3139, %v3140
    %v3368 = vadd.f32 %v3152, %v3153
    %v3369 = vadd.f32 %v3165, %v3166
    %v3370 = vadd.f32 %v3178, %v3179
    %v3371 = vadd.f32 %v3191, %v3192
    %v3372 = vadd.f32 %v3204, %v3205
    %v3373 = vadd.f32 %v3217, %v3218
    %v3374 = vadd.f32 %v3230, %v3231
    %v3375 = vadd.f32 %v3243, %v3244
    %v3376 = vadd.f32 %v3256, %v3257
    %v3377 = vadd.f32 %v3269, %v3270
    %v3378 = vadd.f32 %v3282, %v3283
    %v3379 = vadd.f32 %v3295, %v3296
    %v3380 = vadd.f32 %v3102, %v3103
    %v3381 = vadd.f32 %v3115, %v3116
    %v3382 = vadd.f32 %v3128, %v3129
    %v3383 = vadd.f32 %v3141, %v3142
    %v3384 = vadd.f32 %v3154, %v3155
    %v3385 = vadd.f32 %v3167, %v3168
    %v3386 = vadd.f32 %v3180, %v3181
    %v3387 = vadd.f32 %v3193, %v3194
    %v3388 = vadd.f32 %v3206, %v3207
    %v3389 = vadd.f32 %v3219, %v3220
    %v3390 = vadd.f32 %v3232, %v3233
    %v3391 = vadd.f32 %v3245, %v3246
    %v3392 = vadd.f32 %v3258, %v3259
    %v3393 = vadd.f32 %v3271, %v3272
    %v3394 = vadd.f32 %v3284, %v3285
    %v3395 = vadd.f32 %v3297, %v3298
    %v3396 = vadd.f32 %v3300, %v3316
    %v3397 = vadd.f32 %v3301, %v3317
    %v3398 = vadd.f32 %v3302, %v3318
    %v3399 = vadd.f32 %v3303, %v3319
    %v3400 = vadd.f32 %v3304, %v3320
    %v3401 = vadd.f32 %v3305, %v3321
    %v3402 = vadd.f32 %v3306, %v3322
    %v3403 = vadd.f32 %v3307, %v3323
    %v3404 = vadd.f32 %v3308, %v3324
    %v3405 = vadd.f32 %v3309, %v3325
    %v3406 = vadd.f32 %v3310, %v3326
    %v3407 = vadd.f32 %v3311, %v3327
    %v3408 = vadd.f32 %v3312, %v3328
    %v3409 = vadd.f32 %v3313, %v3329
    %v3410 = vadd.f32 %v3314, %v3330
    %v3411 = vadd.f32 %v3315, %v3331
    %v3412 = vadd.f32 %v3332, %v3348
    %v3413 = vadd.f32 %v3333, %v3349
    %v3414 = vadd.f32 %v3334, %v3350
    %v3415 = vadd.f32 %v3335, %v3351
    %v3416 = vadd.f32 %v3336, %v3352
    %v3417 = vadd.f32 %v3337, %v3353
    %v3418 = vadd.f32 %v3338, %v3354
    %v3419 = vadd.f32 %v3339, %v3355
    %v3420 = vadd.f32 %v3340, %v3356
    %v3421 = vadd.f32 %v3341, %v3357
    %v3422 = vadd.f32 %v3342, %v3358
    %v3423 = vadd.f32 %v3343, %v3359
    %v3424 = vadd.f32 %v3344, %v3360
    %v3425 = vadd.f32 %v3345, %v3361
    %v3426 = vadd.f32 %v3346, %v3362
    %v3427 = vadd.f32 %v3347, %v3363
    %v3428 = vadd.f32 %v3364, %v3380
    %v3429 = vadd.f32 %v3365, %v3381
    %v3430 = vadd.f32 %v3366, %v3382
    %v3431 = vadd.f32 %v3367, %v3383
    %v3432 = vadd.f32 %v3368, %v3384
    %v3433 = vadd.f32 %v3369, %v3385
    %v3434 = vadd.f32 %v3370, %v3386
    %v3435 = vadd.f32 %v3371, %v3387
    %v3436 = vadd.f32 %v3372, %v3388
    %v3437 = vadd.f32 %v3373, %v3389
    %v3438 = vadd.f32 %v3374, %v3390
    %v3439 = vadd.f32 %v3375, %v3391
    %v3440 = vadd.f32 %v3376, %v3392
    %v3441 = vadd.f32 %v3377, %v3393
    %v3442 = vadd.f32 %v3378, %v3394
    %v3443 = vadd.f32 %v3379, %v3395
    %v3444 = vadd.f32 %v3396, %v3412
    %v3445 = vadd.f32 %v3397, %v3413
    %v3446 = vadd.f32 %v3398, %v3414
    %v3447 = vadd.f32 %v3399, %v3415
    %v3448 = vadd.f32 %v3400, %v3416
    %v3449 = vadd.f32 %v3401, %v3417
    %v3450 = vadd.f32 %v3402, %v3418
    %v3451 = vadd.f32 %v3403, %v3419
    %v3452 = vadd.f32 %v3404, %v3420
    %v3453 = vadd.f32 %v3405, %v3421
    %v3454 = vadd.f32 %v3406, %v3422
    %v3455 = vadd.f32 %v3407, %v3423
    %v3456 = vadd.f32 %v3408, %v3424
    %v3457 = vadd.f32 %v3409, %v3425
    %v3458 = vadd.f32 %v3410, %v3426
    %v3459 = vadd.f32 %v3411, %v3427
    %v3460 = vadd.f32 %v3428, %v3104
    %v3461 = vadd.f32 %v3429, %v3117
    %v3462 = vadd.f32 %v3430, %v3130
    %v3463 = vadd.f32 %v3431, %v3143
    %v3464 = vadd.f32 %v3432, %v3156
    %v3465 = vadd.f32 %v3433, %v3169
    %v3466 = vadd.f32 %v3434, %v3182
    %v3467 = vadd.f32 %v3435, %v3195
    %v3468 = vadd.f32 %v3436, %v3208
    %v3469 = vadd.f32 %v3437, %v3221
    %v3470 = vadd.f32 %v3438, %v3234
    %v3471 = vadd.f32 %v3439, %v3247
    %v3472 = vadd.f32 %v3440, %v3260
    %v3473 = vadd.f32 %v3441, %v3273
    %v3474 = vadd.f32 %v3442, %v3286
    %v3475 = vadd.f32 %v3443, %v3299
    %v3476 = vadd.f32 %v3444, %v3460
    %v3477 = vadd.f32 %v3445, %v3461
    %v3478 = vadd.f32 %v3446, %v3462
    %v3479 = vadd.f32 %v3447, %v3463
    %v3480 = vadd.f32 %v3448, %v3464
    %v3481 = vadd.f32 %v3449, %v3465
    %v3482 = vadd.f32 %v3450, %v3466
    %v3483 = vadd.f32 %v3451, %v3467
    %v3484 = vadd.f32 %v3452, %v3468
    %v3485 = vadd.f32 %v3453, %v3469
    %v3486 = vadd.f32 %v3454, %v3470
    %v3487 = vadd.f32 %v3455, %v3471
    %v3488 = vadd.f32 %v3456, %v3472
    %v3489 = vadd.f32 %v3457, %v3473
    %v3490 = vadd.f32 %v3458, %v3474
    %v3491 = vadd.f32 %v3459, %v3475
    %v3492 = vld [vmem:[%s7] sm:$0xff]
    %v3493 = vld [vmem:[%s8] sm:$0xff]
    %3495 = vset.pattern.permute.xlu0 0
    %3496 = vperm.xlu0 %3495, %v3493
    %v3497 = vpop.permute.xlu0 %3496
    %3499 = vmatpush.msra.mxu0 %v3491
    %3500 = vmatpush.msra.mxu0 %v3490
    %3501 = vmatpush.msra.mxu0 %v3489
    %3502 = vmatpush.msra.mxu0 %v3488
    %3503 = vmatpush.msra.mxu0 %v3487
    %3504 = vmatpush.msra.mxu0 %v3486
    %3505 = vmatpush.msra.mxu0 %v3485
    %3506 = vmatpush.msra.mxu0 %v3484
    %3507 = vmatpush.msra.mxu0 %v3483
    %3508 = vmatpush.msra.mxu0 %v3482
    %3509 = vmatpush.msra.mxu0 %v3481
    %3510 = vmatpush.msra.mxu0 %v3480
    %3511 = vmatpush.msra.mxu0 %v3479
    %3512 = vmatpush.msra.mxu0 %v3478
    %3513 = vmatpush.msra.mxu0 %v3477
    %3514 = vmatpush.msra.mxu0 %v3476
    %3515 = vmatmul.f32.gmra.mxu0 %v3492
    %v3516 = vpop.f32.mrf.mxu0
    %v3517 = vadd.f32 %v3497, %v3516
    %3518 = vdwg.mxu0
    %3519 = vst [vmem:[#allocation2] sm:$0xff] %v3517
    // Predicated region
    $region38: #{tpu_custom_call.1} parent=1 // pred_check
      _
    $region39: #{tpu_custom_call.1} parent=1 // pred_check_branch
      %3521 = sbr.rel (0) target = $region41
    $region40: #{tpu_custom_call.1} parent=1 // pred_region
      %3523 = vsyncadd [#allocation3], 0
      %s3525 = sshll.u32 [#allocation2], 4
      %s3526 = int_to_ptr.vmem [resolvable:$true] %s3525
      %s3527 = sshll.u32 %s9, 4
      %s3528 = int_to_ptr.hbm [resolvable:$true] %s3527
      %3530 = dma.vmem_to_hbm [thread:$0]  %s3526, 128, %s3528, [#allocation3]
    $region41: #{tpu_custom_call.1} parent=1 // pred_fallthru
      _
    // Predicated region
    $region42: #{tpu_custom_call.1} parent=1 // pred_check
      _
    $region43: #{tpu_custom_call.1} parent=1 // pred_check_branch
      %3532 = sbr.rel (0) target = $region45
    $region44: #{tpu_custom_call.1} parent=1 // pred_region
      %3534 = dma.done [#allocation3], 128
    $region45: #{tpu_custom_call.1} parent=1 // pred_fallthru
      _
    %3535 = vsyncpa [#allocation3], 1

</llo_original>
